<compile_context>
chip_gen: v5e
topology: v5e:2x2
jax: 0.10.0
libtpu: 0.0.40
codegen_flags: <defaults>
</compile_context>

<pallas_src>
import functools
import math

import jax
import jax.numpy as jnp
from jax.experimental import pallas as pl
from jax.experimental.pallas import tpu as pltpu

EPS = 1e-5      # nn.BatchNorm2d default eps
LANE = 128      # TPU lane width


def _round_up(x, m):
    return ((x + m - 1) // m) * m


def _vmem_capacity_bytes():
    try:
        return int(pltpu.get_tpu_info().vmem_capacity_bytes)
    except Exception:
        return 128 << 20


def _pick_row_tile(H, W, vmem_cap):
    """Row tile: multiple of 8 dividing H; target matmul M = TH*W of ~512 rows on
    128 MiB-VMEM chips (v5e/v6e) and ~256 on v7x (64 MiB)."""
    target_rows = 512 if vmem_cap >= (96 << 20) else 256
    cap = max(8, target_rows // max(W, 1))
    for t in range(min(cap, H), 7, -1):
        if H % t == 0 and t % 8 == 0:
            return t
    return H


def _padded_bytes(shape, itemsize=4):
    """VMEM footprint of a >=2-D buffer with (8,128) sublane/lane padding."""
    lead = 1
    for d in shape[:-2]:
        lead *= d
    sub = _round_up(shape[-2], 8)
    lane = _round_up(shape[-1], LANE)
    return lead * sub * lane * itemsize


# --------------------------------------------------------------------------------------
# Kernel: (optional fused prev-layer BN+ReLU) -> 3x3 same-conv -> per-tile BN partial stats
# --------------------------------------------------------------------------------------
def _conv_bn_stats_kernel(x_ref, sc_ref, sh_ref, w_ref, y_ref, st_ref, xp_ref, *,
                          TH, H, W, Cs, Cpad, apply_input_act, mxu_dtype):
    """
    One (batch n, row-block r) grid step.
      x_ref : (1, H, W, Cs)     full input image (VMEM-resident across r)
      sc_ref: (1, Cs)           previous layer's BN scale (ones for the first layer)
      sh_ref: (1, Cs)           previous layer's BN shift (zeros for the first layer)
      w_ref : (9*Cs, Cpad)      HWIO weights, (dy, dx, ci)-flattened, zero-padded to Cpad
      y_ref : (1, TH*W, Cpad)   lane-dense raw conv output tile (pre-BN)
      st_ref: (1, 1, 2, Cpad)   per-(n, r) [sum, sum_of_squares] over rows*cols per channel
      xp_ref: (TH+2, W+2, Cs)   per-block zero-padded (input-activated) window scratch
    """
    r = pl.program_id(1)
    num_r = pl.num_programs(1)
    row0 = pl.multiple_of(r * TH, TH)

    def act(v):
        v = v.astype(jnp.float32)
        if apply_input_act:
            v = jnp.maximum(v * sc_ref[...] + sh_ref[...], 0.0)   # prev layer's BN + ReLU
        return v

    # ---- per-row-block padded window: halo-only zeroing, per-block activation ----------
    # No cross-step scratch state -> the row axis is safely "parallel" (v7x 2 TCs).
    zero_col = jnp.zeros((TH + 2, 1, Cs), jnp.float32)
    xp_ref[:, 0:1, :] = zero_col                                    # left halo column
    xp_ref[:, W + 1:W + 2, :] = zero_col                            # right halo column

    xp_ref[1:TH + 1, 1:W + 1, :] = act(x_ref[0, pl.ds(row0, TH), :, :])

    top = act(x_ref[0, pl.ds(jnp.maximum(row0 - 1, 0), 1), :, :])   # (1, W, Cs)
    xp_ref[0:1, 1:W + 1, :] = jnp.where(r > 0, top, 0.0)
    bot = act(x_ref[0, pl.ds(jnp.minimum(row0 + TH, H - 1), 1), :, :])
    xp_ref[TH + 1:TH + 2, 1:W + 1, :] = jnp.where(r < num_r - 1, bot, 0.0)

    # ---- 3x3 conv on the MXU; taps sliced straight from the scratch ref ----------------
    if 9 * Cs <= 256:
        # Small Cin: fatten the contraction via im2col (K = 9*Cs <= MXU depth).
        taps = [xp_ref[dy:dy + TH, dx:dx + W, :] for dy in range(3) for dx in range(3)]
        patch = jnp.concatenate(taps, axis=-1).reshape(TH * W, 9 * Cs)
        acc = jnp.dot(patch.astype(mxu_dtype), w_ref[...],
                      preferred_element_type=jnp.float32)           # (TH*W, Cpad) f32
    else:
        # Wide Cin: K already MXU-deep; one lane-dense matmul per tap, f32 accumulation.
        acc = jnp.zeros((TH * W, Cpad), jnp.float32)
        for dy in range(3):
            for dx in range(3):
                p = xp_ref[dy:dy + TH, dx:dx + W, :].reshape(TH * W, Cs)
                wk = w_ref[(dy * 3 + dx) * Cs:(dy * 3 + dx + 1) * Cs, :]
                acc = acc + jnp.dot(p.astype(mxu_dtype), wk,
                                    preferred_element_type=jnp.float32)

    # NOTE: conv bias is dropped — a per-channel constant cancels under batch-stat BN.

    # Per-(n, r) partial BatchNorm statistics; lane-dense (Cpad is a multiple of 128).
    s = jnp.sum(acc, axis=0, keepdims=True)
    ss = jnp.sum(acc * acc, axis=0, keepdims=True)
    st_ref[0, 0] = jnp.concatenate([s, ss], axis=0)

    # Lane-dense store: last dim is already Cpad >= 128, no reshape / no masked stores.
    y_ref[0] = acc.astype(y_ref.dtype)


# --------------------------------------------------------------------------------------
# Wrapper for one conv layer (+fused input activation) + BN batch statistics
# --------------------------------------------------------------------------------------
def _conv_bn_stats_pass(x_nhwc, w_flat, *, cout_pad, scale_in=None, shift_in=None,
                        out_dtype=jnp.float32):
    """Returns (y (N, H*W, Cpad) raw conv output, scale (Cpad,), shift (Cpad,)) where
    normalize(y) = y*scale + shift reproduces BN(gamma=1, beta=0, batch stats)."""
    N, H, W, Cs = x_nhwc.shape
    K = w_flat.shape[0]                       # = 9*Cs
    mxu_dtype = w_flat.dtype                  # bf16 weights are cast ONCE in the wrapper
    vmem_cap = _vmem_capacity_bytes()
    TH = _pick_row_tile(H, W, vmem_cap)
    nRB = H // TH

    apply_input_act = scale_in is not None
    if scale_in is None:
        scale_in = jnp.ones((1, Cs), jnp.float32)
        shift_in = jnp.zeros((1, Cs), jnp.float32)
    else:
        scale_in = scale_in.reshape(1, Cs).astype(jnp.float32)
        shift_in = shift_in.reshape(1, Cs).astype(jnp.float32)

    kernel = functools.partial(
        _conv_bn_stats_kernel, TH=TH, H=H, W=W, Cs=Cs, Cpad=cout_pad,
        apply_input_act=apply_input_act, mxu_dtype=mxu_dtype)

    # VMEM budget from (8,128)-padded shapes (review: raw element counts under-estimate).
    wbytes = w_flat.dtype.itemsize
    ybytes = jnp.dtype(out_dtype).itemsize
    est = (2 * _padded_bytes((1, H, W, Cs), x_nhwc.dtype.itemsize)   # resident+dbl-buf input
           + 2 * _padded_bytes((K, cout_pad), wbytes)                # weights (dbl-buffered)
           + _padded_bytes((TH + 2, W + 2, Cs))                      # per-block padded window
           + 2 * _padded_bytes((TH * W, cout_pad), ybytes)           # output tile
           + 2 * _padded_bytes((2, cout_pad))                        # stats tile
           + 2 * _padded_bytes((TH * W, max(9 * Cs, cout_pad)))      # patch/acc temporaries
           + (4 << 20))
    # <= 3/4 of physical VMEM: 48 MiB on v7x (64 MiB), 96 MiB on v5e/v6e (128 MiB).
    vmem_limit = int(min(max(2 * est, 32 << 20), (vmem_cap * 3) // 4))

    # NOTE: the weight block index is constant over the whole grid; pl.Buffered(1) on its
    # BlockSpec would single-buffer it (extra VMEM headroom at large C).  Left at the default
    # double-buffering for portability.
    y, stats = pl.pallas_call(
        kernel,
        grid=(N, nRB),
        out_shape=(jax.ShapeDtypeStruct((N, H * W, cout_pad), out_dtype),
                   jax.ShapeDtypeStruct((N, nRB, 2, cout_pad), jnp.float32)),
        in_specs=[
            pl.BlockSpec((1, H, W, Cs), lambda n, r: (n, 0, 0, 0)),  # image resident across r
            pl.BlockSpec((1, Cs), lambda n, r: (0, 0)),
            pl.BlockSpec((1, Cs), lambda n, r: (0, 0)),
            pl.BlockSpec((K, cout_pad), lambda n, r: (0, 0)),
        ],
        out_specs=(pl.BlockSpec((1, TH * W, cout_pad), lambda n, r: (n, r, 0)),
                   pl.BlockSpec((1, 1, 2, cout_pad), lambda n, r: (n, r, 0, 0))),
        scratch_shapes=[pltpu.VMEM((TH + 2, W + 2, Cs), jnp.float32)],
        compiler_params=pltpu.CompilerParams(
            dimension_semantics=("parallel", "parallel"),
            vmem_limit_bytes=vmem_limit),
    )(x_nhwc, scale_in, shift_in, w_flat)

    # Tiny per-channel reduction + BN parameters (gamma=1, beta=0, biased batch variance).
    # NOTE: E[x^2]-E[x]^2 is cancellation-prone in f32; fine at these magnitudes/tolerances.
    cnt = float(N * H * W)
    s = jnp.sum(stats[:, :, 0, :], axis=(0, 1))
    ss = jnp.sum(stats[:, :, 1, :], axis=(0, 1))
    mean = s / cnt
    var = jnp.maximum(ss / cnt - mean * mean, 0.0)
    scale = jax.lax.rsqrt(var + EPS)
    shift = -mean * scale
    return y, scale, shift


# --------------------------------------------------------------------------------------
# Parameters / block wrappers
# --------------------------------------------------------------------------------------
def init_conv_params(key, in_channels, out_channels):
    """He-uniform init matching init_layer(): n = Cin*3*3, scale = sqrt(2/n)*sqrt(3)."""
    n = in_channels * 3 * 3
    scale = math.sqrt(2.0 / n) * math.sqrt(3.0)
    w_oihw = jax.random.uniform(key, (out_channels, in_channels, 3, 3),
                                jnp.float32, minval=-scale, maxval=scale)
    b = jnp.zeros((out_channels,), jnp.float32)   # init_layer zero-fills the bias
    return w_oihw, b


def _prepare_weight(w_oihw, cin_store, cout_pad, dtype):
    """OIHW -> (9*cin_store, cout_pad) im2col layout (dy, dx, ci) x co, zero-padded."""
    cout, cin, kh, kw = w_oihw.shape
    w = jnp.transpose(w_oihw, (2, 3, 1, 0))                              # HWIO
    w = jnp.pad(w, ((0, 0), (0, 0), (0, cin_store - cin), (0, cout_pad - cout)))
    return w.reshape(kh * kw * cin_store, cout_pad).astype(dtype)


def vggish_conv_block_nhwc(x_nhwc, params, *, use_bf16=False):
    """Core block in NHWC with lane-padded channels.
    Returns (y2_raw (N, H*W, Cpad), scale2 (Cpad,), shift2 (Cpad,), Cout).
    For stacked blocks, feed (y2, scale2, shift2) straight into the next block's conv1
    (same fused input-activation path) — no standalone BN+ReLU pass, no layout round trips."""
    (w1, _b1), (w2, _b2) = params        # biases cancel under batch-stat BN -> unused
    N, H, W, Cin = x_nhwc.shape
    Cout = w1.shape[0]
    Cpad = _round_up(Cout, LANE)

    wdt = jnp.bfloat16 if use_bf16 else jnp.float32
    ydt = jnp.bfloat16 if use_bf16 else jnp.float32
    w1_flat = _prepare_weight(w1, Cin, Cpad, wdt)
    w2_flat = _prepare_weight(w2, Cpad, Cpad, wdt)

    # Layer 1: conv1 + BN1 batch statistics.
    y1, sc1, sh1 = _conv_bn_stats_pass(x_nhwc, w1_flat, cout_pad=Cpad, out_dtype=ydt)

    # Layer 2: BN1+ReLU fused into conv2's input path (per row-block), conv2 + BN2 stats.
    y1_img = y1.reshape(N, H, W, Cpad)                      # metadata-only reshape
    y2, sc2, sh2 = _conv_bn_stats_pass(y1_img, w2_flat, cout_pad=Cpad,
                                       scale_in=sc1, shift_in=sh1, out_dtype=ydt)
    return y2, sc2, sh2, Cout


def vggish_conv_block(x_nchw, params, *, use_bf16=False):
    """NCHW-in / NCHW-out forward pass of VggishConvBlock (PyTorch convention)."""
    N, _, H, W = x_nchw.shape
    x = jnp.transpose(x_nchw, (0, 2, 3, 1))                 # one NCHW->NHWC at block entry
    y2, sc2, sh2, Cout = vggish_conv_block_nhwc(x, params, use_bf16=use_bf16)
    # Final BN2+ReLU is folded into the unavoidable channel-unpad + NHWC->NCHW layout change
    # (XLA fuses the affine+ReLU into the transpose copy) — no standalone normalize pass.
    y2 = y2.reshape(N, H, W, -1)[..., :Cout].astype(jnp.float32)
    out = jnp.maximum(y2 * sc2[:Cout] + sh2[:Cout], 0.0)
    return jnp.transpose(out, (0, 3, 1, 2))                 # NHWC -> NCHW at block exit


# ---------- pure-JAX reference (correctness check only) ----------
def _ref_block(x_nchw, w1_oihw, b1, w2_oihw, b2):
    def conv(x, w, b):
        y = jax.lax.conv_general_dilated(
            x, w, window_strides=(1, 1), padding=((1, 1), (1, 1)),
            dimension_numbers=('NCHW', 'OIHW', 'NCHW'))
        return y + b[None, :, None, None]

    def bn_relu(y):
        mean = jnp.mean(y, axis=(0, 2, 3), keepdims=True)
        var = jnp.mean((y - mean) ** 2, axis=(0, 2, 3), keepdims=True)
        return jnp.maximum((y - mean) / jnp.sqrt(var + EPS), 0.0)

    x = bn_relu(conv(x_nchw, w1_oihw, b1))
    x = bn_relu(conv(x, w2_oihw, b2))
    return x


if __name__ == "__main__":
    key = jax.random.PRNGKey(0)
    k_x, k_w1, k_w2 = jax.random.split(key, 3)

    N, C_in, C_out, H, W = 2, 4, 8, 16, 16
    x = jax.random.normal(k_x, (N, C_in, H, W), jnp.float32)

    w1, b1 = init_conv_params(k_w1, C_in, C_out)
    w2, b2 = init_conv_params(k_w2, C_out, C_out)
    params = ((w1, b1), (w2, b2))

    fwd = jax.jit(vggish_conv_block)
    out = jax.block_until_ready(fwd(x, params))
    ref = jax.block_until_ready(_ref_block(x, w1, b1, w2, b2))

    assert out.shape == (N, C_out, H, W), out.shape
    max_err = float(jnp.abs(out - ref).max())
    assert jnp.allclose(out, ref, rtol=1e-3, atol=1e-3), max_err
    print("KERNEL_OK")
</pallas_src>

<mosaic_0001>
module attributes {stable_mosaic.version = 11 : i64} {
  func.func @_conv_bn_stats_kernel(%arg0: i32, %arg1: i32, %arg2: memref<1x16x16x4xf32, #tpu.memory_space<vmem>>, %arg3: memref<1x4xf32, #tpu.memory_space<vmem>>, %arg4: memref<1x4xf32, #tpu.memory_space<vmem>>, %arg5: memref<36x128xf32, #tpu.memory_space<vmem>>, %arg6: memref<1x256x128xf32, #tpu.memory_space<vmem>>, %arg7: memref<1x1x2x128xf32, #tpu.memory_space<vmem>>, %arg8: memref<18x18x4xf32, #tpu.memory_space<vmem>>) attributes {dimension_semantics = [#tpu.dimension_semantics<parallel>, #tpu.dimension_semantics<parallel>], iteration_bounds = array<i64: 2, 1>, scalar_prefetch = 0 : i64, scratch_operands = 1 : i64, tpu.core_type = #tpu.core_type<tc>, window_params = [{transform_indices = @transform_0, window_bounds = array<i64: 1, 16, 16, 4>}, {pipeline_mode = #tpu.pipeline_mode<synchronous>, transform_indices = @transform_1, window_bounds = array<i64: 1, 4>}, {pipeline_mode = #tpu.pipeline_mode<synchronous>, transform_indices = @transform_2, window_bounds = array<i64: 1, 4>}, {pipeline_mode = #tpu.pipeline_mode<synchronous>, transform_indices = @transform_3, window_bounds = array<i64: 36, 128>}, {transform_indices = @transform_4, window_bounds = array<i64: 1, 256, 128>}, {transform_indices = @transform_5, window_bounds = array<i64: 1, 1, 2, 128>}]} {
    %c16_i32 = arith.constant 16 : i32
    %0 = arith.muli %arg1, %c16_i32 : i32
    %1 = tpu.assume_multiple %0, 16 : i32
    %cst = arith.constant 0.000000e+00 : f32
    %2 = vector.broadcast %cst : f32 to vector<18x1x4xf32>
    %c0 = arith.constant 0 : index
    %c0_0 = arith.constant 0 : index
    %c0_1 = arith.constant 0 : index
    %3 = vector.load %arg8[%c0, %c0_0, %c0_1] : memref<18x18x4xf32, #tpu.memory_space<vmem>>, vector<18x1x4xf32>
    tpu.vector_store %arg8[%c0, %c0_0, %c0_1], %2 {strides = array<i32>} : memref<18x18x4xf32, #tpu.memory_space<vmem>>, vector<18x1x4xf32>,
    %c0_2 = arith.constant 0 : index
    %c17 = arith.constant 17 : index
    %c0_3 = arith.constant 0 : index
    %4 = vector.load %arg8[%c0_2, %c17, %c0_3] : memref<18x18x4xf32, #tpu.memory_space<vmem>>, vector<18x1x4xf32>
    tpu.vector_store %arg8[%c0_2, %c17, %c0_3], %2 {strides = array<i32>} : memref<18x18x4xf32, #tpu.memory_space<vmem>>, vector<18x1x4xf32>,
    %c0_4 = arith.constant 0 : index
    %5 = arith.index_cast %1 : i32 to index
    %c0_5 = arith.constant 0 : index
    %c0_6 = arith.constant 0 : index
    %6 = vector.load %arg2[%c0_4, %5, %c0_5, %c0_6] : memref<1x16x16x4xf32, #tpu.memory_space<vmem>>, vector<1x16x16x4xf32>
    %7 = vector.shape_cast %6 : vector<1x16x16x4xf32> to vector<16x16x4xf32>
    %c1 = arith.constant 1 : index
    %c1_7 = arith.constant 1 : index
    %c0_8 = arith.constant 0 : index
    %8 = vector.load %arg8[%c1, %c1_7, %c0_8] : memref<18x18x4xf32, #tpu.memory_space<vmem>>, vector<16x16x4xf32>
    tpu.vector_store %arg8[%c1, %c1_7, %c0_8], %7 {strides = array<i32>} : memref<18x18x4xf32, #tpu.memory_space<vmem>>, vector<16x16x4xf32>,
    %c1_i32 = arith.constant 1 : i32
    %9 = arith.subi %1, %c1_i32 : i32
    %c0_i32 = arith.constant 0 : i32
    %10 = arith.maxsi %9, %c0_i32 : i32
    %c0_9 = arith.constant 0 : index
    %11 = arith.index_cast %10 : i32 to index
    %c0_10 = arith.constant 0 : index
    %c0_11 = arith.constant 0 : index
    %12 = vector.load %arg2[%c0_9, %11, %c0_10, %c0_11] : memref<1x16x16x4xf32, #tpu.memory_space<vmem>>, vector<1x1x16x4xf32>
    %13 = vector.shape_cast %12 : vector<1x1x16x4xf32> to vector<1x16x4xf32>
    %c0_i32_12 = arith.constant 0 : i32
    %14 = arith.cmpi sgt, %arg1, %c0_i32_12 : i32
    %cst_13 = arith.constant 0.000000e+00 : f32
    %15 = vector.broadcast %cst_13 : f32 to vector<1x16x4xf32>
    %16 = arith.select %14, %13, %15 : vector<1x16x4xf32>
    %c0_14 = arith.constant 0 : index
    %c1_15 = arith.constant 1 : index
    %c0_16 = arith.constant 0 : index
    %17 = vector.load %arg8[%c0_14, %c1_15, %c0_16] : memref<18x18x4xf32, #tpu.memory_space<vmem>>, vector<1x16x4xf32>
    tpu.vector_store %arg8[%c0_14, %c1_15, %c0_16], %16 {strides = array<i32>} : memref<18x18x4xf32, #tpu.memory_space<vmem>>, vector<1x16x4xf32>,
    %c16_i32_17 = arith.constant 16 : i32
    %18 = arith.addi %1, %c16_i32_17 : i32
    %c15_i32 = arith.constant 15 : i32
    %19 = arith.minsi %18, %c15_i32 : i32
    %c0_18 = arith.constant 0 : index
    %20 = arith.index_cast %19 : i32 to index
    %c0_19 = arith.constant 0 : index
    %c0_20 = arith.constant 0 : index
    %21 = vector.load %arg2[%c0_18, %20, %c0_19, %c0_20] : memref<1x16x16x4xf32, #tpu.memory_space<vmem>>, vector<1x1x16x4xf32>
    %22 = vector.shape_cast %21 : vector<1x1x16x4xf32> to vector<1x16x4xf32>
    %c0_i32_21 = arith.constant 0 : i32
    %23 = arith.cmpi slt, %arg1, %c0_i32_21 : i32
    %cst_22 = arith.constant 0.000000e+00 : f32
    %24 = vector.broadcast %cst_22 : f32 to vector<1x16x4xf32>
    %25 = arith.select %23, %22, %24 : vector<1x16x4xf32>
    %c17_23 = arith.constant 17 : index
    %c1_24 = arith.constant 1 : index
    %c0_25 = arith.constant 0 : index
    %26 = vector.load %arg8[%c17_23, %c1_24, %c0_25] : memref<18x18x4xf32, #tpu.memory_space<vmem>>, vector<1x16x4xf32>
    tpu.vector_store %arg8[%c17_23, %c1_24, %c0_25], %25 {strides = array<i32>} : memref<18x18x4xf32, #tpu.memory_space<vmem>>, vector<1x16x4xf32>,
    %c0_26 = arith.constant 0 : index
    %c0_27 = arith.constant 0 : index
    %c0_28 = arith.constant 0 : index
    %27 = vector.load %arg8[%c0_26, %c0_27, %c0_28] : memref<18x18x4xf32, #tpu.memory_space<vmem>>, vector<16x16x4xf32>
    %c0_29 = arith.constant 0 : index
    %c1_30 = arith.constant 1 : index
    %c0_31 = arith.constant 0 : index
    %28 = vector.load %arg8[%c0_29, %c1_30, %c0_31] : memref<18x18x4xf32, #tpu.memory_space<vmem>>, vector<16x16x4xf32>
    %c0_32 = arith.constant 0 : index
    %c2 = arith.constant 2 : index
    %c0_33 = arith.constant 0 : index
    %29 = vector.load %arg8[%c0_32, %c2, %c0_33] : memref<18x18x4xf32, #tpu.memory_space<vmem>>, vector<16x16x4xf32>
    %c1_34 = arith.constant 1 : index
    %c0_35 = arith.constant 0 : index
    %c0_36 = arith.constant 0 : index
    %30 = vector.load %arg8[%c1_34, %c0_35, %c0_36] : memref<18x18x4xf32, #tpu.memory_space<vmem>>, vector<16x16x4xf32>
    %c1_37 = arith.constant 1 : index
    %c1_38 = arith.constant 1 : index
    %c0_39 = arith.constant 0 : index
    %31 = vector.load %arg8[%c1_37, %c1_38, %c0_39] : memref<18x18x4xf32, #tpu.memory_space<vmem>>, vector<16x16x4xf32>
    %c1_40 = arith.constant 1 : index
    %c2_41 = arith.constant 2 : index
    %c0_42 = arith.constant 0 : index
    %32 = vector.load %arg8[%c1_40, %c2_41, %c0_42] : memref<18x18x4xf32, #tpu.memory_space<vmem>>, vector<16x16x4xf32>
    %c2_43 = arith.constant 2 : index
    %c0_44 = arith.constant 0 : index
    %c0_45 = arith.constant 0 : index
    %33 = vector.load %arg8[%c2_43, %c0_44, %c0_45] : memref<18x18x4xf32, #tpu.memory_space<vmem>>, vector<16x16x4xf32>
    %c2_46 = arith.constant 2 : index
    %c1_47 = arith.constant 1 : index
    %c0_48 = arith.constant 0 : index
    %34 = vector.load %arg8[%c2_46, %c1_47, %c0_48] : memref<18x18x4xf32, #tpu.memory_space<vmem>>, vector<16x16x4xf32>
    %c2_49 = arith.constant 2 : index
    %c2_50 = arith.constant 2 : index
    %c0_51 = arith.constant 0 : index
    %35 = vector.load %arg8[%c2_49, %c2_50, %c0_51] : memref<18x18x4xf32, #tpu.memory_space<vmem>>, vector<16x16x4xf32>
    %36 = tpu.concatenate %27, %28, %29, %30, %31, %32, %33, %34, %35 in 2 : vector<16x16x4xf32>, vector<16x16x4xf32>, vector<16x16x4xf32>, vector<16x16x4xf32>, vector<16x16x4xf32>, vector<16x16x4xf32>, vector<16x16x4xf32>, vector<16x16x4xf32>, vector<16x16x4xf32> -> vector<16x16x36xf32>
    %37 = vector.shape_cast %36 : vector<16x16x36xf32> to vector<256x36xf32>
    %c0_52 = arith.constant 0 : index
    %c0_53 = arith.constant 0 : index
    %38 = vector.load %arg5[%c0_52, %c0_53] : memref<36x128xf32, #tpu.memory_space<vmem>>, vector<36x128xf32>
    %cst_54 = arith.constant dense<0.000000e+00> : vector<256x128xf32>
    %39 = tpu.matmul %37, %38, %cst_54 {dimension_numbers = #tpu.dot_dimension_numbers<[1], [0], [0], [1], [0, 0, 1, 1], [], []>} : vector<256x36xf32>, vector<36x128xf32>, vector<256x128xf32> -> vector<256x128xf32>
    %cst_55 = arith.constant dense<0.000000e+00> : vector<128xf32>
    %40 = vector.multi_reduction <add>, %39, %cst_55 [0] : vector<256x128xf32> to vector<128xf32>
    %41 = vector.shape_cast %40 : vector<128xf32> to vector<1x128xf32>
    %42 = arith.mulf %39, %39 : vector<256x128xf32>
    %cst_56 = arith.constant dense<0.000000e+00> : vector<128xf32>
    %43 = vector.multi_reduction <add>, %42, %cst_56 [0] : vector<256x128xf32> to vector<128xf32>
    %44 = vector.shape_cast %43 : vector<128xf32> to vector<1x128xf32>
    %45 = tpu.concatenate %41, %44 in 0 : vector<1x128xf32>, vector<1x128xf32> -> vector<2x128xf32>
    %c0_57 = arith.constant 0 : index
    %c0_58 = arith.constant 0 : index
    %c0_59 = arith.constant 0 : index
    %c0_60 = arith.constant 0 : index
    %46 = vector.load %arg7[%c0_57, %c0_58, %c0_59, %c0_60] : memref<1x1x2x128xf32, #tpu.memory_space<vmem>>, vector<1x1x2x128xf32>
    %47 = vector.shape_cast %46 : vector<1x1x2x128xf32> to vector<2x128xf32>
    %48 = vector.shape_cast %45 : vector<2x128xf32> to vector<1x1x2x128xf32>
    tpu.vector_store %arg7[%c0_57, %c0_58, %c0_59, %c0_60], %48 {strides = array<i32>} : memref<1x1x2x128xf32, #tpu.memory_space<vmem>>, vector<1x1x2x128xf32>,
    %c0_61 = arith.constant 0 : index
    %c0_62 = arith.constant 0 : index
    %c0_63 = arith.constant 0 : index
    %49 = vector.load %arg6[%c0_61, %c0_62, %c0_63] : memref<1x256x128xf32, #tpu.memory_space<vmem>>, vector<1x256x128xf32>
    %50 = vector.shape_cast %49 : vector<1x256x128xf32> to vector<256x128xf32>
    %51 = vector.shape_cast %39 : vector<256x128xf32> to vector<1x256x128xf32>
    tpu.vector_store %arg6[%c0_61, %c0_62, %c0_63], %51 {strides = array<i32>} : memref<1x256x128xf32, #tpu.memory_space<vmem>>, vector<1x256x128xf32>,
    return
  }
  func.func @transform_0(%arg0: i32, %arg1: i32) -> (i32, i32, i32, i32) {
    %c0_i32 = arith.constant 0 : i32
    %c0_i32_0 = arith.constant 0 : i32
    %c0_i32_1 = arith.constant 0 : i32
    %c0_i32_2 = arith.constant 0 : i32
    return %arg0, %c0_i32, %c0_i32_0, %c0_i32_1 : i32, i32, i32, i32
  }
  func.func @transform_1(%arg0: i32, %arg1: i32) -> (i32, i32) {
    %c0_i32 = arith.constant 0 : i32
    %c0_i32_0 = arith.constant 0 : i32
    %c0_i32_1 = arith.constant 0 : i32
    return %c0_i32, %c0_i32_0 : i32, i32
  }
  func.func @transform_2(%arg0: i32, %arg1: i32) -> (i32, i32) {
    %c0_i32 = arith.constant 0 : i32
    %c0_i32_0 = arith.constant 0 : i32
    %c0_i32_1 = arith.constant 0 : i32
    return %c0_i32, %c0_i32_0 : i32, i32
  }
  func.func @transform_3(%arg0: i32, %arg1: i32) -> (i32, i32) {
    %c0_i32 = arith.constant 0 : i32
    %c0_i32_0 = arith.constant 0 : i32
    %c0_i32_1 = arith.constant 0 : i32
    return %c0_i32, %c0_i32_0 : i32, i32
  }
  func.func @transform_4(%arg0: i32, %arg1: i32) -> (i32, i32, i32) {
    %c0_i32 = arith.constant 0 : i32
    %c0_i32_0 = arith.constant 0 : i32
    return %arg0, %arg1, %c0_i32 : i32, i32, i32
  }
  func.func @transform_5(%arg0: i32, %arg1: i32) -> (i32, i32, i32, i32) {
    %c0_i32 = arith.constant 0 : i32
    %c0_i32_0 = arith.constant 0 : i32
    %c0_i32_1 = arith.constant 0 : i32
    return %arg0, %arg1, %c0_i32, %c0_i32_0 : i32, i32, i32, i32
  }
}

module attributes {stable_mosaic.version = 11 : i64} {
  func.func @_conv_bn_stats_kernel(%arg0: i32, %arg1: i32, %arg2: memref<1x16x16x128xf32, #tpu.memory_space<vmem>>, %arg3: memref<1x128xf32, #tpu.memory_space<vmem>>, %arg4: memref<1x128xf32, #tpu.memory_space<vmem>>, %arg5: memref<1152x128xf32, #tpu.memory_space<vmem>>, %arg6: memref<1x256x128xf32, #tpu.memory_space<vmem>>, %arg7: memref<1x1x2x128xf32, #tpu.memory_space<vmem>>, %arg8: memref<18x18x128xf32, #tpu.memory_space<vmem>>) attributes {dimension_semantics = [#tpu.dimension_semantics<parallel>, #tpu.dimension_semantics<parallel>], iteration_bounds = array<i64: 2, 1>, scalar_prefetch = 0 : i64, scratch_operands = 1 : i64, tpu.core_type = #tpu.core_type<tc>, window_params = [{transform_indices = @transform_0, window_bounds = array<i64: 1, 16, 16, 128>}, {pipeline_mode = #tpu.pipeline_mode<synchronous>, transform_indices = @transform_1, window_bounds = array<i64: 1, 128>}, {pipeline_mode = #tpu.pipeline_mode<synchronous>, transform_indices = @transform_2, window_bounds = array<i64: 1, 128>}, {pipeline_mode = #tpu.pipeline_mode<synchronous>, transform_indices = @transform_3, window_bounds = array<i64: 1152, 128>}, {transform_indices = @transform_4, window_bounds = array<i64: 1, 256, 128>}, {transform_indices = @transform_5, window_bounds = array<i64: 1, 1, 2, 128>}]} {
    %c16_i32 = arith.constant 16 : i32
    %0 = arith.muli %arg1, %c16_i32 : i32
    %1 = tpu.assume_multiple %0, 16 : i32
    %cst = arith.constant 0.000000e+00 : f32
    %2 = vector.broadcast %cst : f32 to vector<18x1x128xf32>
    %c0 = arith.constant 0 : index
    %c0_0 = arith.constant 0 : index
    %c0_1 = arith.constant 0 : index
    %3 = vector.load %arg8[%c0, %c0_0, %c0_1] : memref<18x18x128xf32, #tpu.memory_space<vmem>>, vector<18x1x128xf32>
    tpu.vector_store %arg8[%c0, %c0_0, %c0_1], %2 {strides = array<i32>} : memref<18x18x128xf32, #tpu.memory_space<vmem>>, vector<18x1x128xf32>,
    %c0_2 = arith.constant 0 : index
    %c17 = arith.constant 17 : index
    %c0_3 = arith.constant 0 : index
    %4 = vector.load %arg8[%c0_2, %c17, %c0_3] : memref<18x18x128xf32, #tpu.memory_space<vmem>>, vector<18x1x128xf32>
    tpu.vector_store %arg8[%c0_2, %c17, %c0_3], %2 {strides = array<i32>} : memref<18x18x128xf32, #tpu.memory_space<vmem>>, vector<18x1x128xf32>,
    %c0_4 = arith.constant 0 : index
    %5 = arith.index_cast %1 : i32 to index
    %c0_5 = arith.constant 0 : index
    %c0_6 = arith.constant 0 : index
    %6 = vector.load %arg2[%c0_4, %5, %c0_5, %c0_6] : memref<1x16x16x128xf32, #tpu.memory_space<vmem>>, vector<1x16x16x128xf32>
    %7 = vector.shape_cast %6 : vector<1x16x16x128xf32> to vector<16x16x128xf32>
    %c0_7 = arith.constant 0 : index
    %c0_8 = arith.constant 0 : index
    %8 = vector.load %arg3[%c0_7, %c0_8] : memref<1x128xf32, #tpu.memory_space<vmem>>, vector<1x128xf32>
    %9 = vector.shape_cast %8 : vector<1x128xf32> to vector<1x1x128xf32>
    %10 = vector.broadcast %9 : vector<1x1x128xf32> to vector<16x16x128xf32>
    %11 = arith.mulf %7, %10 : vector<16x16x128xf32>
    %c0_9 = arith.constant 0 : index
    %c0_10 = arith.constant 0 : index
    %12 = vector.load %arg4[%c0_9, %c0_10] : memref<1x128xf32, #tpu.memory_space<vmem>>, vector<1x128xf32>
    %13 = vector.shape_cast %12 : vector<1x128xf32> to vector<1x1x128xf32>
    %14 = vector.broadcast %13 : vector<1x1x128xf32> to vector<16x16x128xf32>
    %15 = arith.addf %11, %14 : vector<16x16x128xf32>
    %cst_11 = arith.constant 0.000000e+00 : f32
    %16 = vector.broadcast %cst_11 : f32 to vector<16x16x128xf32>
    %17 = arith.maximumf %15, %16 : vector<16x16x128xf32>
    %c1 = arith.constant 1 : index
    %c1_12 = arith.constant 1 : index
    %c0_13 = arith.constant 0 : index
    %18 = vector.load %arg8[%c1, %c1_12, %c0_13] : memref<18x18x128xf32, #tpu.memory_space<vmem>>, vector<16x16x128xf32>
    tpu.vector_store %arg8[%c1, %c1_12, %c0_13], %17 {strides = array<i32>} : memref<18x18x128xf32, #tpu.memory_space<vmem>>, vector<16x16x128xf32>,
    %c1_i32 = arith.constant 1 : i32
    %19 = arith.subi %1, %c1_i32 : i32
    %c0_i32 = arith.constant 0 : i32
    %20 = arith.maxsi %19, %c0_i32 : i32
    %c0_14 = arith.constant 0 : index
    %21 = arith.index_cast %20 : i32 to index
    %c0_15 = arith.constant 0 : index
    %c0_16 = arith.constant 0 : index
    %22 = vector.load %arg2[%c0_14, %21, %c0_15, %c0_16] : memref<1x16x16x128xf32, #tpu.memory_space<vmem>>, vector<1x1x16x128xf32>
    %23 = vector.shape_cast %22 : vector<1x1x16x128xf32> to vector<1x16x128xf32>
    %c0_17 = arith.constant 0 : index
    %c0_18 = arith.constant 0 : index
    %24 = vector.load %arg3[%c0_17, %c0_18] : memref<1x128xf32, #tpu.memory_space<vmem>>, vector<1x128xf32>
    %25 = vector.shape_cast %24 : vector<1x128xf32> to vector<1x1x128xf32>
    %26 = vector.broadcast %25 : vector<1x1x128xf32> to vector<1x16x128xf32>
    %27 = arith.mulf %23, %26 : vector<1x16x128xf32>
    %c0_19 = arith.constant 0 : index
    %c0_20 = arith.constant 0 : index
    %28 = vector.load %arg4[%c0_19, %c0_20] : memref<1x128xf32, #tpu.memory_space<vmem>>, vector<1x128xf32>
    %29 = vector.shape_cast %28 : vector<1x128xf32> to vector<1x1x128xf32>
    %30 = vector.broadcast %29 : vector<1x1x128xf32> to vector<1x16x128xf32>
    %31 = arith.addf %27, %30 : vector<1x16x128xf32>
    %cst_21 = arith.constant 0.000000e+00 : f32
    %32 = vector.broadcast %cst_21 : f32 to vector<1x16x128xf32>
    %33 = arith.maximumf %31, %32 : vector<1x16x128xf32>
    %c0_i32_22 = arith.constant 0 : i32
    %34 = arith.cmpi sgt, %arg1, %c0_i32_22 : i32
    %cst_23 = arith.constant 0.000000e+00 : f32
    %35 = vector.broadcast %cst_23 : f32 to vector<1x16x128xf32>
    %36 = arith.select %34, %33, %35 : vector<1x16x128xf32>
    %c0_24 = arith.constant 0 : index
    %c1_25 = arith.constant 1 : index
    %c0_26 = arith.constant 0 : index
    %37 = vector.load %arg8[%c0_24, %c1_25, %c0_26] : memref<18x18x128xf32, #tpu.memory_space<vmem>>, vector<1x16x128xf32>
    tpu.vector_store %arg8[%c0_24, %c1_25, %c0_26], %36 {strides = array<i32>} : memref<18x18x128xf32, #tpu.memory_space<vmem>>, vector<1x16x128xf32>,
    %c16_i32_27 = arith.constant 16 : i32
    %38 = arith.addi %1, %c16_i32_27 : i32
    %c15_i32 = arith.constant 15 : i32
    %39 = arith.minsi %38, %c15_i32 : i32
    %c0_28 = arith.constant 0 : index
    %40 = arith.index_cast %39 : i32 to index
    %c0_29 = arith.constant 0 : index
    %c0_30 = arith.constant 0 : index
    %41 = vector.load %arg2[%c0_28, %40, %c0_29, %c0_30] : memref<1x16x16x128xf32, #tpu.memory_space<vmem>>, vector<1x1x16x128xf32>
    %42 = vector.shape_cast %41 : vector<1x1x16x128xf32> to vector<1x16x128xf32>
    %c0_31 = arith.constant 0 : index
    %c0_32 = arith.constant 0 : index
    %43 = vector.load %arg3[%c0_31, %c0_32] : memref<1x128xf32, #tpu.memory_space<vmem>>, vector<1x128xf32>
    %44 = vector.shape_cast %43 : vector<1x128xf32> to vector<1x1x128xf32>
    %45 = vector.broadcast %44 : vector<1x1x128xf32> to vector<1x16x128xf32>
    %46 = arith.mulf %42, %45 : vector<1x16x128xf32>
    %c0_33 = arith.constant 0 : index
    %c0_34 = arith.constant 0 : index
    %47 = vector.load %arg4[%c0_33, %c0_34] : memref<1x128xf32, #tpu.memory_space<vmem>>, vector<1x128xf32>
    %48 = vector.shape_cast %47 : vector<1x128xf32> to vector<1x1x128xf32>
    %49 = vector.broadcast %48 : vector<1x1x128xf32> to vector<1x16x128xf32>
    %50 = arith.addf %46, %49 : vector<1x16x128xf32>
    %cst_35 = arith.constant 0.000000e+00 : f32
    %51 = vector.broadcast %cst_35 : f32 to vector<1x16x128xf32>
    %52 = arith.maximumf %50, %51 : vector<1x16x128xf32>
    %c0_i32_36 = arith.constant 0 : i32
    %53 = arith.cmpi slt, %arg1, %c0_i32_36 : i32
    %cst_37 = arith.constant 0.000000e+00 : f32
    %54 = vector.broadcast %cst_37 : f32 to vector<1x16x128xf32>
    %55 = arith.select %53, %52, %54 : vector<1x16x128xf32>
    %c17_38 = arith.constant 17 : index
    %c1_39 = arith.constant 1 : index
    %c0_40 = arith.constant 0 : index
    %56 = vector.load %arg8[%c17_38, %c1_39, %c0_40] : memref<18x18x128xf32, #tpu.memory_space<vmem>>, vector<1x16x128xf32>
    tpu.vector_store %arg8[%c17_38, %c1_39, %c0_40], %55 {strides = array<i32>} : memref<18x18x128xf32, #tpu.memory_space<vmem>>, vector<1x16x128xf32>,
    %cst_41 = arith.constant 0.000000e+00 : f32
    %57 = vector.broadcast %cst_41 : f32 to vector<256x128xf32>
    %c0_42 = arith.constant 0 : index
    %c0_43 = arith.constant 0 : index
    %c0_44 = arith.constant 0 : index
    %58 = vector.load %arg8[%c0_42, %c0_43, %c0_44] : memref<18x18x128xf32, #tpu.memory_space<vmem>>, vector<16x16x128xf32>
    %59 = vector.shape_cast %58 : vector<16x16x128xf32> to vector<256x128xf32>
    %c0_45 = arith.constant 0 : index
    %c0_46 = arith.constant 0 : index
    %60 = vector.load %arg5[%c0_45, %c0_46] : memref<1152x128xf32, #tpu.memory_space<vmem>>, vector<128x128xf32>
    %cst_47 = arith.constant dense<0.000000e+00> : vector<256x128xf32>
    %61 = tpu.matmul %59, %60, %cst_47 {dimension_numbers = #tpu.dot_dimension_numbers<[1], [0], [0], [1], [0, 0, 1, 1], [], []>} : vector<256x128xf32>, vector<128x128xf32>, vector<256x128xf32> -> vector<256x128xf32>
    %62 = arith.addf %57, %61 : vector<256x128xf32>
    %c0_48 = arith.constant 0 : index
    %c1_49 = arith.constant 1 : index
    %c0_50 = arith.constant 0 : index
    %63 = vector.load %arg8[%c0_48, %c1_49, %c0_50] : memref<18x18x128xf32, #tpu.memory_space<vmem>>, vector<16x16x128xf32>
    %64 = vector.shape_cast %63 : vector<16x16x128xf32> to vector<256x128xf32>
    %c128 = arith.constant 128 : index
    %c0_51 = arith.constant 0 : index
    %65 = vector.load %arg5[%c128, %c0_51] : memref<1152x128xf32, #tpu.memory_space<vmem>>, vector<128x128xf32>
    %cst_52 = arith.constant dense<0.000000e+00> : vector<256x128xf32>
    %66 = tpu.matmul %64, %65, %cst_52 {dimension_numbers = #tpu.dot_dimension_numbers<[1], [0], [0], [1], [0, 0, 1, 1], [], []>} : vector<256x128xf32>, vector<128x128xf32>, vector<256x128xf32> -> vector<256x128xf32>
    %67 = arith.addf %62, %66 : vector<256x128xf32>
    %c0_53 = arith.constant 0 : index
    %c2 = arith.constant 2 : index
    %c0_54 = arith.constant 0 : index
    %68 = vector.load %arg8[%c0_53, %c2, %c0_54] : memref<18x18x128xf32, #tpu.memory_space<vmem>>, vector<16x16x128xf32>
    %69 = vector.shape_cast %68 : vector<16x16x128xf32> to vector<256x128xf32>
    %c256 = arith.constant 256 : index
    %c0_55 = arith.constant 0 : index
    %70 = vector.load %arg5[%c256, %c0_55] : memref<1152x128xf32, #tpu.memory_space<vmem>>, vector<128x128xf32>
    %cst_56 = arith.constant dense<0.000000e+00> : vector<256x128xf32>
    %71 = tpu.matmul %69, %70, %cst_56 {dimension_numbers = #tpu.dot_dimension_numbers<[1], [0], [0], [1], [0, 0, 1, 1], [], []>} : vector<256x128xf32>, vector<128x128xf32>, vector<256x128xf32> -> vector<256x128xf32>
    %72 = arith.addf %67, %71 : vector<256x128xf32>
    %c1_57 = arith.constant 1 : index
    %c0_58 = arith.constant 0 : index
    %c0_59 = arith.constant 0 : index
    %73 = vector.load %arg8[%c1_57, %c0_58, %c0_59] : memref<18x18x128xf32, #tpu.memory_space<vmem>>, vector<16x16x128xf32>
    %74 = vector.shape_cast %73 : vector<16x16x128xf32> to vector<256x128xf32>
    %c384 = arith.constant 384 : index
    %c0_60 = arith.constant 0 : index
    %75 = vector.load %arg5[%c384, %c0_60] : memref<1152x128xf32, #tpu.memory_space<vmem>>, vector<128x128xf32>
    %cst_61 = arith.constant dense<0.000000e+00> : vector<256x128xf32>
    %76 = tpu.matmul %74, %75, %cst_61 {dimension_numbers = #tpu.dot_dimension_numbers<[1], [0], [0], [1], [0, 0, 1, 1], [], []>} : vector<256x128xf32>, vector<128x128xf32>, vector<256x128xf32> -> vector<256x128xf32>
    %77 = arith.addf %72, %76 : vector<256x128xf32>
    %c1_62 = arith.constant 1 : index
    %c1_63 = arith.constant 1 : index
    %c0_64 = arith.constant 0 : index
    %78 = vector.load %arg8[%c1_62, %c1_63, %c0_64] : memref<18x18x128xf32, #tpu.memory_space<vmem>>, vector<16x16x128xf32>
    %79 = vector.shape_cast %78 : vector<16x16x128xf32> to vector<256x128xf32>
    %c512 = arith.constant 512 : index
    %c0_65 = arith.constant 0 : index
    %80 = vector.load %arg5[%c512, %c0_65] : memref<1152x128xf32, #tpu.memory_space<vmem>>, vector<128x128xf32>
    %cst_66 = arith.constant dense<0.000000e+00> : vector<256x128xf32>
    %81 = tpu.matmul %79, %80, %cst_66 {dimension_numbers = #tpu.dot_dimension_numbers<[1], [0], [0], [1], [0, 0, 1, 1], [], []>} : vector<256x128xf32>, vector<128x128xf32>, vector<256x128xf32> -> vector<256x128xf32>
    %82 = arith.addf %77, %81 : vector<256x128xf32>
    %c1_67 = arith.constant 1 : index
    %c2_68 = arith.constant 2 : index
    %c0_69 = arith.constant 0 : index
    %83 = vector.load %arg8[%c1_67, %c2_68, %c0_69] : memref<18x18x128xf32, #tpu.memory_space<vmem>>, vector<16x16x128xf32>
    %84 = vector.shape_cast %83 : vector<16x16x128xf32> to vector<256x128xf32>
    %c640 = arith.constant 640 : index
    %c0_70 = arith.constant 0 : index
    %85 = vector.load %arg5[%c640, %c0_70] : memref<1152x128xf32, #tpu.memory_space<vmem>>, vector<128x128xf32>
    %cst_71 = arith.constant dense<0.000000e+00> : vector<256x128xf32>
    %86 = tpu.matmul %84, %85, %cst_71 {dimension_numbers = #tpu.dot_dimension_numbers<[1], [0], [0], [1], [0, 0, 1, 1], [], []>} : vector<256x128xf32>, vector<128x128xf32>, vector<256x128xf32> -> vector<256x128xf32>
    %87 = arith.addf %82, %86 : vector<256x128xf32>
    %c2_72 = arith.constant 2 : index
    %c0_73 = arith.constant 0 : index
    %c0_74 = arith.constant 0 : index
    %88 = vector.load %arg8[%c2_72, %c0_73, %c0_74] : memref<18x18x128xf32, #tpu.memory_space<vmem>>, vector<16x16x128xf32>
    %89 = vector.shape_cast %88 : vector<16x16x128xf32> to vector<256x128xf32>
    %c768 = arith.constant 768 : index
    %c0_75 = arith.constant 0 : index
    %90 = vector.load %arg5[%c768, %c0_75] : memref<1152x128xf32, #tpu.memory_space<vmem>>, vector<128x128xf32>
    %cst_76 = arith.constant dense<0.000000e+00> : vector<256x128xf32>
    %91 = tpu.matmul %89, %90, %cst_76 {dimension_numbers = #tpu.dot_dimension_numbers<[1], [0], [0], [1], [0, 0, 1, 1], [], []>} : vector<256x128xf32>, vector<128x128xf32>, vector<256x128xf32> -> vector<256x128xf32>
    %92 = arith.addf %87, %91 : vector<256x128xf32>
    %c2_77 = arith.constant 2 : index
    %c1_78 = arith.constant 1 : index
    %c0_79 = arith.constant 0 : index
    %93 = vector.load %arg8[%c2_77, %c1_78, %c0_79] : memref<18x18x128xf32, #tpu.memory_space<vmem>>, vector<16x16x128xf32>
    %94 = vector.shape_cast %93 : vector<16x16x128xf32> to vector<256x128xf32>
    %c896 = arith.constant 896 : index
    %c0_80 = arith.constant 0 : index
    %95 = vector.load %arg5[%c896, %c0_80] : memref<1152x128xf32, #tpu.memory_space<vmem>>, vector<128x128xf32>
    %cst_81 = arith.constant dense<0.000000e+00> : vector<256x128xf32>
    %96 = tpu.matmul %94, %95, %cst_81 {dimension_numbers = #tpu.dot_dimension_numbers<[1], [0], [0], [1], [0, 0, 1, 1], [], []>} : vector<256x128xf32>, vector<128x128xf32>, vector<256x128xf32> -> vector<256x128xf32>
    %97 = arith.addf %92, %96 : vector<256x128xf32>
    %c2_82 = arith.constant 2 : index
    %c2_83 = arith.constant 2 : index
    %c0_84 = arith.constant 0 : index
    %98 = vector.load %arg8[%c2_82, %c2_83, %c0_84] : memref<18x18x128xf32, #tpu.memory_space<vmem>>, vector<16x16x128xf32>
    %99 = vector.shape_cast %98 : vector<16x16x128xf32> to vector<256x128xf32>
    %c1024 = arith.constant 1024 : index
    %c0_85 = arith.constant 0 : index
    %100 = vector.load %arg5[%c1024, %c0_85] : memref<1152x128xf32, #tpu.memory_space<vmem>>, vector<128x128xf32>
    %cst_86 = arith.constant dense<0.000000e+00> : vector<256x128xf32>
    %101 = tpu.matmul %99, %100, %cst_86 {dimension_numbers = #tpu.dot_dimension_numbers<[1], [0], [0], [1], [0, 0, 1, 1], [], []>} : vector<256x128xf32>, vector<128x128xf32>, vector<256x128xf32> -> vector<256x128xf32>
    %102 = arith.addf %97, %101 : vector<256x128xf32>
    %cst_87 = arith.constant dense<0.000000e+00> : vector<128xf32>
    %103 = vector.multi_reduction <add>, %102, %cst_87 [0] : vector<256x128xf32> to vector<128xf32>
    %104 = vector.shape_cast %103 : vector<128xf32> to vector<1x128xf32>
    %105 = arith.mulf %102, %102 : vector<256x128xf32>
    %cst_88 = arith.constant dense<0.000000e+00> : vector<128xf32>
    %106 = vector.multi_reduction <add>, %105, %cst_88 [0] : vector<256x128xf32> to vector<128xf32>
    %107 = vector.shape_cast %106 : vector<128xf32> to vector<1x128xf32>
    %108 = tpu.concatenate %104, %107 in 0 : vector<1x128xf32>, vector<1x128xf32> -> vector<2x128xf32>
    %c0_89 = arith.constant 0 : index
    %c0_90 = arith.constant 0 : index
    %c0_91 = arith.constant 0 : index
    %c0_92 = arith.constant 0 : index
    %109 = vector.load %arg7[%c0_89, %c0_90, %c0_91, %c0_92] : memref<1x1x2x128xf32, #tpu.memory_space<vmem>>, vector<1x1x2x128xf32>
    %110 = vector.shape_cast %109 : vector<1x1x2x128xf32> to vector<2x128xf32>
    %111 = vector.shape_cast %108 : vector<2x128xf32> to vector<1x1x2x128xf32>
    tpu.vector_store %arg7[%c0_89, %c0_90, %c0_91, %c0_92], %111 {strides = array<i32>} : memref<1x1x2x128xf32, #tpu.memory_space<vmem>>, vector<1x1x2x128xf32>,
    %c0_93 = arith.constant 0 : index
    %c0_94 = arith.constant 0 : index
    %c0_95 = arith.constant 0 : index
    %112 = vector.load %arg6[%c0_93, %c0_94, %c0_95] : memref<1x256x128xf32, #tpu.memory_space<vmem>>, vector<1x256x128xf32>
    %113 = vector.shape_cast %112 : vector<1x256x128xf32> to vector<256x128xf32>
    %114 = vector.shape_cast %102 : vector<256x128xf32> to vector<1x256x128xf32>
    tpu.vector_store %arg6[%c0_93, %c0_94, %c0_95], %114 {strides = array<i32>} : memref<1x256x128xf32, #tpu.memory_space<vmem>>, vector<1x256x128xf32>,
    return
  }
  func.func @transform_0(%arg0: i32, %arg1: i32) -> (i32, i32, i32, i32) {
    %c0_i32 = arith.constant 0 : i32
    %c0_i32_0 = arith.constant 0 : i32
    %c0_i32_1 = arith.constant 0 : i32
    %c0_i32_2 = arith.constant 0 : i32
    return %arg0, %c0_i32, %c0_i32_0, %c0_i32_1 : i32, i32, i32, i32
  }
  func.func @transform_1(%arg0: i32, %arg1: i32) -> (i32, i32) {
    %c0_i32 = arith.constant 0 : i32
    %c0_i32_0 = arith.constant 0 : i32
    %c0_i32_1 = arith.constant 0 : i32
    return %c0_i32, %c0_i32_0 : i32, i32
  }
  func.func @transform_2(%arg0: i32, %arg1: i32) -> (i32, i32) {
    %c0_i32 = arith.constant 0 : i32
    %c0_i32_0 = arith.constant 0 : i32
    %c0_i32_1 = arith.constant 0 : i32
    return %c0_i32, %c0_i32_0 : i32, i32
  }
  func.func @transform_3(%arg0: i32, %arg1: i32) -> (i32, i32) {
    %c0_i32 = arith.constant 0 : i32
    %c0_i32_0 = arith.constant 0 : i32
    %c0_i32_1 = arith.constant 0 : i32
    return %c0_i32, %c0_i32_0 : i32, i32
  }
  func.func @transform_4(%arg0: i32, %arg1: i32) -> (i32, i32, i32) {
    %c0_i32 = arith.constant 0 : i32
    %c0_i32_0 = arith.constant 0 : i32
    return %arg0, %arg1, %c0_i32 : i32, i32, i32
  }
  func.func @transform_5(%arg0: i32, %arg1: i32) -> (i32, i32, i32, i32) {
    %c0_i32 = arith.constant 0 : i32
    %c0_i32_0 = arith.constant 0 : i32
    %c0_i32_1 = arith.constant 0 : i32
    return %arg0, %arg1, %c0_i32, %c0_i32_0 : i32, i32, i32, i32
  }
}

</mosaic_0001>

<llo_original>
// kernel: vggish_conv_block.2
$region0: #{vggish_conv_block.2}
  #allocation0 [shape = 'u32[]', space=smem, size = 0x4, offset = 0x4, fixed_abs, tag = 'smem constant byte address 0x4 - core index']
  #allocation1 [shape = 'u32[72,128]{1,0:T(1,128)}', space=vmem, size = 0x9000, scoped, tag = 'internal scratch']
  #allocation2 [shape = 'f32[18,18,4]{2,1,0:T(8,128)}', space=vmem, size = 0x36000, scoped, tag = 'scratch operand']
  %s0 = inlined_call_operand.vmem [shape: f32[2,16,16,4], index: 0, kind: input, shape index: {}]
  %s1 = inlined_call_operand.vmem [shape: f32[1,4], index: 1, kind: input, shape index: {}]
  %s2 = inlined_call_operand.vmem [shape: f32[1,4], index: 2, kind: input, shape index: {}]
  %s3 = inlined_call_operand.vmem [shape: f32[36,128], index: 3, kind: input, shape index: {}]
  %s4 = inlined_call_operand.vmem [shape: f32[2,256,128], index: 4, kind: output, shape index: {0}]
  %s5 = inlined_call_operand.vmem [shape: f32[2,1,2,128], index: 5, kind: output, shape index: {1}]
  %6 = xla_tuple %s4, %s5
  %s7 = sld [smem:[#allocation0]]
  $region57: #{vggish_conv_block.2} parent=0
    _
  %s9 = ssub.s32 1, %s7
  %s10 = scalar_select 0, %s9, %s7
  loop: start=0, step=1, limit=4
  $region2: #{vggish_conv_block.2} parent=0 // loop_pre_header
    _
  $region3: #{vggish_conv_block.2} parent=0 // loop_header
    %s12 = sphi 0, %s16
    %p13 = scmp.ge.s32.totalorder %s12, 4
    %s19 = sphi 0, %s31
    %s20 = sphi 0, %s27
    %s21 = sphi 0, %s19
    %s22 = sphi 0, %s20
    %s23 = sphi 0, %s21
    %s24 = sphi 0, %s22
    %s34 = sphi 0, %s36
    %s37 = sphi 0, %s34
    %s38 = sphi 0, %s37
    %s54 = sphi 0, %s38
    %s58 = sphi 0, %s58
    %s60 = sphi 0, %s58
    %s61 = sphi 0, %s60
    %s75 = sphi 0, %s61
    %s79 = sphi 0, %s79
    %s81 = sphi 0, %s79
    %s82 = sphi 0, %s81
    %s96 = sphi 0, %s82
    %s100 = sphi 0, %s100
    %s102 = sphi 0, %s100
    %s103 = sphi 0, %s102
    %s117 = sphi 0, %s103
    %s125 = sphi 0, %s127
    %s128 = sphi 0, %s125
    %s129 = sphi 0, %s128
    %s145 = sphi 0, %s129
    %s153 = sphi 0, %s155
    %s156 = sphi 0, %s153
    %s157 = sphi 0, %s156
    %s173 = sphi 0, %s157
  $region4: #{vggish_conv_block.2} parent=0 // loop_header_branch
    %15 = sbr.rel (%p13) target = $region8
  $region5: #{vggish_conv_block.2} parent=0 // loop_body
    %s17 = ssub.s32 %s12, 1
    %s18 = ssub.s32 %s12, 2
    %s25 = sadd.s32 1, %s20
    %p26 = scmp.ge.s32.totalorder %s25, 1
    %s27 = scalar_select %p26, 0, %s25
    %s28 = sadd.s32 1, %s19
    %s29 = scalar_select %p26, %s28, %s19
    %p30 = scmp.ge.s32.totalorder %s29, 2
    %s31 = scalar_select %p30, 0, %s29
    %s32 = ssub.s32 %s19, %s31
    %p33 = scmp.eq.s32.totalorder %s32, 0
    %s35 = sadd.s32 %s34, 1
    %s36 = scalar_select %p33, %s34, %s35
    %p39 = pneg %p33
    %p40 = scmp.eq.s32.totalorder %s12, 1
    %p41 = por %p39, %p40
    %p42 = scmp.ne.s32.totalorder %s34, %s37
    %p43 = scmp.eq.s32.totalorder %s12, 0
    %p44 = por %p42, %p43
    %p45 = scmp.ne.s32.totalorder %s34, %s37
    %p46 = scmp.eq.s32.totalorder %s17, 1
    %p47 = por %p45, %p46
    %p48 = scmp.ne.s32.totalorder %s37, %s38
    %p49 = scmp.eq.s32.totalorder %s17, 0
    %p50 = por %p48, %p49
    %p51 = scmp.ne.s32.totalorder %s37, %s38
    %p52 = scmp.eq.s32.totalorder %s18, 1
    %p53 = por %p51, %p52
    %p55 = scmp.ne.s32.totalorder %s38, %s54
    %p56 = scmp.eq.s32.totalorder %s18, 0
    %p57 = por %p55, %p56
    %s59 = sadd.s32 %s58, 1
    %p62 = scmp.eq.s32.totalorder %s12, 1
    %p63 = scmp.ne.s32.totalorder %s58, %s60
    %p64 = scmp.eq.s32.totalorder %s12, 0
    %p65 = por %p63, %p64
    %p66 = scmp.ne.s32.totalorder %s58, %s60
    %p67 = scmp.eq.s32.totalorder %s17, 1
    %p68 = por %p66, %p67
    %p69 = scmp.ne.s32.totalorder %s60, %s61
    %p70 = scmp.eq.s32.totalorder %s17, 0
    %p71 = por %p69, %p70
    %p72 = scmp.ne.s32.totalorder %s60, %s61
    %p73 = scmp.eq.s32.totalorder %s18, 1
    %p74 = por %p72, %p73
    %p76 = scmp.ne.s32.totalorder %s61, %s75
    %p77 = scmp.eq.s32.totalorder %s18, 0
    %p78 = por %p76, %p77
    %s80 = sadd.s32 %s79, 1
    %p83 = scmp.eq.s32.totalorder %s12, 1
    %p84 = scmp.ne.s32.totalorder %s79, %s81
    %p85 = scmp.eq.s32.totalorder %s12, 0
    %p86 = por %p84, %p85
    %p87 = scmp.ne.s32.totalorder %s79, %s81
    %p88 = scmp.eq.s32.totalorder %s17, 1
    %p89 = por %p87, %p88
    %p90 = scmp.ne.s32.totalorder %s81, %s82
    %p91 = scmp.eq.s32.totalorder %s17, 0
    %p92 = por %p90, %p91
    %p93 = scmp.ne.s32.totalorder %s81, %s82
    %p94 = scmp.eq.s32.totalorder %s18, 1
    %p95 = por %p93, %p94
    %p97 = scmp.ne.s32.totalorder %s82, %s96
    %p98 = scmp.eq.s32.totalorder %s18, 0
    %p99 = por %p97, %p98
    %s101 = sadd.s32 %s100, 1
    %p104 = scmp.eq.s32.totalorder %s12, 1
    %p105 = scmp.ne.s32.totalorder %s100, %s102
    %p106 = scmp.eq.s32.totalorder %s12, 0
    %p107 = por %p105, %p106
    %p108 = scmp.ne.s32.totalorder %s100, %s102
    %p109 = scmp.eq.s32.totalorder %s17, 1
    %p110 = por %p108, %p109
    %p111 = scmp.ne.s32.totalorder %s102, %s103
    %p112 = scmp.eq.s32.totalorder %s17, 0
    %p113 = por %p111, %p112
    %p114 = scmp.ne.s32.totalorder %s102, %s103
    %p115 = scmp.eq.s32.totalorder %s18, 1
    %p116 = por %p114, %p115
    %p118 = scmp.ne.s32.totalorder %s103, %s117
    %p119 = scmp.eq.s32.totalorder %s18, 0
    %p120 = por %p118, %p119
    %s121 = ssub.s32 %s19, %s31
    %s122 = ssub.s32 %s20, %s27
    %s123 = sor.u32 %s121, %s122
    %p124 = scmp.eq.s32.totalorder %s123, 0
    %s126 = sadd.s32 %s125, 1
    %s127 = scalar_select %p124, %s125, %s126
    %p130 = pneg %p124
    %p131 = scmp.eq.s32.totalorder %s12, 1
    %p132 = por %p130, %p131
    %p133 = scmp.ne.s32.totalorder %s125, %s128
    %p134 = scmp.eq.s32.totalorder %s12, 0
    %p135 = por %p133, %p134
    %p136 = scmp.ne.s32.totalorder %s125, %s128
    %p137 = scmp.eq.s32.totalorder %s17, 1
    %p138 = por %p136, %p137
    %p139 = scmp.ne.s32.totalorder %s128, %s129
    %p140 = scmp.eq.s32.totalorder %s17, 0
    %p141 = por %p139, %p140
    %p142 = scmp.ne.s32.totalorder %s128, %s129
    %p143 = scmp.eq.s32.totalorder %s18, 1
    %p144 = por %p142, %p143
    %p146 = scmp.ne.s32.totalorder %s129, %s145
    %p147 = scmp.eq.s32.totalorder %s18, 0
    %p148 = por %p146, %p147
    %s149 = ssub.s32 %s19, %s31
    %s150 = ssub.s32 %s20, %s27
    %s151 = sor.u32 %s149, %s150
    %p152 = scmp.eq.s32.totalorder %s151, 0
    %s154 = sadd.s32 %s153, 1
    %s155 = scalar_select %p152, %s153, %s154
    %p158 = pneg %p152
    %p159 = scmp.eq.s32.totalorder %s12, 1
    %p160 = por %p158, %p159
    %p161 = scmp.ne.s32.totalorder %s153, %s156
    %p162 = scmp.eq.s32.totalorder %s12, 0
    %p163 = por %p161, %p162
    %p164 = scmp.ne.s32.totalorder %s153, %s156
    %p165 = scmp.eq.s32.totalorder %s17, 1
    %p166 = por %p164, %p165
    %p167 = scmp.ne.s32.totalorder %s156, %s157
    %p168 = scmp.eq.s32.totalorder %s17, 0
    %p169 = por %p167, %p168
    %p170 = scmp.ne.s32.totalorder %s156, %s157
    %p171 = scmp.eq.s32.totalorder %s18, 1
    %p172 = por %p170, %p171
    %p174 = scmp.ne.s32.totalorder %s157, %s173
    %p175 = scmp.eq.s32.totalorder %s18, 0
    %p176 = por %p174, %p175
    %p177 = scmp.le.s32.totalorder 1, %s12
    %p178 = scmp.lt.s32.totalorder %s12, 3
    %p179 = pnand %p177, %p178
    %p180 = pneg %p179
    // Predicated region
    $region9: #{vggish_conv_block.2} parent=5 // pred_check
      _
    $region10: #{vggish_conv_block.2} parent=5 // pred_check_branch
      %182 = sbr.rel (%p179) target = $region12
    $region11: #{vggish_conv_block.2} parent=5 // pred_region
      %s183 = ssub.s32 %s12, 1
      // Predicated region
      $region13: #{vggish_conv_block.2} parent=11 // pred_check
        %p184 = pneg %p71
      $region14: #{vggish_conv_block.2} parent=11 // pred_check_branch
        %186 = sbr.rel (%p184) target = $region16
      $region15: #{vggish_conv_block.2} parent=11 // pred_region
        _
      $region16: #{vggish_conv_block.2} parent=11 // pred_fallthru
        _
      // Predicated region
      $region17: #{vggish_conv_block.2} parent=11 // pred_check
        %p187 = pneg %p92
      $region18: #{vggish_conv_block.2} parent=11 // pred_check_branch
        %189 = sbr.rel (%p187) target = $region20
      $region19: #{vggish_conv_block.2} parent=11 // pred_region
        _
      $region20: #{vggish_conv_block.2} parent=11 // pred_fallthru
        _
      // Predicated region
      $region21: #{vggish_conv_block.2} parent=11 // pred_check
        %p190 = pneg %p113
      $region22: #{vggish_conv_block.2} parent=11 // pred_check_branch
        %192 = sbr.rel (%p190) target = $region24
      $region23: #{vggish_conv_block.2} parent=11 // pred_region
        _
      $region24: #{vggish_conv_block.2} parent=11 // pred_fallthru
        _
    $region12: #{vggish_conv_block.2} parent=5 // pred_fallthru
      _
    %p193 = scmp.lt.s32.totalorder %s12, 2
    // Predicated region
    $region25: #{vggish_conv_block.2} parent=5 // pred_check
      %p194 = pneg %p193
    $region26: #{vggish_conv_block.2} parent=5 // pred_check_branch
      %196 = sbr.rel (%p194) target = $region28
    $region27: #{vggish_conv_block.2} parent=5 // pred_region
      // Predicated region
      $region29: #{vggish_conv_block.2} parent=27 // pred_check
        %p197 = pneg %p44
      $region30: #{vggish_conv_block.2} parent=27 // pred_check_branch
        %199 = sbr.rel (%p197) target = $region32
      $region31: #{vggish_conv_block.2} parent=27 // pred_region
        %p200 = scmp.lt.s32.totalorder %s19, 1
        %s201 = scalar_select %p200, %s19, 1
        %s202 = smul.addr %s201, 32
        %s203 = smul.addr %s202, 8
        %s204 = scalar_lea.vmem %s0, %s203
      $region32: #{vggish_conv_block.2} parent=27 // pred_fallthru
        _
    $region28: #{vggish_conv_block.2} parent=5 // pred_fallthru
      _
    %p205 = scmp.le.s32.totalorder 1, %s12
    %p206 = scmp.lt.s32.totalorder %s12, 3
    %p207 = pnand %p205, %p206
    %p208 = pneg %p207
    // Predicated region
    $region33: #{vggish_conv_block.2} parent=5 // pred_check
      _
    $region34: #{vggish_conv_block.2} parent=5 // pred_check_branch
      %210 = sbr.rel (%p207) target = $region36
    $region35: #{vggish_conv_block.2} parent=5 // pred_region
      %s211 = ssub.s32 %s12, 1
      %p212 = scmp.lt.s32.totalorder %s21, 1
      %s213 = scalar_select %p212, %s21, 1
      %s214 = smul.addr %s213, 32
      %s215 = smul.addr %s214, 8
      %s216 = scalar_lea.vmem %s0, %s215
      %p217 = pneg %p50
      %p218 = pneg %p47
      %p219 = pneg %p71
      %p220 = pneg %p68
      %p221 = pneg %p92
      %p222 = pneg %p89
      %p223 = pneg %p113
      %p224 = pneg %p110
      %p225 = pneg %p141
      %p226 = pneg %p138
      %s227 = smul.u32 32, %s22
      %p228 = scmp.lt.s32.totalorder %s21, 1
      %s229 = scalar_select %p228, %s21, 1
      %p230 = scmp.lt.s32.totalorder %s227, 31
      %s231 = scalar_select %p230, %s227, 31
      %s232 = smul.addr %s229, 32
      %s233 = sadd.s32 %s231, %s232
      %s234 = smul.addr %s233, 8
      %s235 = scalar_lea.vmem %s4, %s234
      %p236 = pneg %p169
      %p237 = pneg %p166
      %p238 = scmp.lt.s32.totalorder %s21, 1
      %s239 = scalar_select %p238, %s21, 1
      %p240 = scmp.lt.s32.totalorder %s22, 0
      %s241 = scalar_select %p240, %s22, 0
      %s242 = sadd.s32 %s241, %s239
      %s243 = smul.addr %s242, 2
      %s244 = scalar_lea.vmem %s5, %s243
      %p245 = scmp.lt.s32.totalorder %s21, 1
      %s246 = scalar_select %p245, %s21, 1
      %s247 = smul.addr %s246, 32
      %s248 = smul.addr %s247, 8
      %s249 = scalar_lea.vmem %s0, %s248
      %s250 = smul.u32 32, %s22
      %p251 = scmp.lt.s32.totalorder %s21, 1
      %s252 = scalar_select %p251, %s21, 1
      %p253 = scmp.lt.s32.totalorder %s250, 31
      %s254 = scalar_select %p253, %s250, 31
      %s255 = smul.addr %s252, 32
      %s256 = sadd.s32 %s254, %s255
      %s257 = smul.addr %s256, 8
      %s258 = scalar_lea.vmem %s4, %s257
      %s259 = smul.u32 32, %s22
      %p260 = scmp.lt.s32.totalorder %s21, 1
      %s261 = scalar_select %p260, %s21, 1
      %p262 = scmp.lt.s32.totalorder %s22, 0
      %s263 = scalar_select %p262, %s22, 0
      %s264 = sadd.s32 %s263, %s261
      %s265 = smul.addr %s264, 2
      %s266 = scalar_lea.vmem %s5, %s265
      %s267 = smul.u32 %s22, 16
      %vm268 = vcmask 24576
      %269 = vst.msk [vmem:[#allocation2] sm:$0x1] %vm268, 0.0
      %270 = vst.msk [vmem:[#allocation2 + $0x18] sm:$0x1] %vm268, 0.0
      %271 = vst.msk [vmem:[#allocation2 + $0x30] sm:$0x1] %vm268, 0.0
      %272 = vst.msk [vmem:[#allocation2 + $0x48] sm:$0x1] %vm268, 0.0
      %273 = vst.msk [vmem:[#allocation2 + $0x60] sm:$0x1] %vm268, 0.0
      %274 = vst.msk [vmem:[#allocation2 + $0x78] sm:$0x1] %vm268, 0.0
      %275 = vst.msk [vmem:[#allocation2 + $0x90] sm:$0x1] %vm268, 0.0
      %276 = vst.msk [vmem:[#allocation2 + $0xa8] sm:$0x1] %vm268, 0.0
      %277 = vst.msk [vmem:[#allocation2 + $0xc0] sm:$0x1] %vm268, 0.0
      %278 = vst.msk [vmem:[#allocation2 + $0xd8] sm:$0x1] %vm268, 0.0
      %279 = vst.msk [vmem:[#allocation2 + $0xf0] sm:$0x1] %vm268, 0.0
      %280 = vst.msk [vmem:[#allocation2 + $0x108] sm:$0x1] %vm268, 0.0
      %281 = vst.msk [vmem:[#allocation2 + $0x120] sm:$0x1] %vm268, 0.0
      %282 = vst.msk [vmem:[#allocation2 + $0x138] sm:$0x1] %vm268, 0.0
      %283 = vst.msk [vmem:[#allocation2 + $0x150] sm:$0x1] %vm268, 0.0
      %284 = vst.msk [vmem:[#allocation2 + $0x168] sm:$0x1] %vm268, 0.0
      %285 = vst.msk [vmem:[#allocation2 + $0x180] sm:$0x1] %vm268, 0.0
      %286 = vst.msk [vmem:[#allocation2 + $0x198] sm:$0x1] %vm268, 0.0
      %287 = vst.msk [vmem:[#allocation2 + $0x11] sm:$0x1] %vm268, 0.0
      %288 = vst.msk [vmem:[#allocation2 + $0x29] sm:$0x1] %vm268, 0.0
      %289 = vst.msk [vmem:[#allocation2 + $0x41] sm:$0x1] %vm268, 0.0
      %290 = vst.msk [vmem:[#allocation2 + $0x59] sm:$0x1] %vm268, 0.0
      %291 = vst.msk [vmem:[#allocation2 + $0x71] sm:$0x1] %vm268, 0.0
      %292 = vst.msk [vmem:[#allocation2 + $0x89] sm:$0x1] %vm268, 0.0
      %293 = vst.msk [vmem:[#allocation2 + $0xa1] sm:$0x1] %vm268, 0.0
      %294 = vst.msk [vmem:[#allocation2 + $0xb9] sm:$0x1] %vm268, 0.0
      %295 = vst.msk [vmem:[#allocation2 + $0xd1] sm:$0x1] %vm268, 0.0
      %296 = vst.msk [vmem:[#allocation2 + $0xe9] sm:$0x1] %vm268, 0.0
      %297 = vst.msk [vmem:[#allocation2 + $0x101] sm:$0x1] %vm268, 0.0
      %298 = vst.msk [vmem:[#allocation2 + $0x119] sm:$0x1] %vm268, 0.0
      %299 = vst.msk [vmem:[#allocation2 + $0x131] sm:$0x1] %vm268, 0.0
      %300 = vst.msk [vmem:[#allocation2 + $0x149] sm:$0x1] %vm268, 0.0
      %301 = vst.msk [vmem:[#allocation2 + $0x161] sm:$0x1] %vm268, 0.0
      %302 = vst.msk [vmem:[#allocation2 + $0x179] sm:$0x1] %vm268, 0.0
      %303 = vst.msk [vmem:[#allocation2 + $0x191] sm:$0x1] %vm268, 0.0
      %304 = vst.msk [vmem:[#allocation2 + $0x1a9] sm:$0x1] %vm268, 0.0
      %s305 = smul.u32 %s267, 16
      %s306 = scalar_lea.vmem %s249, %s305
      %v307 = vld [vmem:[%s306] sm:$0xff]
      %v308 = vld [vmem:[%s306 + $0x8] sm:$0xff]
      %v309 = vld [vmem:[%s306 + $0x10] sm:$0xff]
      %v310 = vld [vmem:[%s306 + $0x18] sm:$0xff]
      %v311 = vld [vmem:[%s306 + $0x20] sm:$0xff]
      %v312 = vld [vmem:[%s306 + $0x28] sm:$0xff]
      %v313 = vld [vmem:[%s306 + $0x30] sm:$0xff]
      %v314 = vld [vmem:[%s306 + $0x38] sm:$0xff]
      %v315 = vld [vmem:[%s306 + $0x40] sm:$0xff]
      %v316 = vld [vmem:[%s306 + $0x48] sm:$0xff]
      %v317 = vld [vmem:[%s306 + $0x50] sm:$0xff]
      %v318 = vld [vmem:[%s306 + $0x58] sm:$0xff]
      %v319 = vld [vmem:[%s306 + $0x60] sm:$0xff]
      %v320 = vld [vmem:[%s306 + $0x68] sm:$0xff]
      %v321 = vld [vmem:[%s306 + $0x70] sm:$0xff]
      %v322 = vld [vmem:[%s306 + $0x78] sm:$0xff]
      %v323 = vld [vmem:[%s306 + $0x80] sm:$0xff]
      %v324 = vld [vmem:[%s306 + $0x88] sm:$0xff]
      %v325 = vld [vmem:[%s306 + $0x90] sm:$0xff]
      %v326 = vld [vmem:[%s306 + $0x98] sm:$0xff]
      %v327 = vld [vmem:[%s306 + $0xa0] sm:$0xff]
      %v328 = vld [vmem:[%s306 + $0xa8] sm:$0xff]
      %v329 = vld [vmem:[%s306 + $0xb0] sm:$0xff]
      %v330 = vld [vmem:[%s306 + $0xb8] sm:$0xff]
      %v331 = vld [vmem:[%s306 + $0xc0] sm:$0xff]
      %v332 = vld [vmem:[%s306 + $0xc8] sm:$0xff]
      %v333 = vld [vmem:[%s306 + $0xd0] sm:$0xff]
      %v334 = vld [vmem:[%s306 + $0xd8] sm:$0xff]
      %v335 = vld [vmem:[%s306 + $0xe0] sm:$0xff]
      %v336 = vld [vmem:[%s306 + $0xe8] sm:$0xff]
      %v337 = vld [vmem:[%s306 + $0xf0] sm:$0xff]
      %v338 = vld [vmem:[%s306 + $0xf8] sm:$0xff]
      %s339 = scalar_lea.vmem [#allocation2], 24
      %vm340 = vcmask 31744
      %341 = vst.msk [vmem:[%s339 + $0x1] sm:$0xff] %vm340, %v307
      %342 = vst.msk [vmem:[%s339 + $0x9] sm:$0xff] %vm340, %v308
      %343 = vst.msk [vmem:[%s339 + $0x19] sm:$0xff] %vm340, %v309
      %344 = vst.msk [vmem:[%s339 + $0x21] sm:$0xff] %vm340, %v310
      %345 = vst.msk [vmem:[%s339 + $0x31] sm:$0xff] %vm340, %v311
      %346 = vst.msk [vmem:[%s339 + $0x39] sm:$0xff] %vm340, %v312
      %347 = vst.msk [vmem:[%s339 + $0x49] sm:$0xff] %vm340, %v313
      %348 = vst.msk [vmem:[%s339 + $0x51] sm:$0xff] %vm340, %v314
      %349 = vst.msk [vmem:[%s339 + $0x61] sm:$0xff] %vm340, %v315
      %350 = vst.msk [vmem:[%s339 + $0x69] sm:$0xff] %vm340, %v316
      %351 = vst.msk [vmem:[%s339 + $0x79] sm:$0xff] %vm340, %v317
      %352 = vst.msk [vmem:[%s339 + $0x81] sm:$0xff] %vm340, %v318
      %353 = vst.msk [vmem:[%s339 + $0x91] sm:$0xff] %vm340, %v319
      %354 = vst.msk [vmem:[%s339 + $0x99] sm:$0xff] %vm340, %v320
      %355 = vst.msk [vmem:[%s339 + $0xa9] sm:$0xff] %vm340, %v321
      %356 = vst.msk [vmem:[%s339 + $0xb1] sm:$0xff] %vm340, %v322
      %357 = vst.msk [vmem:[%s339 + $0xc1] sm:$0xff] %vm340, %v323
      %358 = vst.msk [vmem:[%s339 + $0xc9] sm:$0xff] %vm340, %v324
      %359 = vst.msk [vmem:[%s339 + $0xd9] sm:$0xff] %vm340, %v325
      %360 = vst.msk [vmem:[%s339 + $0xe1] sm:$0xff] %vm340, %v326
      %361 = vst.msk [vmem:[%s339 + $0xf1] sm:$0xff] %vm340, %v327
      %362 = vst.msk [vmem:[%s339 + $0xf9] sm:$0xff] %vm340, %v328
      %363 = vst.msk [vmem:[%s339 + $0x109] sm:$0xff] %vm340, %v329
      %364 = vst.msk [vmem:[%s339 + $0x111] sm:$0xff] %vm340, %v330
      %365 = vst.msk [vmem:[%s339 + $0x121] sm:$0xff] %vm340, %v331
      %366 = vst.msk [vmem:[%s339 + $0x129] sm:$0xff] %vm340, %v332
      %367 = vst.msk [vmem:[%s339 + $0x139] sm:$0xff] %vm340, %v333
      %368 = vst.msk [vmem:[%s339 + $0x141] sm:$0xff] %vm340, %v334
      %369 = vst.msk [vmem:[%s339 + $0x151] sm:$0xff] %vm340, %v335
      %370 = vst.msk [vmem:[%s339 + $0x159] sm:$0xff] %vm340, %v336
      %371 = vst.msk [vmem:[%s339 + $0x169] sm:$0xff] %vm340, %v337
      %372 = vst.msk [vmem:[%s339 + $0x171] sm:$0xff] %vm340, %v338
      %s373 = ssub.s32 %s267, 1
      %p374 = scmp.gt.s32.totalorder %s373, 0
      %s375 = scalar_select %p374, %s373, 0
      %s376 = smul.u32 %s375, 16
      %s377 = scalar_lea.vmem %s249, %s376
      %v378 = vld [vmem:[%s377] sm:$0xff]
      %v379 = vld [vmem:[%s377 + $0x8] sm:$0xff]
      %p380 = scmp.gt.s32.totalorder %s22, 0
      %s381 = scalar_select %p380, 1, 0
      %v382 = vstv %s381
      %vm383 = vcmp.eq.s32.totalorder %v382, 1
      %v384 = vsel %vm383, %v378, 0.0
      %v385 = vsel %vm383, %v379, 0.0
      %386 = vst.msk [vmem:[#allocation2 + $0x1] sm:$0xff] %vm340, %v384
      %387 = vst.msk [vmem:[#allocation2 + $0x9] sm:$0xff] %vm340, %v385
      %s388 = sadd.s32 %s267, 16
      %p389 = scmp.lt.s32.totalorder %s388, 15
      %s390 = scalar_select %p389, %s388, 15
      %s391 = smul.u32 %s390, 16
      %s392 = scalar_lea.vmem %s249, %s391
      %v393 = vld [vmem:[%s392] sm:$0xff]
      %v394 = vld [vmem:[%s392 + $0x8] sm:$0xff]
      %p395 = scmp.lt.s32.totalorder %s22, 0
      %s396 = scalar_select %p395, 1, 0
      %v397 = vstv %s396
      %vm398 = vcmp.eq.s32.totalorder %v397, 1
      %v399 = vsel %vm398, %v393, 0.0
      %v400 = vsel %vm398, %v394, 0.0
      %s401 = scalar_lea.vmem [#allocation2], 408
      %402 = vst.msk [vmem:[%s401 + $0x1] sm:$0xff] %vm340, %v399
      %403 = vst.msk [vmem:[%s401 + $0x9] sm:$0xff] %vm340, %v400
      %v404 = vld [vmem:[#allocation2] sm:$0xff]
      %v405 = vld [vmem:[#allocation2 + $0x8] sm:$0xff]
      %v406 = vld [vmem:[#allocation2 + $0x18] sm:$0xff]
      %v407 = vld [vmem:[#allocation2 + $0x20] sm:$0xff]
      %v408 = vld [vmem:[#allocation2 + $0x30] sm:$0xff]
      %v409 = vld [vmem:[#allocation2 + $0x38] sm:$0xff]
      %v410 = vld [vmem:[#allocation2 + $0x48] sm:$0xff]
      %v411 = vld [vmem:[#allocation2 + $0x50] sm:$0xff]
      %v412 = vld [vmem:[#allocation2 + $0x60] sm:$0xff]
      %v413 = vld [vmem:[#allocation2 + $0x68] sm:$0xff]
      %v414 = vld [vmem:[#allocation2 + $0x78] sm:$0xff]
      %v415 = vld [vmem:[#allocation2 + $0x80] sm:$0xff]
      %v416 = vld [vmem:[#allocation2 + $0x90] sm:$0xff]
      %v417 = vld [vmem:[#allocation2 + $0x98] sm:$0xff]
      %v418 = vld [vmem:[#allocation2 + $0xa8] sm:$0xff]
      %v419 = vld [vmem:[#allocation2 + $0xb0] sm:$0xff]
      %v420 = vld [vmem:[#allocation2 + $0xc0] sm:$0xff]
      %v421 = vld [vmem:[#allocation2 + $0xc8] sm:$0xff]
      %v422 = vld [vmem:[#allocation2 + $0xd8] sm:$0xff]
      %v423 = vld [vmem:[#allocation2 + $0xe0] sm:$0xff]
      %v424 = vld [vmem:[#allocation2 + $0xf0] sm:$0xff]
      %v425 = vld [vmem:[#allocation2 + $0xf8] sm:$0xff]
      %v426 = vld [vmem:[#allocation2 + $0x108] sm:$0xff]
      %v427 = vld [vmem:[#allocation2 + $0x110] sm:$0xff]
      %v428 = vld [vmem:[#allocation2 + $0x120] sm:$0xff]
      %v429 = vld [vmem:[#allocation2 + $0x128] sm:$0xff]
      %v430 = vld [vmem:[#allocation2 + $0x138] sm:$0xff]
      %v431 = vld [vmem:[#allocation2 + $0x140] sm:$0xff]
      %v432 = vld [vmem:[#allocation2 + $0x150] sm:$0xff]
      %v433 = vld [vmem:[#allocation2 + $0x158] sm:$0xff]
      %v434 = vld [vmem:[#allocation2 + $0x168] sm:$0xff]
      %v435 = vld [vmem:[#allocation2 + $0x170] sm:$0xff]
      %v436 = vld [vmem:[#allocation2 + $0x1] sm:$0xff]
      %v437 = vld [vmem:[#allocation2 + $0x9] sm:$0xff]
      %v438 = vld [vmem:[#allocation2 + $0x19] sm:$0xff]
      %v439 = vld [vmem:[#allocation2 + $0x21] sm:$0xff]
      %v440 = vld [vmem:[#allocation2 + $0x31] sm:$0xff]
      %v441 = vld [vmem:[#allocation2 + $0x39] sm:$0xff]
      %v442 = vld [vmem:[#allocation2 + $0x49] sm:$0xff]
      %v443 = vld [vmem:[#allocation2 + $0x51] sm:$0xff]
      %v444 = vld [vmem:[#allocation2 + $0x61] sm:$0xff]
      %v445 = vld [vmem:[#allocation2 + $0x69] sm:$0xff]
      %v446 = vld [vmem:[#allocation2 + $0x79] sm:$0xff]
      %v447 = vld [vmem:[#allocation2 + $0x81] sm:$0xff]
      %v448 = vld [vmem:[#allocation2 + $0x91] sm:$0xff]
      %v449 = vld [vmem:[#allocation2 + $0x99] sm:$0xff]
      %v450 = vld [vmem:[#allocation2 + $0xa9] sm:$0xff]
      %v451 = vld [vmem:[#allocation2 + $0xb1] sm:$0xff]
      %v452 = vld [vmem:[#allocation2 + $0xc1] sm:$0xff]
      %v453 = vld [vmem:[#allocation2 + $0xc9] sm:$0xff]
      %v454 = vld [vmem:[#allocation2 + $0xd9] sm:$0xff]
      %v455 = vld [vmem:[#allocation2 + $0xe1] sm:$0xff]
      %v456 = vld [vmem:[#allocation2 + $0xf1] sm:$0xff]
      %v457 = vld [vmem:[#allocation2 + $0xf9] sm:$0xff]
      %v458 = vld [vmem:[#allocation2 + $0x109] sm:$0xff]
      %v459 = vld [vmem:[#allocation2 + $0x111] sm:$0xff]
      %v460 = vld [vmem:[#allocation2 + $0x121] sm:$0xff]
      %v461 = vld [vmem:[#allocation2 + $0x129] sm:$0xff]
      %v462 = vld [vmem:[#allocation2 + $0x139] sm:$0xff]
      %v463 = vld [vmem:[#allocation2 + $0x141] sm:$0xff]
      %v464 = vld [vmem:[#allocation2 + $0x151] sm:$0xff]
      %v465 = vld [vmem:[#allocation2 + $0x159] sm:$0xff]
      %v466 = vld [vmem:[#allocation2 + $0x169] sm:$0xff]
      %v467 = vld [vmem:[#allocation2 + $0x171] sm:$0xff]
      %v468 = vld [vmem:[#allocation2 + $0x2] sm:$0xff]
      %v469 = vld [vmem:[#allocation2 + $0xa] sm:$0xff]
      %v470 = vld [vmem:[#allocation2 + $0x1a] sm:$0xff]
      %v471 = vld [vmem:[#allocation2 + $0x22] sm:$0xff]
      %v472 = vld [vmem:[#allocation2 + $0x32] sm:$0xff]
      %v473 = vld [vmem:[#allocation2 + $0x3a] sm:$0xff]
      %v474 = vld [vmem:[#allocation2 + $0x4a] sm:$0xff]
      %v475 = vld [vmem:[#allocation2 + $0x52] sm:$0xff]
      %v476 = vld [vmem:[#allocation2 + $0x62] sm:$0xff]
      %v477 = vld [vmem:[#allocation2 + $0x6a] sm:$0xff]
      %v478 = vld [vmem:[#allocation2 + $0x7a] sm:$0xff]
      %v479 = vld [vmem:[#allocation2 + $0x82] sm:$0xff]
      %v480 = vld [vmem:[#allocation2 + $0x92] sm:$0xff]
      %v481 = vld [vmem:[#allocation2 + $0x9a] sm:$0xff]
      %v482 = vld [vmem:[#allocation2 + $0xaa] sm:$0xff]
      %v483 = vld [vmem:[#allocation2 + $0xb2] sm:$0xff]
      %v484 = vld [vmem:[#allocation2 + $0xc2] sm:$0xff]
      %v485 = vld [vmem:[#allocation2 + $0xca] sm:$0xff]
      %v486 = vld [vmem:[#allocation2 + $0xda] sm:$0xff]
      %v487 = vld [vmem:[#allocation2 + $0xe2] sm:$0xff]
      %v488 = vld [vmem:[#allocation2 + $0xf2] sm:$0xff]
      %v489 = vld [vmem:[#allocation2 + $0xfa] sm:$0xff]
      %v490 = vld [vmem:[#allocation2 + $0x10a] sm:$0xff]
      %v491 = vld [vmem:[#allocation2 + $0x112] sm:$0xff]
      %v492 = vld [vmem:[#allocation2 + $0x122] sm:$0xff]
      %v493 = vld [vmem:[#allocation2 + $0x12a] sm:$0xff]
      %v494 = vld [vmem:[#allocation2 + $0x13a] sm:$0xff]
      %v495 = vld [vmem:[#allocation2 + $0x142] sm:$0xff]
      %v496 = vld [vmem:[#allocation2 + $0x152] sm:$0xff]
      %v497 = vld [vmem:[#allocation2 + $0x15a] sm:$0xff]
      %v498 = vld [vmem:[#allocation2 + $0x16a] sm:$0xff]
      %v499 = vld [vmem:[#allocation2 + $0x172] sm:$0xff]
      %v500 = vld [vmem:[%s339] sm:$0xff]
      %v501 = vld [vmem:[%s339 + $0x8] sm:$0xff]
      %v502 = vld [vmem:[%s339 + $0x18] sm:$0xff]
      %v503 = vld [vmem:[%s339 + $0x20] sm:$0xff]
      %v504 = vld [vmem:[%s339 + $0x30] sm:$0xff]
      %v505 = vld [vmem:[%s339 + $0x38] sm:$0xff]
      %v506 = vld [vmem:[%s339 + $0x48] sm:$0xff]
      %v507 = vld [vmem:[%s339 + $0x50] sm:$0xff]
      %v508 = vld [vmem:[%s339 + $0x60] sm:$0xff]
      %v509 = vld [vmem:[%s339 + $0x68] sm:$0xff]
      %v510 = vld [vmem:[%s339 + $0x78] sm:$0xff]
      %v511 = vld [vmem:[%s339 + $0x80] sm:$0xff]
      %v512 = vld [vmem:[%s339 + $0x90] sm:$0xff]
      %v513 = vld [vmem:[%s339 + $0x98] sm:$0xff]
      %v514 = vld [vmem:[%s339 + $0xa8] sm:$0xff]
      %v515 = vld [vmem:[%s339 + $0xb0] sm:$0xff]
      %v516 = vld [vmem:[%s339 + $0xc0] sm:$0xff]
      %v517 = vld [vmem:[%s339 + $0xc8] sm:$0xff]
      %v518 = vld [vmem:[%s339 + $0xd8] sm:$0xff]
      %v519 = vld [vmem:[%s339 + $0xe0] sm:$0xff]
      %v520 = vld [vmem:[%s339 + $0xf0] sm:$0xff]
      %v521 = vld [vmem:[%s339 + $0xf8] sm:$0xff]
      %v522 = vld [vmem:[%s339 + $0x108] sm:$0xff]
      %v523 = vld [vmem:[%s339 + $0x110] sm:$0xff]
      %v524 = vld [vmem:[%s339 + $0x120] sm:$0xff]
      %v525 = vld [vmem:[%s339 + $0x128] sm:$0xff]
      %v526 = vld [vmem:[%s339 + $0x138] sm:$0xff]
      %v527 = vld [vmem:[%s339 + $0x140] sm:$0xff]
      %v528 = vld [vmem:[%s339 + $0x150] sm:$0xff]
      %v529 = vld [vmem:[%s339 + $0x158] sm:$0xff]
      %v530 = vld [vmem:[%s339 + $0x168] sm:$0xff]
      %v531 = vld [vmem:[%s339 + $0x170] sm:$0xff]
      %v532 = vld [vmem:[%s339 + $0x1] sm:$0xff]
      %v533 = vld [vmem:[%s339 + $0x9] sm:$0xff]
      %v534 = vld [vmem:[%s339 + $0x19] sm:$0xff]
      %v535 = vld [vmem:[%s339 + $0x21] sm:$0xff]
      %v536 = vld [vmem:[%s339 + $0x31] sm:$0xff]
      %v537 = vld [vmem:[%s339 + $0x39] sm:$0xff]
      %v538 = vld [vmem:[%s339 + $0x49] sm:$0xff]
      %v539 = vld [vmem:[%s339 + $0x51] sm:$0xff]
      %v540 = vld [vmem:[%s339 + $0x61] sm:$0xff]
      %v541 = vld [vmem:[%s339 + $0x69] sm:$0xff]
      %v542 = vld [vmem:[%s339 + $0x79] sm:$0xff]
      %v543 = vld [vmem:[%s339 + $0x81] sm:$0xff]
      %v544 = vld [vmem:[%s339 + $0x91] sm:$0xff]
      %v545 = vld [vmem:[%s339 + $0x99] sm:$0xff]
      %v546 = vld [vmem:[%s339 + $0xa9] sm:$0xff]
      %v547 = vld [vmem:[%s339 + $0xb1] sm:$0xff]
      %v548 = vld [vmem:[%s339 + $0xc1] sm:$0xff]
      %v549 = vld [vmem:[%s339 + $0xc9] sm:$0xff]
      %v550 = vld [vmem:[%s339 + $0xd9] sm:$0xff]
      %v551 = vld [vmem:[%s339 + $0xe1] sm:$0xff]
      %v552 = vld [vmem:[%s339 + $0xf1] sm:$0xff]
      %v553 = vld [vmem:[%s339 + $0xf9] sm:$0xff]
      %v554 = vld [vmem:[%s339 + $0x109] sm:$0xff]
      %v555 = vld [vmem:[%s339 + $0x111] sm:$0xff]
      %v556 = vld [vmem:[%s339 + $0x121] sm:$0xff]
      %v557 = vld [vmem:[%s339 + $0x129] sm:$0xff]
      %v558 = vld [vmem:[%s339 + $0x139] sm:$0xff]
      %v559 = vld [vmem:[%s339 + $0x141] sm:$0xff]
      %v560 = vld [vmem:[%s339 + $0x151] sm:$0xff]
      %v561 = vld [vmem:[%s339 + $0x159] sm:$0xff]
      %v562 = vld [vmem:[%s339 + $0x169] sm:$0xff]
      %v563 = vld [vmem:[%s339 + $0x171] sm:$0xff]
      %v564 = vld [vmem:[%s339 + $0x2] sm:$0xff]
      %v565 = vld [vmem:[%s339 + $0xa] sm:$0xff]
      %v566 = vld [vmem:[%s339 + $0x1a] sm:$0xff]
      %v567 = vld [vmem:[%s339 + $0x22] sm:$0xff]
      %v568 = vld [vmem:[%s339 + $0x32] sm:$0xff]
      %v569 = vld [vmem:[%s339 + $0x3a] sm:$0xff]
      %v570 = vld [vmem:[%s339 + $0x4a] sm:$0xff]
      %v571 = vld [vmem:[%s339 + $0x52] sm:$0xff]
      %v572 = vld [vmem:[%s339 + $0x62] sm:$0xff]
      %v573 = vld [vmem:[%s339 + $0x6a] sm:$0xff]
      %v574 = vld [vmem:[%s339 + $0x7a] sm:$0xff]
      %v575 = vld [vmem:[%s339 + $0x82] sm:$0xff]
      %v576 = vld [vmem:[%s339 + $0x92] sm:$0xff]
      %v577 = vld [vmem:[%s339 + $0x9a] sm:$0xff]
      %v578 = vld [vmem:[%s339 + $0xaa] sm:$0xff]
      %v579 = vld [vmem:[%s339 + $0xb2] sm:$0xff]
      %v580 = vld [vmem:[%s339 + $0xc2] sm:$0xff]
      %v581 = vld [vmem:[%s339 + $0xca] sm:$0xff]
      %v582 = vld [vmem:[%s339 + $0xda] sm:$0xff]
      %v583 = vld [vmem:[%s339 + $0xe2] sm:$0xff]
      %v584 = vld [vmem:[%s339 + $0xf2] sm:$0xff]
      %v585 = vld [vmem:[%s339 + $0xfa] sm:$0xff]
      %v586 = vld [vmem:[%s339 + $0x10a] sm:$0xff]
      %v587 = vld [vmem:[%s339 + $0x112] sm:$0xff]
      %v588 = vld [vmem:[%s339 + $0x122] sm:$0xff]
      %v589 = vld [vmem:[%s339 + $0x12a] sm:$0xff]
      %v590 = vld [vmem:[%s339 + $0x13a] sm:$0xff]
      %v591 = vld [vmem:[%s339 + $0x142] sm:$0xff]
      %v592 = vld [vmem:[%s339 + $0x152] sm:$0xff]
      %v593 = vld [vmem:[%s339 + $0x15a] sm:$0xff]
      %v594 = vld [vmem:[%s339 + $0x16a] sm:$0xff]
      %v595 = vld [vmem:[%s339 + $0x172] sm:$0xff]
      %s596 = scalar_lea.vmem [#allocation2], 48
      %v597 = vld [vmem:[%s596] sm:$0xff]
      %v598 = vld [vmem:[%s596 + $0x8] sm:$0xff]
      %v599 = vld [vmem:[%s596 + $0x18] sm:$0xff]
      %v600 = vld [vmem:[%s596 + $0x20] sm:$0xff]
      %v601 = vld [vmem:[%s596 + $0x30] sm:$0xff]
      %v602 = vld [vmem:[%s596 + $0x38] sm:$0xff]
      %v603 = vld [vmem:[%s596 + $0x48] sm:$0xff]
      %v604 = vld [vmem:[%s596 + $0x50] sm:$0xff]
      %v605 = vld [vmem:[%s596 + $0x60] sm:$0xff]
      %v606 = vld [vmem:[%s596 + $0x68] sm:$0xff]
      %v607 = vld [vmem:[%s596 + $0x78] sm:$0xff]
      %v608 = vld [vmem:[%s596 + $0x80] sm:$0xff]
      %v609 = vld [vmem:[%s596 + $0x90] sm:$0xff]
      %v610 = vld [vmem:[%s596 + $0x98] sm:$0xff]
      %v611 = vld [vmem:[%s596 + $0xa8] sm:$0xff]
      %v612 = vld [vmem:[%s596 + $0xb0] sm:$0xff]
      %v613 = vld [vmem:[%s596 + $0xc0] sm:$0xff]
      %v614 = vld [vmem:[%s596 + $0xc8] sm:$0xff]
      %v615 = vld [vmem:[%s596 + $0xd8] sm:$0xff]
      %v616 = vld [vmem:[%s596 + $0xe0] sm:$0xff]
      %v617 = vld [vmem:[%s596 + $0xf0] sm:$0xff]
      %v618 = vld [vmem:[%s596 + $0xf8] sm:$0xff]
      %v619 = vld [vmem:[%s596 + $0x108] sm:$0xff]
      %v620 = vld [vmem:[%s596 + $0x110] sm:$0xff]
      %v621 = vld [vmem:[%s596 + $0x120] sm:$0xff]
      %v622 = vld [vmem:[%s596 + $0x128] sm:$0xff]
      %v623 = vld [vmem:[%s596 + $0x138] sm:$0xff]
      %v624 = vld [vmem:[%s596 + $0x140] sm:$0xff]
      %v625 = vld [vmem:[%s596 + $0x150] sm:$0xff]
      %v626 = vld [vmem:[%s596 + $0x158] sm:$0xff]
      %v627 = vld [vmem:[%s596 + $0x168] sm:$0xff]
      %v628 = vld [vmem:[%s596 + $0x170] sm:$0xff]
      %v629 = vld [vmem:[%s596 + $0x1] sm:$0xff]
      %v630 = vld [vmem:[%s596 + $0x9] sm:$0xff]
      %v631 = vld [vmem:[%s596 + $0x19] sm:$0xff]
      %v632 = vld [vmem:[%s596 + $0x21] sm:$0xff]
      %v633 = vld [vmem:[%s596 + $0x31] sm:$0xff]
      %v634 = vld [vmem:[%s596 + $0x39] sm:$0xff]
      %v635 = vld [vmem:[%s596 + $0x49] sm:$0xff]
      %v636 = vld [vmem:[%s596 + $0x51] sm:$0xff]
      %v637 = vld [vmem:[%s596 + $0x61] sm:$0xff]
      %v638 = vld [vmem:[%s596 + $0x69] sm:$0xff]
      %v639 = vld [vmem:[%s596 + $0x79] sm:$0xff]
      %v640 = vld [vmem:[%s596 + $0x81] sm:$0xff]
      %v641 = vld [vmem:[%s596 + $0x91] sm:$0xff]
      %v642 = vld [vmem:[%s596 + $0x99] sm:$0xff]
      %v643 = vld [vmem:[%s596 + $0xa9] sm:$0xff]
      %v644 = vld [vmem:[%s596 + $0xb1] sm:$0xff]
      %v645 = vld [vmem:[%s596 + $0xc1] sm:$0xff]
      %v646 = vld [vmem:[%s596 + $0xc9] sm:$0xff]
      %v647 = vld [vmem:[%s596 + $0xd9] sm:$0xff]
      %v648 = vld [vmem:[%s596 + $0xe1] sm:$0xff]
      %v649 = vld [vmem:[%s596 + $0xf1] sm:$0xff]
      %v650 = vld [vmem:[%s596 + $0xf9] sm:$0xff]
      %v651 = vld [vmem:[%s596 + $0x109] sm:$0xff]
      %v652 = vld [vmem:[%s596 + $0x111] sm:$0xff]
      %v653 = vld [vmem:[%s596 + $0x121] sm:$0xff]
      %v654 = vld [vmem:[%s596 + $0x129] sm:$0xff]
      %v655 = vld [vmem:[%s596 + $0x139] sm:$0xff]
      %v656 = vld [vmem:[%s596 + $0x141] sm:$0xff]
      %v657 = vld [vmem:[%s596 + $0x151] sm:$0xff]
      %v658 = vld [vmem:[%s596 + $0x159] sm:$0xff]
      %v659 = vld [vmem:[%s596 + $0x169] sm:$0xff]
      %v660 = vld [vmem:[%s596 + $0x171] sm:$0xff]
      %v661 = vld [vmem:[%s596 + $0x2] sm:$0xff]
      %v662 = vld [vmem:[%s596 + $0xa] sm:$0xff]
      %v663 = vld [vmem:[%s596 + $0x1a] sm:$0xff]
      %v664 = vld [vmem:[%s596 + $0x22] sm:$0xff]
      %v665 = vld [vmem:[%s596 + $0x32] sm:$0xff]
      %v666 = vld [vmem:[%s596 + $0x3a] sm:$0xff]
      %v667 = vld [vmem:[%s596 + $0x4a] sm:$0xff]
      %v668 = vld [vmem:[%s596 + $0x52] sm:$0xff]
      %v669 = vld [vmem:[%s596 + $0x62] sm:$0xff]
      %v670 = vld [vmem:[%s596 + $0x6a] sm:$0xff]
      %v671 = vld [vmem:[%s596 + $0x7a] sm:$0xff]
      %v672 = vld [vmem:[%s596 + $0x82] sm:$0xff]
      %v673 = vld [vmem:[%s596 + $0x92] sm:$0xff]
      %v674 = vld [vmem:[%s596 + $0x9a] sm:$0xff]
      %v675 = vld [vmem:[%s596 + $0xaa] sm:$0xff]
      %v676 = vld [vmem:[%s596 + $0xb2] sm:$0xff]
      %v677 = vld [vmem:[%s596 + $0xc2] sm:$0xff]
      %v678 = vld [vmem:[%s596 + $0xca] sm:$0xff]
      %v679 = vld [vmem:[%s596 + $0xda] sm:$0xff]
      %v680 = vld [vmem:[%s596 + $0xe2] sm:$0xff]
      %v681 = vld [vmem:[%s596 + $0xf2] sm:$0xff]
      %v682 = vld [vmem:[%s596 + $0xfa] sm:$0xff]
      %v683 = vld [vmem:[%s596 + $0x10a] sm:$0xff]
      %v684 = vld [vmem:[%s596 + $0x112] sm:$0xff]
      %v685 = vld [vmem:[%s596 + $0x122] sm:$0xff]
      %v686 = vld [vmem:[%s596 + $0x12a] sm:$0xff]
      %v687 = vld [vmem:[%s596 + $0x13a] sm:$0xff]
      %v688 = vld [vmem:[%s596 + $0x142] sm:$0xff]
      %v689 = vld [vmem:[%s596 + $0x152] sm:$0xff]
      %v690 = vld [vmem:[%s596 + $0x15a] sm:$0xff]
      %v691 = vld [vmem:[%s596 + $0x16a] sm:$0xff]
      %v692 = vld [vmem:[%s596 + $0x172] sm:$0xff]
      %725 = vrot.lane.b32.xlu0 %v436, 4
      %v726 = vpop.permute.xlu0 %725
      %727 = vrot.lane.b32.xlu0 %v437, 4
      %v728 = vpop.permute.xlu0 %727
      %729 = vrot.lane.b32.xlu0 %v438, 4
      %v730 = vpop.permute.xlu0 %729
      %731 = vrot.lane.b32.xlu0 %v439, 4
      %v732 = vpop.permute.xlu0 %731
      %733 = vrot.lane.b32.xlu0 %v440, 4
      %v734 = vpop.permute.xlu0 %733
      %735 = vrot.lane.b32.xlu0 %v441, 4
      %v736 = vpop.permute.xlu0 %735
      %737 = vrot.lane.b32.xlu0 %v442, 4
      %v738 = vpop.permute.xlu0 %737
      %739 = vrot.lane.b32.xlu0 %v443, 4
      %v740 = vpop.permute.xlu0 %739
      %741 = vrot.lane.b32.xlu0 %v444, 4
      %v742 = vpop.permute.xlu0 %741
      %743 = vrot.lane.b32.xlu0 %v445, 4
      %v744 = vpop.permute.xlu0 %743
      %745 = vrot.lane.b32.xlu0 %v446, 4
      %v746 = vpop.permute.xlu0 %745
      %747 = vrot.lane.b32.xlu0 %v447, 4
      %v748 = vpop.permute.xlu0 %747
      %749 = vrot.lane.b32.xlu0 %v448, 4
      %v750 = vpop.permute.xlu0 %749
      %751 = vrot.lane.b32.xlu0 %v449, 4
      %v752 = vpop.permute.xlu0 %751
      %753 = vrot.lane.b32.xlu0 %v450, 4
      %v754 = vpop.permute.xlu0 %753
      %755 = vrot.lane.b32.xlu0 %v451, 4
      %v756 = vpop.permute.xlu0 %755
      %757 = vrot.lane.b32.xlu0 %v452, 4
      %v758 = vpop.permute.xlu0 %757
      %759 = vrot.lane.b32.xlu0 %v453, 4
      %v760 = vpop.permute.xlu0 %759
      %761 = vrot.lane.b32.xlu0 %v454, 4
      %v762 = vpop.permute.xlu0 %761
      %763 = vrot.lane.b32.xlu0 %v455, 4
      %v764 = vpop.permute.xlu0 %763
      %765 = vrot.lane.b32.xlu0 %v456, 4
      %v766 = vpop.permute.xlu0 %765
      %767 = vrot.lane.b32.xlu0 %v457, 4
      %v768 = vpop.permute.xlu0 %767
      %769 = vrot.lane.b32.xlu0 %v458, 4
      %v770 = vpop.permute.xlu0 %769
      %771 = vrot.lane.b32.xlu0 %v459, 4
      %v772 = vpop.permute.xlu0 %771
      %773 = vrot.lane.b32.xlu0 %v460, 4
      %v774 = vpop.permute.xlu0 %773
      %775 = vrot.lane.b32.xlu0 %v461, 4
      %v776 = vpop.permute.xlu0 %775
      %777 = vrot.lane.b32.xlu0 %v462, 4
      %v778 = vpop.permute.xlu0 %777
      %779 = vrot.lane.b32.xlu0 %v463, 4
      %v780 = vpop.permute.xlu0 %779
      %781 = vrot.lane.b32.xlu0 %v464, 4
      %v782 = vpop.permute.xlu0 %781
      %783 = vrot.lane.b32.xlu0 %v465, 4
      %v784 = vpop.permute.xlu0 %783
      %785 = vrot.lane.b32.xlu0 %v466, 4
      %v786 = vpop.permute.xlu0 %785
      %787 = vrot.lane.b32.xlu0 %v467, 4
      %v788 = vpop.permute.xlu0 %787
      %853 = vrot.lane.b32.xlu0 %v468, 8
      %v854 = vpop.permute.xlu0 %853
      %855 = vrot.lane.b32.xlu0 %v469, 8
      %v856 = vpop.permute.xlu0 %855
      %857 = vrot.lane.b32.xlu0 %v470, 8
      %v858 = vpop.permute.xlu0 %857
      %859 = vrot.lane.b32.xlu0 %v471, 8
      %v860 = vpop.permute.xlu0 %859
      %861 = vrot.lane.b32.xlu0 %v472, 8
      %v862 = vpop.permute.xlu0 %861
      %863 = vrot.lane.b32.xlu0 %v473, 8
      %v864 = vpop.permute.xlu0 %863
      %865 = vrot.lane.b32.xlu0 %v474, 8
      %v866 = vpop.permute.xlu0 %865
      %867 = vrot.lane.b32.xlu0 %v475, 8
      %v868 = vpop.permute.xlu0 %867
      %869 = vrot.lane.b32.xlu0 %v476, 8
      %v870 = vpop.permute.xlu0 %869
      %871 = vrot.lane.b32.xlu0 %v477, 8
      %v872 = vpop.permute.xlu0 %871
      %873 = vrot.lane.b32.xlu0 %v478, 8
      %v874 = vpop.permute.xlu0 %873
      %875 = vrot.lane.b32.xlu0 %v479, 8
      %v876 = vpop.permute.xlu0 %875
      %877 = vrot.lane.b32.xlu0 %v480, 8
      %v878 = vpop.permute.xlu0 %877
      %879 = vrot.lane.b32.xlu0 %v481, 8
      %v880 = vpop.permute.xlu0 %879
      %881 = vrot.lane.b32.xlu0 %v482, 8
      %v882 = vpop.permute.xlu0 %881
      %883 = vrot.lane.b32.xlu0 %v483, 8
      %v884 = vpop.permute.xlu0 %883
      %885 = vrot.lane.b32.xlu0 %v484, 8
      %v886 = vpop.permute.xlu0 %885
      %887 = vrot.lane.b32.xlu0 %v485, 8
      %v888 = vpop.permute.xlu0 %887
      %889 = vrot.lane.b32.xlu0 %v486, 8
      %v890 = vpop.permute.xlu0 %889
      %891 = vrot.lane.b32.xlu0 %v487, 8
      %v892 = vpop.permute.xlu0 %891
      %893 = vrot.lane.b32.xlu0 %v488, 8
      %v894 = vpop.permute.xlu0 %893
      %895 = vrot.lane.b32.xlu0 %v489, 8
      %v896 = vpop.permute.xlu0 %895
      %897 = vrot.lane.b32.xlu0 %v490, 8
      %v898 = vpop.permute.xlu0 %897
      %899 = vrot.lane.b32.xlu0 %v491, 8
      %v900 = vpop.permute.xlu0 %899
      %901 = vrot.lane.b32.xlu0 %v492, 8
      %v902 = vpop.permute.xlu0 %901
      %903 = vrot.lane.b32.xlu0 %v493, 8
      %v904 = vpop.permute.xlu0 %903
      %905 = vrot.lane.b32.xlu0 %v494, 8
      %v906 = vpop.permute.xlu0 %905
      %907 = vrot.lane.b32.xlu0 %v495, 8
      %v908 = vpop.permute.xlu0 %907
      %909 = vrot.lane.b32.xlu0 %v496, 8
      %v910 = vpop.permute.xlu0 %909
      %911 = vrot.lane.b32.xlu0 %v497, 8
      %v912 = vpop.permute.xlu0 %911
      %913 = vrot.lane.b32.xlu0 %v498, 8
      %v914 = vpop.permute.xlu0 %913
      %915 = vrot.lane.b32.xlu0 %v499, 8
      %v916 = vpop.permute.xlu0 %915
      %981 = vrot.lane.b32.xlu0 %v500, 12
      %v982 = vpop.permute.xlu0 %981
      %983 = vrot.lane.b32.xlu0 %v501, 12
      %v984 = vpop.permute.xlu0 %983
      %985 = vrot.lane.b32.xlu0 %v502, 12
      %v986 = vpop.permute.xlu0 %985
      %987 = vrot.lane.b32.xlu0 %v503, 12
      %v988 = vpop.permute.xlu0 %987
      %989 = vrot.lane.b32.xlu0 %v504, 12
      %v990 = vpop.permute.xlu0 %989
      %991 = vrot.lane.b32.xlu0 %v505, 12
      %v992 = vpop.permute.xlu0 %991
      %993 = vrot.lane.b32.xlu0 %v506, 12
      %v994 = vpop.permute.xlu0 %993
      %995 = vrot.lane.b32.xlu0 %v507, 12
      %v996 = vpop.permute.xlu0 %995
      %997 = vrot.lane.b32.xlu0 %v508, 12
      %v998 = vpop.permute.xlu0 %997
      %999 = vrot.lane.b32.xlu0 %v509, 12
      %v1000 = vpop.permute.xlu0 %999
      %1001 = vrot.lane.b32.xlu0 %v510, 12
      %v1002 = vpop.permute.xlu0 %1001
      %1003 = vrot.lane.b32.xlu0 %v511, 12
      %v1004 = vpop.permute.xlu0 %1003
      %1005 = vrot.lane.b32.xlu0 %v512, 12
      %v1006 = vpop.permute.xlu0 %1005
      %1007 = vrot.lane.b32.xlu0 %v513, 12
      %v1008 = vpop.permute.xlu0 %1007
      %1009 = vrot.lane.b32.xlu0 %v514, 12
      %v1010 = vpop.permute.xlu0 %1009
      %1011 = vrot.lane.b32.xlu0 %v515, 12
      %v1012 = vpop.permute.xlu0 %1011
      %1013 = vrot.lane.b32.xlu0 %v516, 12
      %v1014 = vpop.permute.xlu0 %1013
      %1015 = vrot.lane.b32.xlu0 %v517, 12
      %v1016 = vpop.permute.xlu0 %1015
      %1017 = vrot.lane.b32.xlu0 %v518, 12
      %v1018 = vpop.permute.xlu0 %1017
      %1019 = vrot.lane.b32.xlu0 %v519, 12
      %v1020 = vpop.permute.xlu0 %1019
      %1021 = vrot.lane.b32.xlu0 %v520, 12
      %v1022 = vpop.permute.xlu0 %1021
      %1023 = vrot.lane.b32.xlu0 %v521, 12
      %v1024 = vpop.permute.xlu0 %1023
      %1025 = vrot.lane.b32.xlu0 %v522, 12
      %v1026 = vpop.permute.xlu0 %1025
      %1027 = vrot.lane.b32.xlu0 %v523, 12
      %v1028 = vpop.permute.xlu0 %1027
      %1029 = vrot.lane.b32.xlu0 %v524, 12
      %v1030 = vpop.permute.xlu0 %1029
      %1031 = vrot.lane.b32.xlu0 %v525, 12
      %v1032 = vpop.permute.xlu0 %1031
      %1033 = vrot.lane.b32.xlu0 %v526, 12
      %v1034 = vpop.permute.xlu0 %1033
      %1035 = vrot.lane.b32.xlu0 %v527, 12
      %v1036 = vpop.permute.xlu0 %1035
      %1037 = vrot.lane.b32.xlu0 %v528, 12
      %v1038 = vpop.permute.xlu0 %1037
      %1039 = vrot.lane.b32.xlu0 %v529, 12
      %v1040 = vpop.permute.xlu0 %1039
      %1041 = vrot.lane.b32.xlu0 %v530, 12
      %v1042 = vpop.permute.xlu0 %1041
      %1043 = vrot.lane.b32.xlu0 %v531, 12
      %v1044 = vpop.permute.xlu0 %1043
      %1109 = vrot.lane.b32.xlu0 %v532, 16
      %v1110 = vpop.permute.xlu0 %1109
      %1111 = vrot.lane.b32.xlu0 %v533, 16
      %v1112 = vpop.permute.xlu0 %1111
      %1113 = vrot.lane.b32.xlu0 %v534, 16
      %v1114 = vpop.permute.xlu0 %1113
      %1115 = vrot.lane.b32.xlu0 %v535, 16
      %v1116 = vpop.permute.xlu0 %1115
      %1117 = vrot.lane.b32.xlu0 %v536, 16
      %v1118 = vpop.permute.xlu0 %1117
      %1119 = vrot.lane.b32.xlu0 %v537, 16
      %v1120 = vpop.permute.xlu0 %1119
      %1121 = vrot.lane.b32.xlu0 %v538, 16
      %v1122 = vpop.permute.xlu0 %1121
      %1123 = vrot.lane.b32.xlu0 %v539, 16
      %v1124 = vpop.permute.xlu0 %1123
      %1125 = vrot.lane.b32.xlu0 %v540, 16
      %v1126 = vpop.permute.xlu0 %1125
      %1127 = vrot.lane.b32.xlu0 %v541, 16
      %v1128 = vpop.permute.xlu0 %1127
      %1129 = vrot.lane.b32.xlu0 %v542, 16
      %v1130 = vpop.permute.xlu0 %1129
      %1131 = vrot.lane.b32.xlu0 %v543, 16
      %v1132 = vpop.permute.xlu0 %1131
      %1133 = vrot.lane.b32.xlu0 %v544, 16
      %v1134 = vpop.permute.xlu0 %1133
      %1135 = vrot.lane.b32.xlu0 %v545, 16
      %v1136 = vpop.permute.xlu0 %1135
      %1137 = vrot.lane.b32.xlu0 %v546, 16
      %v1138 = vpop.permute.xlu0 %1137
      %1139 = vrot.lane.b32.xlu0 %v547, 16
      %v1140 = vpop.permute.xlu0 %1139
      %1141 = vrot.lane.b32.xlu0 %v548, 16
      %v1142 = vpop.permute.xlu0 %1141
      %1143 = vrot.lane.b32.xlu0 %v549, 16
      %v1144 = vpop.permute.xlu0 %1143
      %1145 = vrot.lane.b32.xlu0 %v550, 16
      %v1146 = vpop.permute.xlu0 %1145
      %1147 = vrot.lane.b32.xlu0 %v551, 16
      %v1148 = vpop.permute.xlu0 %1147
      %1149 = vrot.lane.b32.xlu0 %v552, 16
      %v1150 = vpop.permute.xlu0 %1149
      %1151 = vrot.lane.b32.xlu0 %v553, 16
      %v1152 = vpop.permute.xlu0 %1151
      %1153 = vrot.lane.b32.xlu0 %v554, 16
      %v1154 = vpop.permute.xlu0 %1153
      %1155 = vrot.lane.b32.xlu0 %v555, 16
      %v1156 = vpop.permute.xlu0 %1155
      %1157 = vrot.lane.b32.xlu0 %v556, 16
      %v1158 = vpop.permute.xlu0 %1157
      %1159 = vrot.lane.b32.xlu0 %v557, 16
      %v1160 = vpop.permute.xlu0 %1159
      %1161 = vrot.lane.b32.xlu0 %v558, 16
      %v1162 = vpop.permute.xlu0 %1161
      %1163 = vrot.lane.b32.xlu0 %v559, 16
      %v1164 = vpop.permute.xlu0 %1163
      %1165 = vrot.lane.b32.xlu0 %v560, 16
      %v1166 = vpop.permute.xlu0 %1165
      %1167 = vrot.lane.b32.xlu0 %v561, 16
      %v1168 = vpop.permute.xlu0 %1167
      %1169 = vrot.lane.b32.xlu0 %v562, 16
      %v1170 = vpop.permute.xlu0 %1169
      %1171 = vrot.lane.b32.xlu0 %v563, 16
      %v1172 = vpop.permute.xlu0 %1171
      %1237 = vrot.lane.b32.xlu0 %v564, 20
      %v1238 = vpop.permute.xlu0 %1237
      %1239 = vrot.lane.b32.xlu0 %v565, 20
      %v1240 = vpop.permute.xlu0 %1239
      %1241 = vrot.lane.b32.xlu0 %v566, 20
      %v1242 = vpop.permute.xlu0 %1241
      %1243 = vrot.lane.b32.xlu0 %v567, 20
      %v1244 = vpop.permute.xlu0 %1243
      %1245 = vrot.lane.b32.xlu0 %v568, 20
      %v1246 = vpop.permute.xlu0 %1245
      %1247 = vrot.lane.b32.xlu0 %v569, 20
      %v1248 = vpop.permute.xlu0 %1247
      %1249 = vrot.lane.b32.xlu0 %v570, 20
      %v1250 = vpop.permute.xlu0 %1249
      %1251 = vrot.lane.b32.xlu0 %v571, 20
      %v1252 = vpop.permute.xlu0 %1251
      %1253 = vrot.lane.b32.xlu0 %v572, 20
      %v1254 = vpop.permute.xlu0 %1253
      %1255 = vrot.lane.b32.xlu0 %v573, 20
      %v1256 = vpop.permute.xlu0 %1255
      %1257 = vrot.lane.b32.xlu0 %v574, 20
      %v1258 = vpop.permute.xlu0 %1257
      %1259 = vrot.lane.b32.xlu0 %v575, 20
      %v1260 = vpop.permute.xlu0 %1259
      %1261 = vrot.lane.b32.xlu0 %v576, 20
      %v1262 = vpop.permute.xlu0 %1261
      %1263 = vrot.lane.b32.xlu0 %v577, 20
      %v1264 = vpop.permute.xlu0 %1263
      %1265 = vrot.lane.b32.xlu0 %v578, 20
      %v1266 = vpop.permute.xlu0 %1265
      %1267 = vrot.lane.b32.xlu0 %v579, 20
      %v1268 = vpop.permute.xlu0 %1267
      %1269 = vrot.lane.b32.xlu0 %v580, 20
      %v1270 = vpop.permute.xlu0 %1269
      %1271 = vrot.lane.b32.xlu0 %v581, 20
      %v1272 = vpop.permute.xlu0 %1271
      %1273 = vrot.lane.b32.xlu0 %v582, 20
      %v1274 = vpop.permute.xlu0 %1273
      %1275 = vrot.lane.b32.xlu0 %v583, 20
      %v1276 = vpop.permute.xlu0 %1275
      %1277 = vrot.lane.b32.xlu0 %v584, 20
      %v1278 = vpop.permute.xlu0 %1277
      %1279 = vrot.lane.b32.xlu0 %v585, 20
      %v1280 = vpop.permute.xlu0 %1279
      %1281 = vrot.lane.b32.xlu0 %v586, 20
      %v1282 = vpop.permute.xlu0 %1281
      %1283 = vrot.lane.b32.xlu0 %v587, 20
      %v1284 = vpop.permute.xlu0 %1283
      %1285 = vrot.lane.b32.xlu0 %v588, 20
      %v1286 = vpop.permute.xlu0 %1285
      %1287 = vrot.lane.b32.xlu0 %v589, 20
      %v1288 = vpop.permute.xlu0 %1287
      %1289 = vrot.lane.b32.xlu0 %v590, 20
      %v1290 = vpop.permute.xlu0 %1289
      %1291 = vrot.lane.b32.xlu0 %v591, 20
      %v1292 = vpop.permute.xlu0 %1291
      %1293 = vrot.lane.b32.xlu0 %v592, 20
      %v1294 = vpop.permute.xlu0 %1293
      %1295 = vrot.lane.b32.xlu0 %v593, 20
      %v1296 = vpop.permute.xlu0 %1295
      %1297 = vrot.lane.b32.xlu0 %v594, 20
      %v1298 = vpop.permute.xlu0 %1297
      %1299 = vrot.lane.b32.xlu0 %v595, 20
      %v1300 = vpop.permute.xlu0 %1299
      %1365 = vrot.lane.b32.xlu0 %v597, 24
      %v1366 = vpop.permute.xlu0 %1365
      %1367 = vrot.lane.b32.xlu0 %v598, 24
      %v1368 = vpop.permute.xlu0 %1367
      %1369 = vrot.lane.b32.xlu0 %v599, 24
      %v1370 = vpop.permute.xlu0 %1369
      %1371 = vrot.lane.b32.xlu0 %v600, 24
      %v1372 = vpop.permute.xlu0 %1371
      %1373 = vrot.lane.b32.xlu0 %v601, 24
      %v1374 = vpop.permute.xlu0 %1373
      %1375 = vrot.lane.b32.xlu0 %v602, 24
      %v1376 = vpop.permute.xlu0 %1375
      %1377 = vrot.lane.b32.xlu0 %v603, 24
      %v1378 = vpop.permute.xlu0 %1377
      %1379 = vrot.lane.b32.xlu0 %v604, 24
      %v1380 = vpop.permute.xlu0 %1379
      %1381 = vrot.lane.b32.xlu0 %v605, 24
      %v1382 = vpop.permute.xlu0 %1381
      %1383 = vrot.lane.b32.xlu0 %v606, 24
      %v1384 = vpop.permute.xlu0 %1383
      %1385 = vrot.lane.b32.xlu0 %v607, 24
      %v1386 = vpop.permute.xlu0 %1385
      %1387 = vrot.lane.b32.xlu0 %v608, 24
      %v1388 = vpop.permute.xlu0 %1387
      %1389 = vrot.lane.b32.xlu0 %v609, 24
      %v1390 = vpop.permute.xlu0 %1389
      %1391 = vrot.lane.b32.xlu0 %v610, 24
      %v1392 = vpop.permute.xlu0 %1391
      %1393 = vrot.lane.b32.xlu0 %v611, 24
      %v1394 = vpop.permute.xlu0 %1393
      %1395 = vrot.lane.b32.xlu0 %v612, 24
      %v1396 = vpop.permute.xlu0 %1395
      %1397 = vrot.lane.b32.xlu0 %v613, 24
      %v1398 = vpop.permute.xlu0 %1397
      %1399 = vrot.lane.b32.xlu0 %v614, 24
      %v1400 = vpop.permute.xlu0 %1399
      %1401 = vrot.lane.b32.xlu0 %v615, 24
      %v1402 = vpop.permute.xlu0 %1401
      %1403 = vrot.lane.b32.xlu0 %v616, 24
      %v1404 = vpop.permute.xlu0 %1403
      %1405 = vrot.lane.b32.xlu0 %v617, 24
      %v1406 = vpop.permute.xlu0 %1405
      %1407 = vrot.lane.b32.xlu0 %v618, 24
      %v1408 = vpop.permute.xlu0 %1407
      %1409 = vrot.lane.b32.xlu0 %v619, 24
      %v1410 = vpop.permute.xlu0 %1409
      %1411 = vrot.lane.b32.xlu0 %v620, 24
      %v1412 = vpop.permute.xlu0 %1411
      %1413 = vrot.lane.b32.xlu0 %v621, 24
      %v1414 = vpop.permute.xlu0 %1413
      %1415 = vrot.lane.b32.xlu0 %v622, 24
      %v1416 = vpop.permute.xlu0 %1415
      %1417 = vrot.lane.b32.xlu0 %v623, 24
      %v1418 = vpop.permute.xlu0 %1417
      %1419 = vrot.lane.b32.xlu0 %v624, 24
      %v1420 = vpop.permute.xlu0 %1419
      %1421 = vrot.lane.b32.xlu0 %v625, 24
      %v1422 = vpop.permute.xlu0 %1421
      %1423 = vrot.lane.b32.xlu0 %v626, 24
      %v1424 = vpop.permute.xlu0 %1423
      %1425 = vrot.lane.b32.xlu0 %v627, 24
      %v1426 = vpop.permute.xlu0 %1425
      %1427 = vrot.lane.b32.xlu0 %v628, 24
      %v1428 = vpop.permute.xlu0 %1427
      %1493 = vrot.lane.b32.xlu0 %v629, 28
      %v1494 = vpop.permute.xlu0 %1493
      %1495 = vrot.lane.b32.xlu0 %v630, 28
      %v1496 = vpop.permute.xlu0 %1495
      %1497 = vrot.lane.b32.xlu0 %v631, 28
      %v1498 = vpop.permute.xlu0 %1497
      %1499 = vrot.lane.b32.xlu0 %v632, 28
      %v1500 = vpop.permute.xlu0 %1499
      %1501 = vrot.lane.b32.xlu0 %v633, 28
      %v1502 = vpop.permute.xlu0 %1501
      %1503 = vrot.lane.b32.xlu0 %v634, 28
      %v1504 = vpop.permute.xlu0 %1503
      %1505 = vrot.lane.b32.xlu0 %v635, 28
      %v1506 = vpop.permute.xlu0 %1505
      %1507 = vrot.lane.b32.xlu0 %v636, 28
      %v1508 = vpop.permute.xlu0 %1507
      %1509 = vrot.lane.b32.xlu0 %v637, 28
      %v1510 = vpop.permute.xlu0 %1509
      %1511 = vrot.lane.b32.xlu0 %v638, 28
      %v1512 = vpop.permute.xlu0 %1511
      %1513 = vrot.lane.b32.xlu0 %v639, 28
      %v1514 = vpop.permute.xlu0 %1513
      %1515 = vrot.lane.b32.xlu0 %v640, 28
      %v1516 = vpop.permute.xlu0 %1515
      %1517 = vrot.lane.b32.xlu0 %v641, 28
      %v1518 = vpop.permute.xlu0 %1517
      %1519 = vrot.lane.b32.xlu0 %v642, 28
      %v1520 = vpop.permute.xlu0 %1519
      %1521 = vrot.lane.b32.xlu0 %v643, 28
      %v1522 = vpop.permute.xlu0 %1521
      %1523 = vrot.lane.b32.xlu0 %v644, 28
      %v1524 = vpop.permute.xlu0 %1523
      %1525 = vrot.lane.b32.xlu0 %v645, 28
      %v1526 = vpop.permute.xlu0 %1525
      %1527 = vrot.lane.b32.xlu0 %v646, 28
      %v1528 = vpop.permute.xlu0 %1527
      %1529 = vrot.lane.b32.xlu0 %v647, 28
      %v1530 = vpop.permute.xlu0 %1529
      %1531 = vrot.lane.b32.xlu0 %v648, 28
      %v1532 = vpop.permute.xlu0 %1531
      %1533 = vrot.lane.b32.xlu0 %v649, 28
      %v1534 = vpop.permute.xlu0 %1533
      %1535 = vrot.lane.b32.xlu0 %v650, 28
      %v1536 = vpop.permute.xlu0 %1535
      %1537 = vrot.lane.b32.xlu0 %v651, 28
      %v1538 = vpop.permute.xlu0 %1537
      %1539 = vrot.lane.b32.xlu0 %v652, 28
      %v1540 = vpop.permute.xlu0 %1539
      %1541 = vrot.lane.b32.xlu0 %v653, 28
      %v1542 = vpop.permute.xlu0 %1541
      %1543 = vrot.lane.b32.xlu0 %v654, 28
      %v1544 = vpop.permute.xlu0 %1543
      %1545 = vrot.lane.b32.xlu0 %v655, 28
      %v1546 = vpop.permute.xlu0 %1545
      %1547 = vrot.lane.b32.xlu0 %v656, 28
      %v1548 = vpop.permute.xlu0 %1547
      %1549 = vrot.lane.b32.xlu0 %v657, 28
      %v1550 = vpop.permute.xlu0 %1549
      %1551 = vrot.lane.b32.xlu0 %v658, 28
      %v1552 = vpop.permute.xlu0 %1551
      %1553 = vrot.lane.b32.xlu0 %v659, 28
      %v1554 = vpop.permute.xlu0 %1553
      %1555 = vrot.lane.b32.xlu0 %v660, 28
      %v1556 = vpop.permute.xlu0 %1555
      %1621 = vrot.lane.b32.xlu0 %v661, 32
      %v1622 = vpop.permute.xlu0 %1621
      %1623 = vrot.lane.b32.xlu0 %v662, 32
      %v1624 = vpop.permute.xlu0 %1623
      %1625 = vrot.lane.b32.xlu0 %v663, 32
      %v1626 = vpop.permute.xlu0 %1625
      %1627 = vrot.lane.b32.xlu0 %v664, 32
      %v1628 = vpop.permute.xlu0 %1627
      %1629 = vrot.lane.b32.xlu0 %v665, 32
      %v1630 = vpop.permute.xlu0 %1629
      %1631 = vrot.lane.b32.xlu0 %v666, 32
      %v1632 = vpop.permute.xlu0 %1631
      %1633 = vrot.lane.b32.xlu0 %v667, 32
      %v1634 = vpop.permute.xlu0 %1633
      %1635 = vrot.lane.b32.xlu0 %v668, 32
      %v1636 = vpop.permute.xlu0 %1635
      %1637 = vrot.lane.b32.xlu0 %v669, 32
      %v1638 = vpop.permute.xlu0 %1637
      %1639 = vrot.lane.b32.xlu0 %v670, 32
      %v1640 = vpop.permute.xlu0 %1639
      %1641 = vrot.lane.b32.xlu0 %v671, 32
      %v1642 = vpop.permute.xlu0 %1641
      %1643 = vrot.lane.b32.xlu0 %v672, 32
      %v1644 = vpop.permute.xlu0 %1643
      %1645 = vrot.lane.b32.xlu0 %v673, 32
      %v1646 = vpop.permute.xlu0 %1645
      %1647 = vrot.lane.b32.xlu0 %v674, 32
      %v1648 = vpop.permute.xlu0 %1647
      %1649 = vrot.lane.b32.xlu0 %v675, 32
      %v1650 = vpop.permute.xlu0 %1649
      %1651 = vrot.lane.b32.xlu0 %v676, 32
      %v1652 = vpop.permute.xlu0 %1651
      %1653 = vrot.lane.b32.xlu0 %v677, 32
      %v1654 = vpop.permute.xlu0 %1653
      %1655 = vrot.lane.b32.xlu0 %v678, 32
      %v1656 = vpop.permute.xlu0 %1655
      %1657 = vrot.lane.b32.xlu0 %v679, 32
      %v1658 = vpop.permute.xlu0 %1657
      %1659 = vrot.lane.b32.xlu0 %v680, 32
      %v1660 = vpop.permute.xlu0 %1659
      %1661 = vrot.lane.b32.xlu0 %v681, 32
      %v1662 = vpop.permute.xlu0 %1661
      %1663 = vrot.lane.b32.xlu0 %v682, 32
      %v1664 = vpop.permute.xlu0 %1663
      %1665 = vrot.lane.b32.xlu0 %v683, 32
      %v1666 = vpop.permute.xlu0 %1665
      %1667 = vrot.lane.b32.xlu0 %v684, 32
      %v1668 = vpop.permute.xlu0 %1667
      %1669 = vrot.lane.b32.xlu0 %v685, 32
      %v1670 = vpop.permute.xlu0 %1669
      %1671 = vrot.lane.b32.xlu0 %v686, 32
      %v1672 = vpop.permute.xlu0 %1671
      %1673 = vrot.lane.b32.xlu0 %v687, 32
      %v1674 = vpop.permute.xlu0 %1673
      %1675 = vrot.lane.b32.xlu0 %v688, 32
      %v1676 = vpop.permute.xlu0 %1675
      %1677 = vrot.lane.b32.xlu0 %v689, 32
      %v1678 = vpop.permute.xlu0 %1677
      %1679 = vrot.lane.b32.xlu0 %v690, 32
      %v1680 = vpop.permute.xlu0 %1679
      %1681 = vrot.lane.b32.xlu0 %v691, 32
      %v1682 = vpop.permute.xlu0 %1681
      %1683 = vrot.lane.b32.xlu0 %v692, 32
      %v1684 = vpop.permute.xlu0 %1683
      %v1717 = vsel %vm340, %v404, %v726
      %v1718 = vsel %vm340, %v405, %v728
      %v1719 = vsel %vm340, %v406, %v730
      %v1720 = vsel %vm340, %v407, %v732
      %v1721 = vsel %vm340, %v408, %v734
      %v1722 = vsel %vm340, %v409, %v736
      %v1723 = vsel %vm340, %v410, %v738
      %v1724 = vsel %vm340, %v411, %v740
      %v1725 = vsel %vm340, %v412, %v742
      %v1726 = vsel %vm340, %v413, %v744
      %v1727 = vsel %vm340, %v414, %v746
      %v1728 = vsel %vm340, %v415, %v748
      %v1729 = vsel %vm340, %v416, %v750
      %v1730 = vsel %vm340, %v417, %v752
      %v1731 = vsel %vm340, %v418, %v754
      %v1732 = vsel %vm340, %v419, %v756
      %v1733 = vsel %vm340, %v420, %v758
      %v1734 = vsel %vm340, %v421, %v760
      %v1735 = vsel %vm340, %v422, %v762
      %v1736 = vsel %vm340, %v423, %v764
      %v1737 = vsel %vm340, %v424, %v766
      %v1738 = vsel %vm340, %v425, %v768
      %v1739 = vsel %vm340, %v426, %v770
      %v1740 = vsel %vm340, %v427, %v772
      %v1741 = vsel %vm340, %v428, %v774
      %v1742 = vsel %vm340, %v429, %v776
      %v1743 = vsel %vm340, %v430, %v778
      %v1744 = vsel %vm340, %v431, %v780
      %v1745 = vsel %vm340, %v432, %v782
      %v1746 = vsel %vm340, %v433, %v784
      %v1747 = vsel %vm340, %v434, %v786
      %v1748 = vsel %vm340, %v435, %v788
      %vm1749 = vcmask 64512
      %v1750 = vsel %vm1749, %v1717, %v854
      %v1751 = vsel %vm1749, %v1718, %v856
      %v1752 = vsel %vm1749, %v1719, %v858
      %v1753 = vsel %vm1749, %v1720, %v860
      %v1754 = vsel %vm1749, %v1721, %v862
      %v1755 = vsel %vm1749, %v1722, %v864
      %v1756 = vsel %vm1749, %v1723, %v866
      %v1757 = vsel %vm1749, %v1724, %v868
      %v1758 = vsel %vm1749, %v1725, %v870
      %v1759 = vsel %vm1749, %v1726, %v872
      %v1760 = vsel %vm1749, %v1727, %v874
      %v1761 = vsel %vm1749, %v1728, %v876
      %v1762 = vsel %vm1749, %v1729, %v878
      %v1763 = vsel %vm1749, %v1730, %v880
      %v1764 = vsel %vm1749, %v1731, %v882
      %v1765 = vsel %vm1749, %v1732, %v884
      %v1766 = vsel %vm1749, %v1733, %v886
      %v1767 = vsel %vm1749, %v1734, %v888
      %v1768 = vsel %vm1749, %v1735, %v890
      %v1769 = vsel %vm1749, %v1736, %v892
      %v1770 = vsel %vm1749, %v1737, %v894
      %v1771 = vsel %vm1749, %v1738, %v896
      %v1772 = vsel %vm1749, %v1739, %v898
      %v1773 = vsel %vm1749, %v1740, %v900
      %v1774 = vsel %vm1749, %v1741, %v902
      %v1775 = vsel %vm1749, %v1742, %v904
      %v1776 = vsel %vm1749, %v1743, %v906
      %v1777 = vsel %vm1749, %v1744, %v908
      %v1778 = vsel %vm1749, %v1745, %v910
      %v1779 = vsel %vm1749, %v1746, %v912
      %v1780 = vsel %vm1749, %v1747, %v914
      %v1781 = vsel %vm1749, %v1748, %v916
      %vm1782 = vcmask 97280
      %v1783 = vsel %vm1782, %v1750, %v982
      %v1784 = vsel %vm1782, %v1751, %v984
      %v1785 = vsel %vm1782, %v1752, %v986
      %v1786 = vsel %vm1782, %v1753, %v988
      %v1787 = vsel %vm1782, %v1754, %v990
      %v1788 = vsel %vm1782, %v1755, %v992
      %v1789 = vsel %vm1782, %v1756, %v994
      %v1790 = vsel %vm1782, %v1757, %v996
      %v1791 = vsel %vm1782, %v1758, %v998
      %v1792 = vsel %vm1782, %v1759, %v1000
      %v1793 = vsel %vm1782, %v1760, %v1002
      %v1794 = vsel %vm1782, %v1761, %v1004
      %v1795 = vsel %vm1782, %v1762, %v1006
      %v1796 = vsel %vm1782, %v1763, %v1008
      %v1797 = vsel %vm1782, %v1764, %v1010
      %v1798 = vsel %vm1782, %v1765, %v1012
      %v1799 = vsel %vm1782, %v1766, %v1014
      %v1800 = vsel %vm1782, %v1767, %v1016
      %v1801 = vsel %vm1782, %v1768, %v1018
      %v1802 = vsel %vm1782, %v1769, %v1020
      %v1803 = vsel %vm1782, %v1770, %v1022
      %v1804 = vsel %vm1782, %v1771, %v1024
      %v1805 = vsel %vm1782, %v1772, %v1026
      %v1806 = vsel %vm1782, %v1773, %v1028
      %v1807 = vsel %vm1782, %v1774, %v1030
      %v1808 = vsel %vm1782, %v1775, %v1032
      %v1809 = vsel %vm1782, %v1776, %v1034
      %v1810 = vsel %vm1782, %v1777, %v1036
      %v1811 = vsel %vm1782, %v1778, %v1038
      %v1812 = vsel %vm1782, %v1779, %v1040
      %v1813 = vsel %vm1782, %v1780, %v1042
      %v1814 = vsel %vm1782, %v1781, %v1044
      %vm1815 = vcmask 130048
      %v1816 = vsel %vm1815, %v1783, %v1110
      %v1817 = vsel %vm1815, %v1784, %v1112
      %v1818 = vsel %vm1815, %v1785, %v1114
      %v1819 = vsel %vm1815, %v1786, %v1116
      %v1820 = vsel %vm1815, %v1787, %v1118
      %v1821 = vsel %vm1815, %v1788, %v1120
      %v1822 = vsel %vm1815, %v1789, %v1122
      %v1823 = vsel %vm1815, %v1790, %v1124
      %v1824 = vsel %vm1815, %v1791, %v1126
      %v1825 = vsel %vm1815, %v1792, %v1128
      %v1826 = vsel %vm1815, %v1793, %v1130
      %v1827 = vsel %vm1815, %v1794, %v1132
      %v1828 = vsel %vm1815, %v1795, %v1134
      %v1829 = vsel %vm1815, %v1796, %v1136
      %v1830 = vsel %vm1815, %v1797, %v1138
      %v1831 = vsel %vm1815, %v1798, %v1140
      %v1832 = vsel %vm1815, %v1799, %v1142
      %v1833 = vsel %vm1815, %v1800, %v1144
      %v1834 = vsel %vm1815, %v1801, %v1146
      %v1835 = vsel %vm1815, %v1802, %v1148
      %v1836 = vsel %vm1815, %v1803, %v1150
      %v1837 = vsel %vm1815, %v1804, %v1152
      %v1838 = vsel %vm1815, %v1805, %v1154
      %v1839 = vsel %vm1815, %v1806, %v1156
      %v1840 = vsel %vm1815, %v1807, %v1158
      %v1841 = vsel %vm1815, %v1808, %v1160
      %v1842 = vsel %vm1815, %v1809, %v1162
      %v1843 = vsel %vm1815, %v1810, %v1164
      %v1844 = vsel %vm1815, %v1811, %v1166
      %v1845 = vsel %vm1815, %v1812, %v1168
      %v1846 = vsel %vm1815, %v1813, %v1170
      %v1847 = vsel %vm1815, %v1814, %v1172
      %vm1848 = vcmask 162816
      %v1849 = vsel %vm1848, %v1816, %v1238
      %v1850 = vsel %vm1848, %v1817, %v1240
      %v1851 = vsel %vm1848, %v1818, %v1242
      %v1852 = vsel %vm1848, %v1819, %v1244
      %v1853 = vsel %vm1848, %v1820, %v1246
      %v1854 = vsel %vm1848, %v1821, %v1248
      %v1855 = vsel %vm1848, %v1822, %v1250
      %v1856 = vsel %vm1848, %v1823, %v1252
      %v1857 = vsel %vm1848, %v1824, %v1254
      %v1858 = vsel %vm1848, %v1825, %v1256
      %v1859 = vsel %vm1848, %v1826, %v1258
      %v1860 = vsel %vm1848, %v1827, %v1260
      %v1861 = vsel %vm1848, %v1828, %v1262
      %v1862 = vsel %vm1848, %v1829, %v1264
      %v1863 = vsel %vm1848, %v1830, %v1266
      %v1864 = vsel %vm1848, %v1831, %v1268
      %v1865 = vsel %vm1848, %v1832, %v1270
      %v1866 = vsel %vm1848, %v1833, %v1272
      %v1867 = vsel %vm1848, %v1834, %v1274
      %v1868 = vsel %vm1848, %v1835, %v1276
      %v1869 = vsel %vm1848, %v1836, %v1278
      %v1870 = vsel %vm1848, %v1837, %v1280
      %v1871 = vsel %vm1848, %v1838, %v1282
      %v1872 = vsel %vm1848, %v1839, %v1284
      %v1873 = vsel %vm1848, %v1840, %v1286
      %v1874 = vsel %vm1848, %v1841, %v1288
      %v1875 = vsel %vm1848, %v1842, %v1290
      %v1876 = vsel %vm1848, %v1843, %v1292
      %v1877 = vsel %vm1848, %v1844, %v1294
      %v1878 = vsel %vm1848, %v1845, %v1296
      %v1879 = vsel %vm1848, %v1846, %v1298
      %v1880 = vsel %vm1848, %v1847, %v1300
      %vm1881 = vcmask 195584
      %v1882 = vsel %vm1881, %v1849, %v1366
      %v1883 = vsel %vm1881, %v1850, %v1368
      %v1884 = vsel %vm1881, %v1851, %v1370
      %v1885 = vsel %vm1881, %v1852, %v1372
      %v1886 = vsel %vm1881, %v1853, %v1374
      %v1887 = vsel %vm1881, %v1854, %v1376
      %v1888 = vsel %vm1881, %v1855, %v1378
      %v1889 = vsel %vm1881, %v1856, %v1380
      %v1890 = vsel %vm1881, %v1857, %v1382
      %v1891 = vsel %vm1881, %v1858, %v1384
      %v1892 = vsel %vm1881, %v1859, %v1386
      %v1893 = vsel %vm1881, %v1860, %v1388
      %v1894 = vsel %vm1881, %v1861, %v1390
      %v1895 = vsel %vm1881, %v1862, %v1392
      %v1896 = vsel %vm1881, %v1863, %v1394
      %v1897 = vsel %vm1881, %v1864, %v1396
      %v1898 = vsel %vm1881, %v1865, %v1398
      %v1899 = vsel %vm1881, %v1866, %v1400
      %v1900 = vsel %vm1881, %v1867, %v1402
      %v1901 = vsel %vm1881, %v1868, %v1404
      %v1902 = vsel %vm1881, %v1869, %v1406
      %v1903 = vsel %vm1881, %v1870, %v1408
      %v1904 = vsel %vm1881, %v1871, %v1410
      %v1905 = vsel %vm1881, %v1872, %v1412
      %v1906 = vsel %vm1881, %v1873, %v1414
      %v1907 = vsel %vm1881, %v1874, %v1416
      %v1908 = vsel %vm1881, %v1875, %v1418
      %v1909 = vsel %vm1881, %v1876, %v1420
      %v1910 = vsel %vm1881, %v1877, %v1422
      %v1911 = vsel %vm1881, %v1878, %v1424
      %v1912 = vsel %vm1881, %v1879, %v1426
      %v1913 = vsel %vm1881, %v1880, %v1428
      %vm1914 = vcmask 228352
      %v1915 = vsel %vm1914, %v1882, %v1494
      %v1916 = vsel %vm1914, %v1883, %v1496
      %v1917 = vsel %vm1914, %v1884, %v1498
      %v1918 = vsel %vm1914, %v1885, %v1500
      %v1919 = vsel %vm1914, %v1886, %v1502
      %v1920 = vsel %vm1914, %v1887, %v1504
      %v1921 = vsel %vm1914, %v1888, %v1506
      %v1922 = vsel %vm1914, %v1889, %v1508
      %v1923 = vsel %vm1914, %v1890, %v1510
      %v1924 = vsel %vm1914, %v1891, %v1512
      %v1925 = vsel %vm1914, %v1892, %v1514
      %v1926 = vsel %vm1914, %v1893, %v1516
      %v1927 = vsel %vm1914, %v1894, %v1518
      %v1928 = vsel %vm1914, %v1895, %v1520
      %v1929 = vsel %vm1914, %v1896, %v1522
      %v1930 = vsel %vm1914, %v1897, %v1524
      %v1931 = vsel %vm1914, %v1898, %v1526
      %v1932 = vsel %vm1914, %v1899, %v1528
      %v1933 = vsel %vm1914, %v1900, %v1530
      %v1934 = vsel %vm1914, %v1901, %v1532
      %v1935 = vsel %vm1914, %v1902, %v1534
      %v1936 = vsel %vm1914, %v1903, %v1536
      %v1937 = vsel %vm1914, %v1904, %v1538
      %v1938 = vsel %vm1914, %v1905, %v1540
      %v1939 = vsel %vm1914, %v1906, %v1542
      %v1940 = vsel %vm1914, %v1907, %v1544
      %v1941 = vsel %vm1914, %v1908, %v1546
      %v1942 = vsel %vm1914, %v1909, %v1548
      %v1943 = vsel %vm1914, %v1910, %v1550
      %v1944 = vsel %vm1914, %v1911, %v1552
      %v1945 = vsel %vm1914, %v1912, %v1554
      %v1946 = vsel %vm1914, %v1913, %v1556
      %vm1947 = vcmask 261120
      %v1948 = vsel %vm1947, %v1915, %v1622
      %v1949 = vsel %vm1947, %v1916, %v1624
      %v1950 = vsel %vm1947, %v1917, %v1626
      %v1951 = vsel %vm1947, %v1918, %v1628
      %v1952 = vsel %vm1947, %v1919, %v1630
      %v1953 = vsel %vm1947, %v1920, %v1632
      %v1954 = vsel %vm1947, %v1921, %v1634
      %v1955 = vsel %vm1947, %v1922, %v1636
      %v1956 = vsel %vm1947, %v1923, %v1638
      %v1957 = vsel %vm1947, %v1924, %v1640
      %v1958 = vsel %vm1947, %v1925, %v1642
      %v1959 = vsel %vm1947, %v1926, %v1644
      %v1960 = vsel %vm1947, %v1927, %v1646
      %v1961 = vsel %vm1947, %v1928, %v1648
      %v1962 = vsel %vm1947, %v1929, %v1650
      %v1963 = vsel %vm1947, %v1930, %v1652
      %v1964 = vsel %vm1947, %v1931, %v1654
      %v1965 = vsel %vm1947, %v1932, %v1656
      %v1966 = vsel %vm1947, %v1933, %v1658
      %v1967 = vsel %vm1947, %v1934, %v1660
      %v1968 = vsel %vm1947, %v1935, %v1662
      %v1969 = vsel %vm1947, %v1936, %v1664
      %v1970 = vsel %vm1947, %v1937, %v1666
      %v1971 = vsel %vm1947, %v1938, %v1668
      %v1972 = vsel %vm1947, %v1939, %v1670
      %v1973 = vsel %vm1947, %v1940, %v1672
      %v1974 = vsel %vm1947, %v1941, %v1674
      %v1975 = vsel %vm1947, %v1942, %v1676
      %v1976 = vsel %vm1947, %v1943, %v1678
      %v1977 = vsel %vm1947, %v1944, %v1680
      %v1978 = vsel %vm1947, %v1945, %v1682
      %v1979 = vsel %vm1947, %v1946, %v1684
      %v1980 = vld [vmem:[%s3] sm:$0xff]
      %v1981 = vld [vmem:[%s3 + $0x8] sm:$0xff]
      %v1982 = vld [vmem:[%s3 + $0x10] sm:$0xff]
      %v1983 = vld [vmem:[%s3 + $0x18] sm:$0xff]
      %v1984 = vld [vmem:[%s3 + $0x20] sm:$0xf]
      %vm1985 = vcmask 293888
      %v1987 = vsel %vm1985, %v1948, 0
      %v1990 = vsel %vm1985, %v1949, 0
      %v1993 = vsel %vm1985, %v1950, 0
      %v1996 = vsel %vm1985, %v1951, 0
      %v1999 = vsel %vm1985, %v1952, 0
      %v2002 = vsel %vm1985, %v1953, 0
      %v2005 = vsel %vm1985, %v1954, 0
      %v2008 = vsel %vm1985, %v1955, 0
      %v2011 = vsel %vm1985, %v1956, 0
      %v2014 = vsel %vm1985, %v1957, 0
      %v2017 = vsel %vm1985, %v1958, 0
      %v2020 = vsel %vm1985, %v1959, 0
      %v2023 = vsel %vm1985, %v1960, 0
      %v2026 = vsel %vm1985, %v1961, 0
      %v2029 = vsel %vm1985, %v1962, 0
      %v2032 = vsel %vm1985, %v1963, 0
      %v2035 = vsel %vm1985, %v1964, 0
      %v2038 = vsel %vm1985, %v1965, 0
      %v2041 = vsel %vm1985, %v1966, 0
      %v2044 = vsel %vm1985, %v1967, 0
      %v2047 = vsel %vm1985, %v1968, 0
      %v2050 = vsel %vm1985, %v1969, 0
      %v2053 = vsel %vm1985, %v1970, 0
      %v2056 = vsel %vm1985, %v1971, 0
      %v2059 = vsel %vm1985, %v1972, 0
      %v2062 = vsel %vm1985, %v1973, 0
      %v2065 = vsel %vm1985, %v1974, 0
      %v2068 = vsel %vm1985, %v1975, 0
      %v2071 = vsel %vm1985, %v1976, 0
      %v2074 = vsel %vm1985, %v1977, 0
      %v2077 = vsel %vm1985, %v1978, 0
      %v2080 = vsel %vm1985, %v1979, 0
      %vm2082 = vcmask 1043456
      %v2084 = vsel %vm2082, %v1984, 0
      %2086 = vmatpush.msra.mxu0 0.0
      %2087 = vmatpush.msra.mxu0 0.0
      %2088 = vmatpush.msra.mxu0 0.0
      %2089 = vmatpush.msra.mxu0 0.0
      %2090 = vmatpush.msra.mxu0 0.0
      %2091 = vmatpush.msra.mxu0 0.0
      %2092 = vmatpush.msra.mxu0 0.0
      %2093 = vmatpush.msra.mxu0 0.0
      %2094 = vmatpush.msra.mxu0 0.0
      %2095 = vmatpush.msra.mxu0 0.0
      %2096 = vmatpush.msra.mxu0 0.0
      %2097 = vmatpush.msra.mxu0 %v2084
      %2098 = vmatpush.msra.mxu0 %v1983
      %2099 = vmatpush.msra.mxu0 %v1982
      %2100 = vmatpush.msra.mxu0 %v1981
      %2101 = vmatpush.msra.mxu0 %v1980
      %2102 = vmatmul.f32.gmra.mxu0 %v1987
      %v2103 = vpop.f32.mrf.mxu0
      %v2104 = vadd.f32 0.0, %v2103
      %2105 = vmatmul.f32.gmra.mxu0 %v1990
      %v2106 = vpop.f32.mrf.mxu0
      %v2107 = vadd.f32 0.0, %v2106
      %2108 = vmatmul.f32.gmra.mxu0 %v1993
      %v2109 = vpop.f32.mrf.mxu0
      %v2110 = vadd.f32 0.0, %v2109
      %2111 = vmatmul.f32.gmra.mxu0 %v1996
      %v2112 = vpop.f32.mrf.mxu0
      %v2113 = vadd.f32 0.0, %v2112
      %2114 = vmatmul.f32.gmra.mxu0 %v1999
      %v2115 = vpop.f32.mrf.mxu0
      %v2116 = vadd.f32 0.0, %v2115
      %2117 = vmatmul.f32.gmra.mxu0 %v2002
      %v2118 = vpop.f32.mrf.mxu0
      %v2119 = vadd.f32 0.0, %v2118
      %2120 = vmatmul.f32.gmra.mxu0 %v2005
      %v2121 = vpop.f32.mrf.mxu0
      %v2122 = vadd.f32 0.0, %v2121
      %2123 = vmatmul.f32.gmra.mxu0 %v2008
      %v2124 = vpop.f32.mrf.mxu0
      %v2125 = vadd.f32 0.0, %v2124
      %2126 = vmatmul.f32.gmra.mxu0 %v2011
      %v2127 = vpop.f32.mrf.mxu0
      %v2128 = vadd.f32 0.0, %v2127
      %2129 = vmatmul.f32.gmra.mxu0 %v2014
      %v2130 = vpop.f32.mrf.mxu0
      %v2131 = vadd.f32 0.0, %v2130
      %2132 = vmatmul.f32.gmra.mxu0 %v2017
      %v2133 = vpop.f32.mrf.mxu0
      %v2134 = vadd.f32 0.0, %v2133
      %2135 = vmatmul.f32.gmra.mxu0 %v2020
      %v2136 = vpop.f32.mrf.mxu0
      %v2137 = vadd.f32 0.0, %v2136
      %2138 = vmatmul.f32.gmra.mxu0 %v2023
      %v2139 = vpop.f32.mrf.mxu0
      %v2140 = vadd.f32 0.0, %v2139
      %2141 = vmatmul.f32.gmra.mxu0 %v2026
      %v2142 = vpop.f32.mrf.mxu0
      %v2143 = vadd.f32 0.0, %v2142
      %2144 = vmatmul.f32.gmra.mxu0 %v2029
      %v2145 = vpop.f32.mrf.mxu0
      %v2146 = vadd.f32 0.0, %v2145
      %2147 = vmatmul.f32.gmra.mxu0 %v2032
      %v2148 = vpop.f32.mrf.mxu0
      %v2149 = vadd.f32 0.0, %v2148
      %2150 = vmatmul.f32.gmra.mxu0 %v2035
      %v2151 = vpop.f32.mrf.mxu0
      %v2152 = vadd.f32 0.0, %v2151
      %2153 = vmatmul.f32.gmra.mxu0 %v2038
      %v2154 = vpop.f32.mrf.mxu0
      %v2155 = vadd.f32 0.0, %v2154
      %2156 = vmatmul.f32.gmra.mxu0 %v2041
      %v2157 = vpop.f32.mrf.mxu0
      %v2158 = vadd.f32 0.0, %v2157
      %2159 = vmatmul.f32.gmra.mxu0 %v2044
      %v2160 = vpop.f32.mrf.mxu0
      %v2161 = vadd.f32 0.0, %v2160
      %2162 = vmatmul.f32.gmra.mxu0 %v2047
      %v2163 = vpop.f32.mrf.mxu0
      %v2164 = vadd.f32 0.0, %v2163
      %2165 = vmatmul.f32.gmra.mxu0 %v2050
      %v2166 = vpop.f32.mrf.mxu0
      %v2167 = vadd.f32 0.0, %v2166
      %2168 = vmatmul.f32.gmra.mxu0 %v2053
      %v2169 = vpop.f32.mrf.mxu0
      %v2170 = vadd.f32 0.0, %v2169
      %2171 = vmatmul.f32.gmra.mxu0 %v2056
      %v2172 = vpop.f32.mrf.mxu0
      %v2173 = vadd.f32 0.0, %v2172
      %2174 = vmatmul.f32.gmra.mxu0 %v2059
      %v2175 = vpop.f32.mrf.mxu0
      %v2176 = vadd.f32 0.0, %v2175
      %2177 = vmatmul.f32.gmra.mxu0 %v2062
      %v2178 = vpop.f32.mrf.mxu0
      %v2179 = vadd.f32 0.0, %v2178
      %2180 = vmatmul.f32.gmra.mxu0 %v2065
      %v2181 = vpop.f32.mrf.mxu0
      %v2182 = vadd.f32 0.0, %v2181
      %2183 = vmatmul.f32.gmra.mxu0 %v2068
      %v2184 = vpop.f32.mrf.mxu0
      %v2185 = vadd.f32 0.0, %v2184
      %2186 = vmatmul.f32.gmra.mxu0 %v2071
      %v2187 = vpop.f32.mrf.mxu0
      %v2188 = vadd.f32 0.0, %v2187
      %2189 = vmatmul.f32.gmra.mxu0 %v2074
      %v2190 = vpop.f32.mrf.mxu0
      %v2191 = vadd.f32 0.0, %v2190
      %2192 = vmatmul.f32.gmra.mxu0 %v2077
      %v2193 = vpop.f32.mrf.mxu0
      %v2194 = vadd.f32 0.0, %v2193
      %2195 = vmatmul.f32.gmra.mxu0 %v2080
      %v2196 = vpop.f32.mrf.mxu0
      %v2197 = vadd.f32 0.0, %v2196
      %2198 = vdwg.mxu0
      %v2199 = vadd.f32 %v2104, %v2107
      %v2200 = vadd.f32 %v2199, %v2110
      %v2201 = vadd.f32 %v2200, %v2113
      %v2202 = vadd.f32 %v2201, %v2116
      %v2203 = vadd.f32 %v2202, %v2119
      %v2204 = vadd.f32 %v2203, %v2122
      %v2205 = vadd.f32 %v2204, %v2125
      %v2206 = vadd.f32 %v2205, %v2128
      %v2207 = vadd.f32 %v2206, %v2131
      %v2208 = vadd.f32 %v2207, %v2134
      %v2209 = vadd.f32 %v2208, %v2137
      %v2210 = vadd.f32 %v2209, %v2140
      %v2211 = vadd.f32 %v2210, %v2143
      %v2212 = vadd.f32 %v2211, %v2146
      %v2213 = vadd.f32 %v2212, %v2149
      %v2214 = vadd.f32 %v2213, %v2152
      %v2215 = vadd.f32 %v2214, %v2155
      %v2216 = vadd.f32 %v2215, %v2158
      %v2217 = vadd.f32 %v2216, %v2161
      %v2218 = vadd.f32 %v2217, %v2164
      %v2219 = vadd.f32 %v2218, %v2167
      %v2220 = vadd.f32 %v2219, %v2170
      %v2221 = vadd.f32 %v2220, %v2173
      %v2222 = vadd.f32 %v2221, %v2176
      %v2223 = vadd.f32 %v2222, %v2179
      %v2224 = vadd.f32 %v2223, %v2182
      %v2225 = vadd.f32 %v2224, %v2185
      %v2226 = vadd.f32 %v2225, %v2188
      %v2227 = vadd.f32 %v2226, %v2191
      %v2228 = vadd.f32 %v2227, %v2194
      %v2229 = vadd.f32 %v2228, %v2197
      %v2230 = vrot.slane %v2229, 4
      %v2231 = vadd.f32 %v2229, %v2230
      %v2232 = vrot.slane %v2231, 2
      %v2233 = vadd.f32 %v2231, %v2232
      %v2234 = vrot.slane %v2233, 1
      %v2235 = vadd.f32 %v2233, %v2234
      %v2236 = vmul.f32 %v2104, %v2104
      %v2237 = vmul.f32 %v2107, %v2107
      %v2238 = vmul.f32 %v2110, %v2110
      %v2239 = vmul.f32 %v2113, %v2113
      %v2240 = vmul.f32 %v2116, %v2116
      %v2241 = vmul.f32 %v2119, %v2119
      %v2242 = vmul.f32 %v2122, %v2122
      %v2243 = vmul.f32 %v2125, %v2125
      %v2244 = vmul.f32 %v2128, %v2128
      %v2245 = vmul.f32 %v2131, %v2131
      %v2246 = vmul.f32 %v2134, %v2134
      %v2247 = vmul.f32 %v2137, %v2137
      %v2248 = vmul.f32 %v2140, %v2140
      %v2249 = vmul.f32 %v2143, %v2143
      %v2250 = vmul.f32 %v2146, %v2146
      %v2251 = vmul.f32 %v2149, %v2149
      %v2252 = vmul.f32 %v2152, %v2152
      %v2253 = vmul.f32 %v2155, %v2155
      %v2254 = vmul.f32 %v2158, %v2158
      %v2255 = vmul.f32 %v2161, %v2161
      %v2256 = vmul.f32 %v2164, %v2164
      %v2257 = vmul.f32 %v2167, %v2167
      %v2258 = vmul.f32 %v2170, %v2170
      %v2259 = vmul.f32 %v2173, %v2173
      %v2260 = vmul.f32 %v2176, %v2176
      %v2261 = vmul.f32 %v2179, %v2179
      %v2262 = vmul.f32 %v2182, %v2182
      %v2263 = vmul.f32 %v2185, %v2185
      %v2264 = vmul.f32 %v2188, %v2188
      %v2265 = vmul.f32 %v2191, %v2191
      %v2266 = vmul.f32 %v2194, %v2194
      %v2267 = vmul.f32 %v2197, %v2197
      %v2268 = vadd.f32 %v2236, %v2237
      %v2269 = vadd.f32 %v2268, %v2238
      %v2270 = vadd.f32 %v2269, %v2239
      %v2271 = vadd.f32 %v2270, %v2240
      %v2272 = vadd.f32 %v2271, %v2241
      %v2273 = vadd.f32 %v2272, %v2242
      %v2274 = vadd.f32 %v2273, %v2243
      %v2275 = vadd.f32 %v2274, %v2244
      %v2276 = vadd.f32 %v2275, %v2245
      %v2277 = vadd.f32 %v2276, %v2246
      %v2278 = vadd.f32 %v2277, %v2247
      %v2279 = vadd.f32 %v2278, %v2248
      %v2280 = vadd.f32 %v2279, %v2249
      %v2281 = vadd.f32 %v2280, %v2250
      %v2282 = vadd.f32 %v2281, %v2251
      %v2283 = vadd.f32 %v2282, %v2252
      %v2284 = vadd.f32 %v2283, %v2253
      %v2285 = vadd.f32 %v2284, %v2254
      %v2286 = vadd.f32 %v2285, %v2255
      %v2287 = vadd.f32 %v2286, %v2256
      %v2288 = vadd.f32 %v2287, %v2257
      %v2289 = vadd.f32 %v2288, %v2258
      %v2290 = vadd.f32 %v2289, %v2259
      %v2291 = vadd.f32 %v2290, %v2260
      %v2292 = vadd.f32 %v2291, %v2261
      %v2293 = vadd.f32 %v2292, %v2262
      %v2294 = vadd.f32 %v2293, %v2263
      %v2295 = vadd.f32 %v2294, %v2264
      %v2296 = vadd.f32 %v2295, %v2265
      %v2297 = vadd.f32 %v2296, %v2266
      %v2298 = vadd.f32 %v2297, %v2267
      %v2299 = vrot.slane %v2298, 4
      %v2300 = vadd.f32 %v2298, %v2299
      %v2301 = vrot.slane %v2300, 2
      %v2302 = vadd.f32 %v2300, %v2301
      %v2303 = vrot.slane %v2302, 1
      %v2304 = vadd.f32 %v2302, %v2303
      %vm2305 = vcmask 1040384
      %v2306 = vsel %vm2305, %v2235, %v2304
      %2307 = vst [vmem:[%s266] sm:$0x3] %v2306
      %2308 = vst [vmem:[%s258] sm:$0xff] %v2104
      %2309 = vst [vmem:[%s258 + $0x8] sm:$0xff] %v2107
      %2310 = vst [vmem:[%s258 + $0x10] sm:$0xff] %v2110
      %2311 = vst [vmem:[%s258 + $0x18] sm:$0xff] %v2113
      %2312 = vst [vmem:[%s258 + $0x20] sm:$0xff] %v2116
      %2313 = vst [vmem:[%s258 + $0x28] sm:$0xff] %v2119
      %2314 = vst [vmem:[%s258 + $0x30] sm:$0xff] %v2122
      %2315 = vst [vmem:[%s258 + $0x38] sm:$0xff] %v2125
      %2316 = vst [vmem:[%s258 + $0x40] sm:$0xff] %v2128
      %2317 = vst [vmem:[%s258 + $0x48] sm:$0xff] %v2131
      %2318 = vst [vmem:[%s258 + $0x50] sm:$0xff] %v2134
      %2319 = vst [vmem:[%s258 + $0x58] sm:$0xff] %v2137
      %2320 = vst [vmem:[%s258 + $0x60] sm:$0xff] %v2140
      %2321 = vst [vmem:[%s258 + $0x68] sm:$0xff] %v2143
      %2322 = vst [vmem:[%s258 + $0x70] sm:$0xff] %v2146
      %2323 = vst [vmem:[%s258 + $0x78] sm:$0xff] %v2149
      %2324 = vst [vmem:[%s258 + $0x80] sm:$0xff] %v2152
      %2325 = vst [vmem:[%s258 + $0x88] sm:$0xff] %v2155
      %2326 = vst [vmem:[%s258 + $0x90] sm:$0xff] %v2158
      %2327 = vst [vmem:[%s258 + $0x98] sm:$0xff] %v2161
      %2328 = vst [vmem:[%s258 + $0xa0] sm:$0xff] %v2164
      %2329 = vst [vmem:[%s258 + $0xa8] sm:$0xff] %v2167
      %2330 = vst [vmem:[%s258 + $0xb0] sm:$0xff] %v2170
      %2331 = vst [vmem:[%s258 + $0xb8] sm:$0xff] %v2173
      %2332 = vst [vmem:[%s258 + $0xc0] sm:$0xff] %v2176
      %2333 = vst [vmem:[%s258 + $0xc8] sm:$0xff] %v2179
      %2334 = vst [vmem:[%s258 + $0xd0] sm:$0xff] %v2182
      %2335 = vst [vmem:[%s258 + $0xd8] sm:$0xff] %v2185
      %2336 = vst [vmem:[%s258 + $0xe0] sm:$0xff] %v2188
      %2337 = vst [vmem:[%s258 + $0xe8] sm:$0xff] %v2191
      %2338 = vst [vmem:[%s258 + $0xf0] sm:$0xff] %v2194
      %2339 = vst [vmem:[%s258 + $0xf8] sm:$0xff] %v2197
      %s2340 = smul.u32 32, %s22
      %p2341 = scmp.lt.s32.totalorder %s21, 1
      %s2342 = scalar_select %p2341, %s21, 1
      %p2343 = scmp.lt.s32.totalorder %s2340, 31
      %s2344 = scalar_select %p2343, %s2340, 31
      %s2345 = smul.addr %s2342, 32
      %s2346 = sadd.s32 %s2344, %s2345
      %s2347 = smul.addr %s2346, 8
      %s2348 = scalar_lea.vmem %s4, %s2347
      %p2349 = scmp.lt.s32.totalorder %s21, 1
      %s2350 = scalar_select %p2349, %s21, 1
      %p2351 = scmp.lt.s32.totalorder %s22, 0
      %s2352 = scalar_select %p2351, %s22, 0
      %s2353 = sadd.s32 %s2352, %s2350
      %s2354 = smul.addr %s2353, 2
      %s2355 = scalar_lea.vmem %s5, %s2354
      // Predicated region
      $region37: #{vggish_conv_block.2} parent=35 // pred_check
        %p2356 = pneg %p138
      $region38: #{vggish_conv_block.2} parent=35 // pred_check_branch
        %2358 = sbr.rel (%p2356) target = $region40
      $region39: #{vggish_conv_block.2} parent=35 // pred_region
        %s2359 = smul.u32 32, %s22
      $region40: #{vggish_conv_block.2} parent=35 // pred_fallthru
        _
      // Predicated region
      $region41: #{vggish_conv_block.2} parent=35 // pred_check
        %p2360 = pneg %p166
      $region42: #{vggish_conv_block.2} parent=35 // pred_check_branch
        %2362 = sbr.rel (%p2360) target = $region44
      $region43: #{vggish_conv_block.2} parent=35 // pred_region
        _
      $region44: #{vggish_conv_block.2} parent=35 // pred_fallthru
        _
    $region36: #{vggish_conv_block.2} parent=5 // pred_fallthru
      _
    %p2363 = scmp.le.s32.totalorder 2, %s12
    // Predicated region
    $region45: #{vggish_conv_block.2} parent=5 // pred_check
      %p2364 = pneg %p2363
    $region46: #{vggish_conv_block.2} parent=5 // pred_check_branch
      %2366 = sbr.rel (%p2364) target = $region48
    $region47: #{vggish_conv_block.2} parent=5 // pred_region
      %s2367 = ssub.s32 %s12, 2
      // Predicated region
      $region49: #{vggish_conv_block.2} parent=47 // pred_check
        %p2368 = pneg %p144
      $region50: #{vggish_conv_block.2} parent=47 // pred_check_branch
        %2370 = sbr.rel (%p2368) target = $region52
      $region51: #{vggish_conv_block.2} parent=47 // pred_region
        %s2371 = smul.u32 32, %s24
        %p2372 = scmp.lt.s32.totalorder %s23, 1
        %s2373 = scalar_select %p2372, %s23, 1
        %p2374 = scmp.lt.s32.totalorder %s2371, 31
        %s2375 = scalar_select %p2374, %s2371, 31
        %s2376 = smul.addr %s2373, 32
        %s2377 = sadd.s32 %s2375, %s2376
        %s2378 = smul.addr %s2377, 8
        %s2379 = scalar_lea.vmem %s4, %s2378
      $region52: #{vggish_conv_block.2} parent=47 // pred_fallthru
        _
      // Predicated region
      $region53: #{vggish_conv_block.2} parent=47 // pred_check
        %p2380 = pneg %p172
      $region54: #{vggish_conv_block.2} parent=47 // pred_check_branch
        %2382 = sbr.rel (%p2380) target = $region56
      $region55: #{vggish_conv_block.2} parent=47 // pred_region
        %p2383 = scmp.lt.s32.totalorder %s23, 1
        %s2384 = scalar_select %p2383, %s23, 1
        %p2385 = scmp.lt.s32.totalorder %s24, 0
        %s2386 = scalar_select %p2385, %s24, 0
        %s2387 = sadd.s32 %s2386, %s2384
        %s2388 = smul.addr %s2387, 2
        %s2389 = scalar_lea.vmem %s5, %s2388
      $region56: #{vggish_conv_block.2} parent=47 // pred_fallthru
        _
    $region48: #{vggish_conv_block.2} parent=5 // pred_fallthru
      _
  $region6: #{vggish_conv_block.2} parent=0 // loop_footer
    %s16 = sadd.s32 1, %s12
  $region7: #{vggish_conv_block.2} parent=0 // loop_footer_branch
    %11 = sbr.rel target = $region3
  $region8: #{vggish_conv_block.2} parent=0 // loop_exit
    _

// kernel: vggish_conv_block.3
$region0: #{vggish_conv_block.3}
  #allocation0 [shape = 'u32[]', space=smem, size = 0x4, offset = 0x4, fixed_abs, tag = 'smem constant byte address 0x4 - core index']
  #allocation1 [shape = 'u32[72,128]{1,0:T(1,128)}', space=vmem, size = 0x9000, scoped, tag = 'internal scratch']
  #allocation2 [shape = 'f32[18,18,128]{2,1,0:T(8,128)}', space=vmem, size = 0x36000, scoped, tag = 'scratch operand']
  %s0 = inlined_call_operand.vmem [shape: f32[2,16,16,128], index: 0, kind: input, shape index: {}]
  %s1 = inlined_call_operand.vmem [shape: f32[1,128], index: 1, kind: input, shape index: {}]
  %s2 = inlined_call_operand.vmem [shape: f32[1,128], index: 2, kind: input, shape index: {}]
  %s3 = inlined_call_operand.vmem [shape: f32[1152,128], index: 3, kind: input, shape index: {}]
  %s4 = inlined_call_operand.vmem [shape: f32[2,256,128], index: 4, kind: output, shape index: {0}]
  %s5 = inlined_call_operand.vmem [shape: f32[2,1,2,128], index: 5, kind: output, shape index: {1}]
  %6 = xla_tuple %s4, %s5
  %s7 = sld [smem:[#allocation0]]
  $region57: #{vggish_conv_block.3} parent=0
    _
  %s9 = ssub.s32 1, %s7
  %s10 = scalar_select 0, %s9, %s7
  loop: start=0, step=1, limit=4
  $region2: #{vggish_conv_block.3} parent=0 // loop_pre_header
    _
  $region3: #{vggish_conv_block.3} parent=0 // loop_header
    %s12 = sphi 0, %s16
    %p13 = scmp.ge.s32.totalorder %s12, 4
    %s19 = sphi 0, %s31
    %s20 = sphi 0, %s27
    %s21 = sphi 0, %s19
    %s22 = sphi 0, %s20
    %s23 = sphi 0, %s21
    %s24 = sphi 0, %s22
    %s34 = sphi 0, %s36
    %s37 = sphi 0, %s34
    %s38 = sphi 0, %s37
    %s54 = sphi 0, %s38
    %s58 = sphi 0, %s58
    %s60 = sphi 0, %s58
    %s61 = sphi 0, %s60
    %s75 = sphi 0, %s61
    %s79 = sphi 0, %s79
    %s81 = sphi 0, %s79
    %s82 = sphi 0, %s81
    %s96 = sphi 0, %s82
    %s100 = sphi 0, %s100
    %s102 = sphi 0, %s100
    %s103 = sphi 0, %s102
    %s117 = sphi 0, %s103
    %s125 = sphi 0, %s127
    %s128 = sphi 0, %s125
    %s129 = sphi 0, %s128
    %s145 = sphi 0, %s129
    %s153 = sphi 0, %s155
    %s156 = sphi 0, %s153
    %s157 = sphi 0, %s156
    %s173 = sphi 0, %s157
  $region4: #{vggish_conv_block.3} parent=0 // loop_header_branch
    %15 = sbr.rel (%p13) target = $region8
  $region5: #{vggish_conv_block.3} parent=0 // loop_body
    %s17 = ssub.s32 %s12, 1
    %s18 = ssub.s32 %s12, 2
    %s25 = sadd.s32 1, %s20
    %p26 = scmp.ge.s32.totalorder %s25, 1
    %s27 = scalar_select %p26, 0, %s25
    %s28 = sadd.s32 1, %s19
    %s29 = scalar_select %p26, %s28, %s19
    %p30 = scmp.ge.s32.totalorder %s29, 2
    %s31 = scalar_select %p30, 0, %s29
    %s32 = ssub.s32 %s19, %s31
    %p33 = scmp.eq.s32.totalorder %s32, 0
    %s35 = sadd.s32 %s34, 1
    %s36 = scalar_select %p33, %s34, %s35
    %p39 = pneg %p33
    %p40 = scmp.eq.s32.totalorder %s12, 1
    %p41 = por %p39, %p40
    %p42 = scmp.ne.s32.totalorder %s34, %s37
    %p43 = scmp.eq.s32.totalorder %s12, 0
    %p44 = por %p42, %p43
    %p45 = scmp.ne.s32.totalorder %s34, %s37
    %p46 = scmp.eq.s32.totalorder %s17, 1
    %p47 = por %p45, %p46
    %p48 = scmp.ne.s32.totalorder %s37, %s38
    %p49 = scmp.eq.s32.totalorder %s17, 0
    %p50 = por %p48, %p49
    %p51 = scmp.ne.s32.totalorder %s37, %s38
    %p52 = scmp.eq.s32.totalorder %s18, 1
    %p53 = por %p51, %p52
    %p55 = scmp.ne.s32.totalorder %s38, %s54
    %p56 = scmp.eq.s32.totalorder %s18, 0
    %p57 = por %p55, %p56
    %s59 = sadd.s32 %s58, 1
    %p62 = scmp.eq.s32.totalorder %s12, 1
    %p63 = scmp.ne.s32.totalorder %s58, %s60
    %p64 = scmp.eq.s32.totalorder %s12, 0
    %p65 = por %p63, %p64
    %p66 = scmp.ne.s32.totalorder %s58, %s60
    %p67 = scmp.eq.s32.totalorder %s17, 1
    %p68 = por %p66, %p67
    %p69 = scmp.ne.s32.totalorder %s60, %s61
    %p70 = scmp.eq.s32.totalorder %s17, 0
    %p71 = por %p69, %p70
    %p72 = scmp.ne.s32.totalorder %s60, %s61
    %p73 = scmp.eq.s32.totalorder %s18, 1
    %p74 = por %p72, %p73
    %p76 = scmp.ne.s32.totalorder %s61, %s75
    %p77 = scmp.eq.s32.totalorder %s18, 0
    %p78 = por %p76, %p77
    %s80 = sadd.s32 %s79, 1
    %p83 = scmp.eq.s32.totalorder %s12, 1
    %p84 = scmp.ne.s32.totalorder %s79, %s81
    %p85 = scmp.eq.s32.totalorder %s12, 0
    %p86 = por %p84, %p85
    %p87 = scmp.ne.s32.totalorder %s79, %s81
    %p88 = scmp.eq.s32.totalorder %s17, 1
    %p89 = por %p87, %p88
    %p90 = scmp.ne.s32.totalorder %s81, %s82
    %p91 = scmp.eq.s32.totalorder %s17, 0
    %p92 = por %p90, %p91
    %p93 = scmp.ne.s32.totalorder %s81, %s82
    %p94 = scmp.eq.s32.totalorder %s18, 1
    %p95 = por %p93, %p94
    %p97 = scmp.ne.s32.totalorder %s82, %s96
    %p98 = scmp.eq.s32.totalorder %s18, 0
    %p99 = por %p97, %p98
    %s101 = sadd.s32 %s100, 1
    %p104 = scmp.eq.s32.totalorder %s12, 1
    %p105 = scmp.ne.s32.totalorder %s100, %s102
    %p106 = scmp.eq.s32.totalorder %s12, 0
    %p107 = por %p105, %p106
    %p108 = scmp.ne.s32.totalorder %s100, %s102
    %p109 = scmp.eq.s32.totalorder %s17, 1
    %p110 = por %p108, %p109
    %p111 = scmp.ne.s32.totalorder %s102, %s103
    %p112 = scmp.eq.s32.totalorder %s17, 0
    %p113 = por %p111, %p112
    %p114 = scmp.ne.s32.totalorder %s102, %s103
    %p115 = scmp.eq.s32.totalorder %s18, 1
    %p116 = por %p114, %p115
    %p118 = scmp.ne.s32.totalorder %s103, %s117
    %p119 = scmp.eq.s32.totalorder %s18, 0
    %p120 = por %p118, %p119
    %s121 = ssub.s32 %s19, %s31
    %s122 = ssub.s32 %s20, %s27
    %s123 = sor.u32 %s121, %s122
    %p124 = scmp.eq.s32.totalorder %s123, 0
    %s126 = sadd.s32 %s125, 1
    %s127 = scalar_select %p124, %s125, %s126
    %p130 = pneg %p124
    %p131 = scmp.eq.s32.totalorder %s12, 1
    %p132 = por %p130, %p131
    %p133 = scmp.ne.s32.totalorder %s125, %s128
    %p134 = scmp.eq.s32.totalorder %s12, 0
    %p135 = por %p133, %p134
    %p136 = scmp.ne.s32.totalorder %s125, %s128
    %p137 = scmp.eq.s32.totalorder %s17, 1
    %p138 = por %p136, %p137
    %p139 = scmp.ne.s32.totalorder %s128, %s129
    %p140 = scmp.eq.s32.totalorder %s17, 0
    %p141 = por %p139, %p140
    %p142 = scmp.ne.s32.totalorder %s128, %s129
    %p143 = scmp.eq.s32.totalorder %s18, 1
    %p144 = por %p142, %p143
    %p146 = scmp.ne.s32.totalorder %s129, %s145
    %p147 = scmp.eq.s32.totalorder %s18, 0
    %p148 = por %p146, %p147
    %s149 = ssub.s32 %s19, %s31
    %s150 = ssub.s32 %s20, %s27
    %s151 = sor.u32 %s149, %s150
    %p152 = scmp.eq.s32.totalorder %s151, 0
    %s154 = sadd.s32 %s153, 1
    %s155 = scalar_select %p152, %s153, %s154
    %p158 = pneg %p152
    %p159 = scmp.eq.s32.totalorder %s12, 1
    %p160 = por %p158, %p159
    %p161 = scmp.ne.s32.totalorder %s153, %s156
    %p162 = scmp.eq.s32.totalorder %s12, 0
    %p163 = por %p161, %p162
    %p164 = scmp.ne.s32.totalorder %s153, %s156
    %p165 = scmp.eq.s32.totalorder %s17, 1
    %p166 = por %p164, %p165
    %p167 = scmp.ne.s32.totalorder %s156, %s157
    %p168 = scmp.eq.s32.totalorder %s17, 0
    %p169 = por %p167, %p168
    %p170 = scmp.ne.s32.totalorder %s156, %s157
    %p171 = scmp.eq.s32.totalorder %s18, 1
    %p172 = por %p170, %p171
    %p174 = scmp.ne.s32.totalorder %s157, %s173
    %p175 = scmp.eq.s32.totalorder %s18, 0
    %p176 = por %p174, %p175
    %p177 = scmp.le.s32.totalorder 1, %s12
    %p178 = scmp.lt.s32.totalorder %s12, 3
    %p179 = pnand %p177, %p178
    %p180 = pneg %p179
    // Predicated region
    $region9: #{vggish_conv_block.3} parent=5 // pred_check
      _
    $region10: #{vggish_conv_block.3} parent=5 // pred_check_branch
      %182 = sbr.rel (%p179) target = $region12
    $region11: #{vggish_conv_block.3} parent=5 // pred_region
      %s183 = ssub.s32 %s12, 1
      // Predicated region
      $region13: #{vggish_conv_block.3} parent=11 // pred_check
        %p184 = pneg %p71
      $region14: #{vggish_conv_block.3} parent=11 // pred_check_branch
        %186 = sbr.rel (%p184) target = $region16
      $region15: #{vggish_conv_block.3} parent=11 // pred_region
        _
      $region16: #{vggish_conv_block.3} parent=11 // pred_fallthru
        _
      // Predicated region
      $region17: #{vggish_conv_block.3} parent=11 // pred_check
        %p187 = pneg %p92
      $region18: #{vggish_conv_block.3} parent=11 // pred_check_branch
        %189 = sbr.rel (%p187) target = $region20
      $region19: #{vggish_conv_block.3} parent=11 // pred_region
        _
      $region20: #{vggish_conv_block.3} parent=11 // pred_fallthru
        _
      // Predicated region
      $region21: #{vggish_conv_block.3} parent=11 // pred_check
        %p190 = pneg %p113
      $region22: #{vggish_conv_block.3} parent=11 // pred_check_branch
        %192 = sbr.rel (%p190) target = $region24
      $region23: #{vggish_conv_block.3} parent=11 // pred_region
        _
      $region24: #{vggish_conv_block.3} parent=11 // pred_fallthru
        _
    $region12: #{vggish_conv_block.3} parent=5 // pred_fallthru
      _
    %p193 = scmp.lt.s32.totalorder %s12, 2
    // Predicated region
    $region25: #{vggish_conv_block.3} parent=5 // pred_check
      %p194 = pneg %p193
    $region26: #{vggish_conv_block.3} parent=5 // pred_check_branch
      %196 = sbr.rel (%p194) target = $region28
    $region27: #{vggish_conv_block.3} parent=5 // pred_region
      // Predicated region
      $region29: #{vggish_conv_block.3} parent=27 // pred_check
        %p197 = pneg %p44
      $region30: #{vggish_conv_block.3} parent=27 // pred_check_branch
        %199 = sbr.rel (%p197) target = $region32
      $region31: #{vggish_conv_block.3} parent=27 // pred_region
        %p200 = scmp.lt.s32.totalorder %s19, 1
        %s201 = scalar_select %p200, %s19, 1
        %s202 = smul.addr %s201, 32
        %s203 = smul.addr %s202, 8
        %s204 = scalar_lea.vmem %s0, %s203
      $region32: #{vggish_conv_block.3} parent=27 // pred_fallthru
        _
    $region28: #{vggish_conv_block.3} parent=5 // pred_fallthru
      _
    %p205 = scmp.le.s32.totalorder 1, %s12
    %p206 = scmp.lt.s32.totalorder %s12, 3
    %p207 = pnand %p205, %p206
    %p208 = pneg %p207
    // Predicated region
    $region33: #{vggish_conv_block.3} parent=5 // pred_check
      _
    $region34: #{vggish_conv_block.3} parent=5 // pred_check_branch
      %210 = sbr.rel (%p207) target = $region36
    $region35: #{vggish_conv_block.3} parent=5 // pred_region
      %s211 = ssub.s32 %s12, 1
      %p212 = scmp.lt.s32.totalorder %s21, 1
      %s213 = scalar_select %p212, %s21, 1
      %s214 = smul.addr %s213, 32
      %s215 = smul.addr %s214, 8
      %s216 = scalar_lea.vmem %s0, %s215
      %p217 = pneg %p50
      %p218 = pneg %p47
      %p219 = pneg %p71
      %p220 = pneg %p68
      %p221 = pneg %p92
      %p222 = pneg %p89
      %p223 = pneg %p113
      %p224 = pneg %p110
      %p225 = pneg %p141
      %p226 = pneg %p138
      %s227 = smul.u32 32, %s22
      %p228 = scmp.lt.s32.totalorder %s21, 1
      %s229 = scalar_select %p228, %s21, 1
      %p230 = scmp.lt.s32.totalorder %s227, 31
      %s231 = scalar_select %p230, %s227, 31
      %s232 = smul.addr %s229, 32
      %s233 = sadd.s32 %s231, %s232
      %s234 = smul.addr %s233, 8
      %s235 = scalar_lea.vmem %s4, %s234
      %p236 = pneg %p169
      %p237 = pneg %p166
      %p238 = scmp.lt.s32.totalorder %s21, 1
      %s239 = scalar_select %p238, %s21, 1
      %p240 = scmp.lt.s32.totalorder %s22, 0
      %s241 = scalar_select %p240, %s22, 0
      %s242 = sadd.s32 %s241, %s239
      %s243 = smul.addr %s242, 2
      %s244 = scalar_lea.vmem %s5, %s243
      %p245 = scmp.lt.s32.totalorder %s21, 1
      %s246 = scalar_select %p245, %s21, 1
      %s247 = smul.addr %s246, 32
      %s248 = smul.addr %s247, 8
      %s249 = scalar_lea.vmem %s0, %s248
      %s250 = smul.u32 32, %s22
      %p251 = scmp.lt.s32.totalorder %s21, 1
      %s252 = scalar_select %p251, %s21, 1
      %p253 = scmp.lt.s32.totalorder %s250, 31
      %s254 = scalar_select %p253, %s250, 31
      %s255 = smul.addr %s252, 32
      %s256 = sadd.s32 %s254, %s255
      %s257 = smul.addr %s256, 8
      %s258 = scalar_lea.vmem %s4, %s257
      %s259 = smul.u32 32, %s22
      %p260 = scmp.lt.s32.totalorder %s21, 1
      %s261 = scalar_select %p260, %s21, 1
      %p262 = scmp.lt.s32.totalorder %s22, 0
      %s263 = scalar_select %p262, %s22, 0
      %s264 = sadd.s32 %s263, %s261
      %s265 = smul.addr %s264, 2
      %s266 = scalar_lea.vmem %s5, %s265
      %s267 = smul.u32 %s22, 16
      %268 = vst [vmem:[#allocation2] sm:$0x1] 0.0
      %269 = vst [vmem:[#allocation2 + $0x18] sm:$0x1] 0.0
      %270 = vst [vmem:[#allocation2 + $0x30] sm:$0x1] 0.0
      %271 = vst [vmem:[#allocation2 + $0x48] sm:$0x1] 0.0
      %272 = vst [vmem:[#allocation2 + $0x60] sm:$0x1] 0.0
      %273 = vst [vmem:[#allocation2 + $0x78] sm:$0x1] 0.0
      %274 = vst [vmem:[#allocation2 + $0x90] sm:$0x1] 0.0
      %275 = vst [vmem:[#allocation2 + $0xa8] sm:$0x1] 0.0
      %276 = vst [vmem:[#allocation2 + $0xc0] sm:$0x1] 0.0
      %277 = vst [vmem:[#allocation2 + $0xd8] sm:$0x1] 0.0
      %278 = vst [vmem:[#allocation2 + $0xf0] sm:$0x1] 0.0
      %279 = vst [vmem:[#allocation2 + $0x108] sm:$0x1] 0.0
      %280 = vst [vmem:[#allocation2 + $0x120] sm:$0x1] 0.0
      %281 = vst [vmem:[#allocation2 + $0x138] sm:$0x1] 0.0
      %282 = vst [vmem:[#allocation2 + $0x150] sm:$0x1] 0.0
      %283 = vst [vmem:[#allocation2 + $0x168] sm:$0x1] 0.0
      %284 = vst [vmem:[#allocation2 + $0x180] sm:$0x1] 0.0
      %285 = vst [vmem:[#allocation2 + $0x198] sm:$0x1] 0.0
      %286 = vst [vmem:[#allocation2 + $0x11] sm:$0x1] 0.0
      %287 = vst [vmem:[#allocation2 + $0x29] sm:$0x1] 0.0
      %288 = vst [vmem:[#allocation2 + $0x41] sm:$0x1] 0.0
      %289 = vst [vmem:[#allocation2 + $0x59] sm:$0x1] 0.0
      %290 = vst [vmem:[#allocation2 + $0x71] sm:$0x1] 0.0
      %291 = vst [vmem:[#allocation2 + $0x89] sm:$0x1] 0.0
      %292 = vst [vmem:[#allocation2 + $0xa1] sm:$0x1] 0.0
      %293 = vst [vmem:[#allocation2 + $0xb9] sm:$0x1] 0.0
      %294 = vst [vmem:[#allocation2 + $0xd1] sm:$0x1] 0.0
      %295 = vst [vmem:[#allocation2 + $0xe9] sm:$0x1] 0.0
      %296 = vst [vmem:[#allocation2 + $0x101] sm:$0x1] 0.0
      %297 = vst [vmem:[#allocation2 + $0x119] sm:$0x1] 0.0
      %298 = vst [vmem:[#allocation2 + $0x131] sm:$0x1] 0.0
      %299 = vst [vmem:[#allocation2 + $0x149] sm:$0x1] 0.0
      %300 = vst [vmem:[#allocation2 + $0x161] sm:$0x1] 0.0
      %301 = vst [vmem:[#allocation2 + $0x179] sm:$0x1] 0.0
      %302 = vst [vmem:[#allocation2 + $0x191] sm:$0x1] 0.0
      %303 = vst [vmem:[#allocation2 + $0x1a9] sm:$0x1] 0.0
      %s304 = smul.u32 %s267, 16
      %s305 = scalar_lea.vmem %s249, %s304
      %v306 = vld [vmem:[%s305] sm:$0xff]
      %v307 = vld [vmem:[%s305 + $0x8] sm:$0xff]
      %v308 = vld [vmem:[%s305 + $0x10] sm:$0xff]
      %v309 = vld [vmem:[%s305 + $0x18] sm:$0xff]
      %v310 = vld [vmem:[%s305 + $0x20] sm:$0xff]
      %v311 = vld [vmem:[%s305 + $0x28] sm:$0xff]
      %v312 = vld [vmem:[%s305 + $0x30] sm:$0xff]
      %v313 = vld [vmem:[%s305 + $0x38] sm:$0xff]
      %v314 = vld [vmem:[%s305 + $0x40] sm:$0xff]
      %v315 = vld [vmem:[%s305 + $0x48] sm:$0xff]
      %v316 = vld [vmem:[%s305 + $0x50] sm:$0xff]
      %v317 = vld [vmem:[%s305 + $0x58] sm:$0xff]
      %v318 = vld [vmem:[%s305 + $0x60] sm:$0xff]
      %v319 = vld [vmem:[%s305 + $0x68] sm:$0xff]
      %v320 = vld [vmem:[%s305 + $0x70] sm:$0xff]
      %v321 = vld [vmem:[%s305 + $0x78] sm:$0xff]
      %v322 = vld [vmem:[%s305 + $0x80] sm:$0xff]
      %v323 = vld [vmem:[%s305 + $0x88] sm:$0xff]
      %v324 = vld [vmem:[%s305 + $0x90] sm:$0xff]
      %v325 = vld [vmem:[%s305 + $0x98] sm:$0xff]
      %v326 = vld [vmem:[%s305 + $0xa0] sm:$0xff]
      %v327 = vld [vmem:[%s305 + $0xa8] sm:$0xff]
      %v328 = vld [vmem:[%s305 + $0xb0] sm:$0xff]
      %v329 = vld [vmem:[%s305 + $0xb8] sm:$0xff]
      %v330 = vld [vmem:[%s305 + $0xc0] sm:$0xff]
      %v331 = vld [vmem:[%s305 + $0xc8] sm:$0xff]
      %v332 = vld [vmem:[%s305 + $0xd0] sm:$0xff]
      %v333 = vld [vmem:[%s305 + $0xd8] sm:$0xff]
      %v334 = vld [vmem:[%s305 + $0xe0] sm:$0xff]
      %v335 = vld [vmem:[%s305 + $0xe8] sm:$0xff]
      %v336 = vld [vmem:[%s305 + $0xf0] sm:$0xff]
      %v337 = vld [vmem:[%s305 + $0xf8] sm:$0xff]
      %v338 = vld [vmem:[%s1] sm:$0x1]
      %v340 = vperm.slane %v338, 0
      %v342 = vmul.f32 %v306, %v340
      %v343 = vmul.f32 %v307, %v340
      %v344 = vmul.f32 %v308, %v340
      %v345 = vmul.f32 %v309, %v340
      %v346 = vmul.f32 %v310, %v340
      %v347 = vmul.f32 %v311, %v340
      %v348 = vmul.f32 %v312, %v340
      %v349 = vmul.f32 %v313, %v340
      %v350 = vmul.f32 %v314, %v340
      %v351 = vmul.f32 %v315, %v340
      %v352 = vmul.f32 %v316, %v340
      %v353 = vmul.f32 %v317, %v340
      %v354 = vmul.f32 %v318, %v340
      %v355 = vmul.f32 %v319, %v340
      %v356 = vmul.f32 %v320, %v340
      %v357 = vmul.f32 %v321, %v340
      %v358 = vmul.f32 %v322, %v340
      %v359 = vmul.f32 %v323, %v340
      %v360 = vmul.f32 %v324, %v340
      %v361 = vmul.f32 %v325, %v340
      %v362 = vmul.f32 %v326, %v340
      %v363 = vmul.f32 %v327, %v340
      %v364 = vmul.f32 %v328, %v340
      %v365 = vmul.f32 %v329, %v340
      %v366 = vmul.f32 %v330, %v340
      %v367 = vmul.f32 %v331, %v340
      %v368 = vmul.f32 %v332, %v340
      %v369 = vmul.f32 %v333, %v340
      %v370 = vmul.f32 %v334, %v340
      %v371 = vmul.f32 %v335, %v340
      %v372 = vmul.f32 %v336, %v340
      %v373 = vmul.f32 %v337, %v340
      %v374 = vld [vmem:[%s2] sm:$0x1]
      %v376 = vperm.slane %v374, 0
      %v378 = vadd.f32 %v342, %v376
      %v379 = vadd.f32 %v343, %v376
      %v380 = vadd.f32 %v344, %v376
      %v381 = vadd.f32 %v345, %v376
      %v382 = vadd.f32 %v346, %v376
      %v383 = vadd.f32 %v347, %v376
      %v384 = vadd.f32 %v348, %v376
      %v385 = vadd.f32 %v349, %v376
      %v386 = vadd.f32 %v350, %v376
      %v387 = vadd.f32 %v351, %v376
      %v388 = vadd.f32 %v352, %v376
      %v389 = vadd.f32 %v353, %v376
      %v390 = vadd.f32 %v354, %v376
      %v391 = vadd.f32 %v355, %v376
      %v392 = vadd.f32 %v356, %v376
      %v393 = vadd.f32 %v357, %v376
      %v394 = vadd.f32 %v358, %v376
      %v395 = vadd.f32 %v359, %v376
      %v396 = vadd.f32 %v360, %v376
      %v397 = vadd.f32 %v361, %v376
      %v398 = vadd.f32 %v362, %v376
      %v399 = vadd.f32 %v363, %v376
      %v400 = vadd.f32 %v364, %v376
      %v401 = vadd.f32 %v365, %v376
      %v402 = vadd.f32 %v366, %v376
      %v403 = vadd.f32 %v367, %v376
      %v404 = vadd.f32 %v368, %v376
      %v405 = vadd.f32 %v369, %v376
      %v406 = vadd.f32 %v370, %v376
      %v407 = vadd.f32 %v371, %v376
      %v408 = vadd.f32 %v372, %v376
      %v409 = vadd.f32 %v373, %v376
      %v410 = vmax.f32 %v378, 0.0
      %v411 = vmax.f32 %v379, 0.0
      %v412 = vmax.f32 %v380, 0.0
      %v413 = vmax.f32 %v381, 0.0
      %v414 = vmax.f32 %v382, 0.0
      %v415 = vmax.f32 %v383, 0.0
      %v416 = vmax.f32 %v384, 0.0
      %v417 = vmax.f32 %v385, 0.0
      %v418 = vmax.f32 %v386, 0.0
      %v419 = vmax.f32 %v387, 0.0
      %v420 = vmax.f32 %v388, 0.0
      %v421 = vmax.f32 %v389, 0.0
      %v422 = vmax.f32 %v390, 0.0
      %v423 = vmax.f32 %v391, 0.0
      %v424 = vmax.f32 %v392, 0.0
      %v425 = vmax.f32 %v393, 0.0
      %v426 = vmax.f32 %v394, 0.0
      %v427 = vmax.f32 %v395, 0.0
      %v428 = vmax.f32 %v396, 0.0
      %v429 = vmax.f32 %v397, 0.0
      %v430 = vmax.f32 %v398, 0.0
      %v431 = vmax.f32 %v399, 0.0
      %v432 = vmax.f32 %v400, 0.0
      %v433 = vmax.f32 %v401, 0.0
      %v434 = vmax.f32 %v402, 0.0
      %v435 = vmax.f32 %v403, 0.0
      %v436 = vmax.f32 %v404, 0.0
      %v437 = vmax.f32 %v405, 0.0
      %v438 = vmax.f32 %v406, 0.0
      %v439 = vmax.f32 %v407, 0.0
      %v440 = vmax.f32 %v408, 0.0
      %v441 = vmax.f32 %v409, 0.0
      %s442 = scalar_lea.vmem [#allocation2], 24
      %443 = vst [vmem:[%s442 + $0x1] sm:$0xff] %v410
      %444 = vst [vmem:[%s442 + $0x9] sm:$0xff] %v411
      %445 = vst [vmem:[%s442 + $0x19] sm:$0xff] %v412
      %446 = vst [vmem:[%s442 + $0x21] sm:$0xff] %v413
      %447 = vst [vmem:[%s442 + $0x31] sm:$0xff] %v414
      %448 = vst [vmem:[%s442 + $0x39] sm:$0xff] %v415
      %449 = vst [vmem:[%s442 + $0x49] sm:$0xff] %v416
      %450 = vst [vmem:[%s442 + $0x51] sm:$0xff] %v417
      %451 = vst [vmem:[%s442 + $0x61] sm:$0xff] %v418
      %452 = vst [vmem:[%s442 + $0x69] sm:$0xff] %v419
      %453 = vst [vmem:[%s442 + $0x79] sm:$0xff] %v420
      %454 = vst [vmem:[%s442 + $0x81] sm:$0xff] %v421
      %455 = vst [vmem:[%s442 + $0x91] sm:$0xff] %v422
      %456 = vst [vmem:[%s442 + $0x99] sm:$0xff] %v423
      %457 = vst [vmem:[%s442 + $0xa9] sm:$0xff] %v424
      %458 = vst [vmem:[%s442 + $0xb1] sm:$0xff] %v425
      %459 = vst [vmem:[%s442 + $0xc1] sm:$0xff] %v426
      %460 = vst [vmem:[%s442 + $0xc9] sm:$0xff] %v427
      %461 = vst [vmem:[%s442 + $0xd9] sm:$0xff] %v428
      %462 = vst [vmem:[%s442 + $0xe1] sm:$0xff] %v429
      %463 = vst [vmem:[%s442 + $0xf1] sm:$0xff] %v430
      %464 = vst [vmem:[%s442 + $0xf9] sm:$0xff] %v431
      %465 = vst [vmem:[%s442 + $0x109] sm:$0xff] %v432
      %466 = vst [vmem:[%s442 + $0x111] sm:$0xff] %v433
      %467 = vst [vmem:[%s442 + $0x121] sm:$0xff] %v434
      %468 = vst [vmem:[%s442 + $0x129] sm:$0xff] %v435
      %469 = vst [vmem:[%s442 + $0x139] sm:$0xff] %v436
      %470 = vst [vmem:[%s442 + $0x141] sm:$0xff] %v437
      %471 = vst [vmem:[%s442 + $0x151] sm:$0xff] %v438
      %472 = vst [vmem:[%s442 + $0x159] sm:$0xff] %v439
      %473 = vst [vmem:[%s442 + $0x169] sm:$0xff] %v440
      %474 = vst [vmem:[%s442 + $0x171] sm:$0xff] %v441
      %s475 = ssub.s32 %s267, 1
      %p476 = scmp.gt.s32.totalorder %s475, 0
      %s477 = scalar_select %p476, %s475, 0
      %s478 = smul.u32 %s477, 16
      %s479 = scalar_lea.vmem %s249, %s478
      %v480 = vld [vmem:[%s479] sm:$0xff]
      %v481 = vld [vmem:[%s479 + $0x8] sm:$0xff]
      %v482 = vld [vmem:[%s1] sm:$0x1]
      %v484 = vperm.slane %v482, 0
      %v486 = vmul.f32 %v480, %v484
      %v487 = vmul.f32 %v481, %v484
      %v488 = vld [vmem:[%s2] sm:$0x1]
      %v490 = vperm.slane %v488, 0
      %v492 = vadd.f32 %v486, %v490
      %v493 = vadd.f32 %v487, %v490
      %v494 = vmax.f32 %v492, 0.0
      %v495 = vmax.f32 %v493, 0.0
      %p496 = scmp.gt.s32.totalorder %s22, 0
      %s497 = scalar_select %p496, 1, 0
      %v498 = vstv %s497
      %vm499 = vcmp.eq.s32.totalorder %v498, 1
      %v500 = vsel %vm499, %v494, 0.0
      %v501 = vsel %vm499, %v495, 0.0
      %502 = vst [vmem:[#allocation2 + $0x1] sm:$0xff] %v500
      %503 = vst [vmem:[#allocation2 + $0x9] sm:$0xff] %v501
      %s504 = sadd.s32 %s267, 16
      %p505 = scmp.lt.s32.totalorder %s504, 15
      %s506 = scalar_select %p505, %s504, 15
      %s507 = smul.u32 %s506, 16
      %s508 = scalar_lea.vmem %s249, %s507
      %v509 = vld [vmem:[%s508] sm:$0xff]
      %v510 = vld [vmem:[%s508 + $0x8] sm:$0xff]
      %v511 = vld [vmem:[%s1] sm:$0x1]
      %v513 = vperm.slane %v511, 0
      %v515 = vmul.f32 %v509, %v513
      %v516 = vmul.f32 %v510, %v513
      %v517 = vld [vmem:[%s2] sm:$0x1]
      %v519 = vperm.slane %v517, 0
      %v521 = vadd.f32 %v515, %v519
      %v522 = vadd.f32 %v516, %v519
      %v523 = vmax.f32 %v521, 0.0
      %v524 = vmax.f32 %v522, 0.0
      %p525 = scmp.lt.s32.totalorder %s22, 0
      %s526 = scalar_select %p525, 1, 0
      %v527 = vstv %s526
      %vm528 = vcmp.eq.s32.totalorder %v527, 1
      %v529 = vsel %vm528, %v523, 0.0
      %v530 = vsel %vm528, %v524, 0.0
      %s531 = scalar_lea.vmem [#allocation2], 408
      %532 = vst [vmem:[%s531 + $0x1] sm:$0xff] %v529
      %533 = vst [vmem:[%s531 + $0x9] sm:$0xff] %v530
      %v534 = vld [vmem:[#allocation2] sm:$0xff]
      %v535 = vld [vmem:[#allocation2 + $0x8] sm:$0xff]
      %v536 = vld [vmem:[#allocation2 + $0x18] sm:$0xff]
      %v537 = vld [vmem:[#allocation2 + $0x20] sm:$0xff]
      %v538 = vld [vmem:[#allocation2 + $0x30] sm:$0xff]
      %v539 = vld [vmem:[#allocation2 + $0x38] sm:$0xff]
      %v540 = vld [vmem:[#allocation2 + $0x48] sm:$0xff]
      %v541 = vld [vmem:[#allocation2 + $0x50] sm:$0xff]
      %v542 = vld [vmem:[#allocation2 + $0x60] sm:$0xff]
      %v543 = vld [vmem:[#allocation2 + $0x68] sm:$0xff]
      %v544 = vld [vmem:[#allocation2 + $0x78] sm:$0xff]
      %v545 = vld [vmem:[#allocation2 + $0x80] sm:$0xff]
      %v546 = vld [vmem:[#allocation2 + $0x90] sm:$0xff]
      %v547 = vld [vmem:[#allocation2 + $0x98] sm:$0xff]
      %v548 = vld [vmem:[#allocation2 + $0xa8] sm:$0xff]
      %v549 = vld [vmem:[#allocation2 + $0xb0] sm:$0xff]
      %v550 = vld [vmem:[#allocation2 + $0xc0] sm:$0xff]
      %v551 = vld [vmem:[#allocation2 + $0xc8] sm:$0xff]
      %v552 = vld [vmem:[#allocation2 + $0xd8] sm:$0xff]
      %v553 = vld [vmem:[#allocation2 + $0xe0] sm:$0xff]
      %v554 = vld [vmem:[#allocation2 + $0xf0] sm:$0xff]
      %v555 = vld [vmem:[#allocation2 + $0xf8] sm:$0xff]
      %v556 = vld [vmem:[#allocation2 + $0x108] sm:$0xff]
      %v557 = vld [vmem:[#allocation2 + $0x110] sm:$0xff]
      %v558 = vld [vmem:[#allocation2 + $0x120] sm:$0xff]
      %v559 = vld [vmem:[#allocation2 + $0x128] sm:$0xff]
      %v560 = vld [vmem:[#allocation2 + $0x138] sm:$0xff]
      %v561 = vld [vmem:[#allocation2 + $0x140] sm:$0xff]
      %v562 = vld [vmem:[#allocation2 + $0x150] sm:$0xff]
      %v563 = vld [vmem:[#allocation2 + $0x158] sm:$0xff]
      %v564 = vld [vmem:[#allocation2 + $0x168] sm:$0xff]
      %v565 = vld [vmem:[#allocation2 + $0x170] sm:$0xff]
      %v566 = vld [vmem:[%s3] sm:$0xff]
      %v567 = vld [vmem:[%s3 + $0x8] sm:$0xff]
      %v568 = vld [vmem:[%s3 + $0x10] sm:$0xff]
      %v569 = vld [vmem:[%s3 + $0x18] sm:$0xff]
      %v570 = vld [vmem:[%s3 + $0x20] sm:$0xff]
      %v571 = vld [vmem:[%s3 + $0x28] sm:$0xff]
      %v572 = vld [vmem:[%s3 + $0x30] sm:$0xff]
      %v573 = vld [vmem:[%s3 + $0x38] sm:$0xff]
      %v574 = vld [vmem:[%s3 + $0x40] sm:$0xff]
      %v575 = vld [vmem:[%s3 + $0x48] sm:$0xff]
      %v576 = vld [vmem:[%s3 + $0x50] sm:$0xff]
      %v577 = vld [vmem:[%s3 + $0x58] sm:$0xff]
      %v578 = vld [vmem:[%s3 + $0x60] sm:$0xff]
      %v579 = vld [vmem:[%s3 + $0x68] sm:$0xff]
      %v580 = vld [vmem:[%s3 + $0x70] sm:$0xff]
      %v581 = vld [vmem:[%s3 + $0x78] sm:$0xff]
      %v582 = vld [vmem:[#allocation2 + $0x1] sm:$0xff]
      %v583 = vld [vmem:[#allocation2 + $0x9] sm:$0xff]
      %v584 = vld [vmem:[#allocation2 + $0x19] sm:$0xff]
      %v585 = vld [vmem:[#allocation2 + $0x21] sm:$0xff]
      %v586 = vld [vmem:[#allocation2 + $0x31] sm:$0xff]
      %v587 = vld [vmem:[#allocation2 + $0x39] sm:$0xff]
      %v588 = vld [vmem:[#allocation2 + $0x49] sm:$0xff]
      %v589 = vld [vmem:[#allocation2 + $0x51] sm:$0xff]
      %v590 = vld [vmem:[#allocation2 + $0x61] sm:$0xff]
      %v591 = vld [vmem:[#allocation2 + $0x69] sm:$0xff]
      %v592 = vld [vmem:[#allocation2 + $0x79] sm:$0xff]
      %v593 = vld [vmem:[#allocation2 + $0x81] sm:$0xff]
      %v594 = vld [vmem:[#allocation2 + $0x91] sm:$0xff]
      %v595 = vld [vmem:[#allocation2 + $0x99] sm:$0xff]
      %v596 = vld [vmem:[#allocation2 + $0xa9] sm:$0xff]
      %v597 = vld [vmem:[#allocation2 + $0xb1] sm:$0xff]
      %v598 = vld [vmem:[#allocation2 + $0xc1] sm:$0xff]
      %v599 = vld [vmem:[#allocation2 + $0xc9] sm:$0xff]
      %v600 = vld [vmem:[#allocation2 + $0xd9] sm:$0xff]
      %v601 = vld [vmem:[#allocation2 + $0xe1] sm:$0xff]
      %v602 = vld [vmem:[#allocation2 + $0xf1] sm:$0xff]
      %v603 = vld [vmem:[#allocation2 + $0xf9] sm:$0xff]
      %v604 = vld [vmem:[#allocation2 + $0x109] sm:$0xff]
      %v605 = vld [vmem:[#allocation2 + $0x111] sm:$0xff]
      %v606 = vld [vmem:[#allocation2 + $0x121] sm:$0xff]
      %v607 = vld [vmem:[#allocation2 + $0x129] sm:$0xff]
      %v608 = vld [vmem:[#allocation2 + $0x139] sm:$0xff]
      %v609 = vld [vmem:[#allocation2 + $0x141] sm:$0xff]
      %v610 = vld [vmem:[#allocation2 + $0x151] sm:$0xff]
      %v611 = vld [vmem:[#allocation2 + $0x159] sm:$0xff]
      %v612 = vld [vmem:[#allocation2 + $0x169] sm:$0xff]
      %v613 = vld [vmem:[#allocation2 + $0x171] sm:$0xff]
      %v614 = vld [vmem:[%s3 + $0x80] sm:$0xff]
      %v615 = vld [vmem:[%s3 + $0x88] sm:$0xff]
      %v616 = vld [vmem:[%s3 + $0x90] sm:$0xff]
      %v617 = vld [vmem:[%s3 + $0x98] sm:$0xff]
      %v618 = vld [vmem:[%s3 + $0xa0] sm:$0xff]
      %v619 = vld [vmem:[%s3 + $0xa8] sm:$0xff]
      %v620 = vld [vmem:[%s3 + $0xb0] sm:$0xff]
      %v621 = vld [vmem:[%s3 + $0xb8] sm:$0xff]
      %v622 = vld [vmem:[%s3 + $0xc0] sm:$0xff]
      %v623 = vld [vmem:[%s3 + $0xc8] sm:$0xff]
      %v624 = vld [vmem:[%s3 + $0xd0] sm:$0xff]
      %v625 = vld [vmem:[%s3 + $0xd8] sm:$0xff]
      %v626 = vld [vmem:[%s3 + $0xe0] sm:$0xff]
      %v627 = vld [vmem:[%s3 + $0xe8] sm:$0xff]
      %v628 = vld [vmem:[%s3 + $0xf0] sm:$0xff]
      %v629 = vld [vmem:[%s3 + $0xf8] sm:$0xff]
      %630 = vmatpush.msra.mxu0 %v629
      %631 = vmatpush.msra.mxu0 %v628
      %632 = vmatpush.msra.mxu0 %v627
      %633 = vmatpush.msra.mxu0 %v626
      %634 = vmatpush.msra.mxu0 %v625
      %635 = vmatpush.msra.mxu0 %v624
      %636 = vmatpush.msra.mxu0 %v623
      %637 = vmatpush.msra.mxu0 %v622
      %638 = vmatpush.msra.mxu0 %v621
      %639 = vmatpush.msra.mxu0 %v620
      %640 = vmatpush.msra.mxu0 %v619
      %641 = vmatpush.msra.mxu0 %v618
      %642 = vmatpush.msra.mxu0 %v617
      %643 = vmatpush.msra.mxu0 %v616
      %644 = vmatpush.msra.mxu0 %v615
      %645 = vmatpush.msra.mxu0 %v614
      %646 = vmatmul.f32.gmra.mxu0 %v582
      %v647 = vpop.f32.mrf.mxu0
      %v648 = vadd.f32 0.0, %v647
      %649 = vmatmul.f32.gmra.mxu0 %v583
      %v650 = vpop.f32.mrf.mxu0
      %v651 = vadd.f32 0.0, %v650
      %652 = vmatmul.f32.gmra.mxu0 %v584
      %v653 = vpop.f32.mrf.mxu0
      %v654 = vadd.f32 0.0, %v653
      %655 = vmatmul.f32.gmra.mxu0 %v585
      %v656 = vpop.f32.mrf.mxu0
      %v657 = vadd.f32 0.0, %v656
      %658 = vmatmul.f32.gmra.mxu0 %v586
      %v659 = vpop.f32.mrf.mxu0
      %v660 = vadd.f32 0.0, %v659
      %661 = vmatmul.f32.gmra.mxu0 %v587
      %v662 = vpop.f32.mrf.mxu0
      %v663 = vadd.f32 0.0, %v662
      %664 = vmatmul.f32.gmra.mxu0 %v588
      %v665 = vpop.f32.mrf.mxu0
      %v666 = vadd.f32 0.0, %v665
      %667 = vmatmul.f32.gmra.mxu0 %v589
      %v668 = vpop.f32.mrf.mxu0
      %v669 = vadd.f32 0.0, %v668
      %670 = vmatmul.f32.gmra.mxu0 %v590
      %v671 = vpop.f32.mrf.mxu0
      %v672 = vadd.f32 0.0, %v671
      %673 = vmatmul.f32.gmra.mxu0 %v591
      %v674 = vpop.f32.mrf.mxu0
      %v675 = vadd.f32 0.0, %v674
      %676 = vmatmul.f32.gmra.mxu0 %v592
      %v677 = vpop.f32.mrf.mxu0
      %v678 = vadd.f32 0.0, %v677
      %679 = vmatmul.f32.gmra.mxu0 %v593
      %v680 = vpop.f32.mrf.mxu0
      %v681 = vadd.f32 0.0, %v680
      %682 = vmatmul.f32.gmra.mxu0 %v594
      %v683 = vpop.f32.mrf.mxu0
      %v684 = vadd.f32 0.0, %v683
      %685 = vmatmul.f32.gmra.mxu0 %v595
      %v686 = vpop.f32.mrf.mxu0
      %v687 = vadd.f32 0.0, %v686
      %688 = vmatmul.f32.gmra.mxu0 %v596
      %v689 = vpop.f32.mrf.mxu0
      %v690 = vadd.f32 0.0, %v689
      %691 = vmatmul.f32.gmra.mxu0 %v597
      %v692 = vpop.f32.mrf.mxu0
      %v693 = vadd.f32 0.0, %v692
      %694 = vmatmul.f32.gmra.mxu0 %v598
      %v695 = vpop.f32.mrf.mxu0
      %v696 = vadd.f32 0.0, %v695
      %697 = vmatmul.f32.gmra.mxu0 %v599
      %v698 = vpop.f32.mrf.mxu0
      %v699 = vadd.f32 0.0, %v698
      %700 = vmatmul.f32.gmra.mxu0 %v600
      %v701 = vpop.f32.mrf.mxu0
      %v702 = vadd.f32 0.0, %v701
      %703 = vmatmul.f32.gmra.mxu0 %v601
      %v704 = vpop.f32.mrf.mxu0
      %v705 = vadd.f32 0.0, %v704
      %706 = vmatmul.f32.gmra.mxu0 %v602
      %v707 = vpop.f32.mrf.mxu0
      %v708 = vadd.f32 0.0, %v707
      %709 = vmatmul.f32.gmra.mxu0 %v603
      %v710 = vpop.f32.mrf.mxu0
      %v711 = vadd.f32 0.0, %v710
      %712 = vmatmul.f32.gmra.mxu0 %v604
      %v713 = vpop.f32.mrf.mxu0
      %v714 = vadd.f32 0.0, %v713
      %715 = vmatmul.f32.gmra.mxu0 %v605
      %v716 = vpop.f32.mrf.mxu0
      %v717 = vadd.f32 0.0, %v716
      %718 = vmatmul.f32.gmra.mxu0 %v606
      %v719 = vpop.f32.mrf.mxu0
      %v720 = vadd.f32 0.0, %v719
      %721 = vmatmul.f32.gmra.mxu0 %v607
      %v722 = vpop.f32.mrf.mxu0
      %v723 = vadd.f32 0.0, %v722
      %724 = vmatmul.f32.gmra.mxu0 %v608
      %v725 = vpop.f32.mrf.mxu0
      %v726 = vadd.f32 0.0, %v725
      %727 = vmatmul.f32.gmra.mxu0 %v609
      %v728 = vpop.f32.mrf.mxu0
      %v729 = vadd.f32 0.0, %v728
      %730 = vmatmul.f32.gmra.mxu0 %v610
      %v731 = vpop.f32.mrf.mxu0
      %v732 = vadd.f32 0.0, %v731
      %733 = vmatmul.f32.gmra.mxu0 %v611
      %v734 = vpop.f32.mrf.mxu0
      %v735 = vadd.f32 0.0, %v734
      %736 = vmatmul.f32.gmra.mxu0 %v612
      %v737 = vpop.f32.mrf.mxu0
      %v738 = vadd.f32 0.0, %v737
      %739 = vmatmul.f32.gmra.mxu0 %v613
      %v740 = vpop.f32.mrf.mxu0
      %v741 = vadd.f32 0.0, %v740
      %742 = vdwg.mxu0
      %743 = vmatpush.msra.mxu0 %v581
      %744 = vmatpush.msra.mxu0 %v580
      %745 = vmatpush.msra.mxu0 %v579
      %746 = vmatpush.msra.mxu0 %v578
      %747 = vmatpush.msra.mxu0 %v577
      %748 = vmatpush.msra.mxu0 %v576
      %749 = vmatpush.msra.mxu0 %v575
      %750 = vmatpush.msra.mxu0 %v574
      %751 = vmatpush.msra.mxu0 %v573
      %752 = vmatpush.msra.mxu0 %v572
      %753 = vmatpush.msra.mxu0 %v571
      %754 = vmatpush.msra.mxu0 %v570
      %755 = vmatpush.msra.mxu0 %v569
      %756 = vmatpush.msra.mxu0 %v568
      %757 = vmatpush.msra.mxu0 %v567
      %758 = vmatpush.msra.mxu0 %v566
      %759 = vmatmul.f32.gmra.mxu0 %v534
      %v760 = vpop.f32.mrf.mxu0
      %v761 = vadd.f32 %v648, %v760
      %762 = vmatmul.f32.gmra.mxu0 %v535
      %v763 = vpop.f32.mrf.mxu0
      %v764 = vadd.f32 %v651, %v763
      %765 = vmatmul.f32.gmra.mxu0 %v536
      %v766 = vpop.f32.mrf.mxu0
      %v767 = vadd.f32 %v654, %v766
      %768 = vmatmul.f32.gmra.mxu0 %v537
      %v769 = vpop.f32.mrf.mxu0
      %v770 = vadd.f32 %v657, %v769
      %771 = vmatmul.f32.gmra.mxu0 %v538
      %v772 = vpop.f32.mrf.mxu0
      %v773 = vadd.f32 %v660, %v772
      %774 = vmatmul.f32.gmra.mxu0 %v539
      %v775 = vpop.f32.mrf.mxu0
      %v776 = vadd.f32 %v663, %v775
      %777 = vmatmul.f32.gmra.mxu0 %v540
      %v778 = vpop.f32.mrf.mxu0
      %v779 = vadd.f32 %v666, %v778
      %780 = vmatmul.f32.gmra.mxu0 %v541
      %v781 = vpop.f32.mrf.mxu0
      %v782 = vadd.f32 %v669, %v781
      %783 = vmatmul.f32.gmra.mxu0 %v542
      %v784 = vpop.f32.mrf.mxu0
      %v785 = vadd.f32 %v672, %v784
      %786 = vmatmul.f32.gmra.mxu0 %v543
      %v787 = vpop.f32.mrf.mxu0
      %v788 = vadd.f32 %v675, %v787
      %789 = vmatmul.f32.gmra.mxu0 %v544
      %v790 = vpop.f32.mrf.mxu0
      %v791 = vadd.f32 %v678, %v790
      %792 = vmatmul.f32.gmra.mxu0 %v545
      %v793 = vpop.f32.mrf.mxu0
      %v794 = vadd.f32 %v681, %v793
      %795 = vmatmul.f32.gmra.mxu0 %v546
      %v796 = vpop.f32.mrf.mxu0
      %v797 = vadd.f32 %v684, %v796
      %798 = vmatmul.f32.gmra.mxu0 %v547
      %v799 = vpop.f32.mrf.mxu0
      %v800 = vadd.f32 %v687, %v799
      %801 = vmatmul.f32.gmra.mxu0 %v548
      %v802 = vpop.f32.mrf.mxu0
      %v803 = vadd.f32 %v690, %v802
      %804 = vmatmul.f32.gmra.mxu0 %v549
      %v805 = vpop.f32.mrf.mxu0
      %v806 = vadd.f32 %v693, %v805
      %807 = vmatmul.f32.gmra.mxu0 %v550
      %v808 = vpop.f32.mrf.mxu0
      %v809 = vadd.f32 %v696, %v808
      %810 = vmatmul.f32.gmra.mxu0 %v551
      %v811 = vpop.f32.mrf.mxu0
      %v812 = vadd.f32 %v699, %v811
      %813 = vmatmul.f32.gmra.mxu0 %v552
      %v814 = vpop.f32.mrf.mxu0
      %v815 = vadd.f32 %v702, %v814
      %816 = vmatmul.f32.gmra.mxu0 %v553
      %v817 = vpop.f32.mrf.mxu0
      %v818 = vadd.f32 %v705, %v817
      %819 = vmatmul.f32.gmra.mxu0 %v554
      %v820 = vpop.f32.mrf.mxu0
      %v821 = vadd.f32 %v708, %v820
      %822 = vmatmul.f32.gmra.mxu0 %v555
      %v823 = vpop.f32.mrf.mxu0
      %v824 = vadd.f32 %v711, %v823
      %825 = vmatmul.f32.gmra.mxu0 %v556
      %v826 = vpop.f32.mrf.mxu0
      %v827 = vadd.f32 %v714, %v826
      %828 = vmatmul.f32.gmra.mxu0 %v557
      %v829 = vpop.f32.mrf.mxu0
      %v830 = vadd.f32 %v717, %v829
      %831 = vmatmul.f32.gmra.mxu0 %v558
      %v832 = vpop.f32.mrf.mxu0
      %v833 = vadd.f32 %v720, %v832
      %834 = vmatmul.f32.gmra.mxu0 %v559
      %v835 = vpop.f32.mrf.mxu0
      %v836 = vadd.f32 %v723, %v835
      %837 = vmatmul.f32.gmra.mxu0 %v560
      %v838 = vpop.f32.mrf.mxu0
      %v839 = vadd.f32 %v726, %v838
      %840 = vmatmul.f32.gmra.mxu0 %v561
      %v841 = vpop.f32.mrf.mxu0
      %v842 = vadd.f32 %v729, %v841
      %843 = vmatmul.f32.gmra.mxu0 %v562
      %v844 = vpop.f32.mrf.mxu0
      %v845 = vadd.f32 %v732, %v844
      %846 = vmatmul.f32.gmra.mxu0 %v563
      %v847 = vpop.f32.mrf.mxu0
      %v848 = vadd.f32 %v735, %v847
      %849 = vmatmul.f32.gmra.mxu0 %v564
      %v850 = vpop.f32.mrf.mxu0
      %v851 = vadd.f32 %v738, %v850
      %852 = vmatmul.f32.gmra.mxu0 %v565
      %v853 = vpop.f32.mrf.mxu0
      %v854 = vadd.f32 %v741, %v853
      %855 = vdwg.mxu0
      %v856 = vld [vmem:[#allocation2 + $0x2] sm:$0xff]
      %v857 = vld [vmem:[#allocation2 + $0xa] sm:$0xff]
      %v858 = vld [vmem:[#allocation2 + $0x1a] sm:$0xff]
      %v859 = vld [vmem:[#allocation2 + $0x22] sm:$0xff]
      %v860 = vld [vmem:[#allocation2 + $0x32] sm:$0xff]
      %v861 = vld [vmem:[#allocation2 + $0x3a] sm:$0xff]
      %v862 = vld [vmem:[#allocation2 + $0x4a] sm:$0xff]
      %v863 = vld [vmem:[#allocation2 + $0x52] sm:$0xff]
      %v864 = vld [vmem:[#allocation2 + $0x62] sm:$0xff]
      %v865 = vld [vmem:[#allocation2 + $0x6a] sm:$0xff]
      %v866 = vld [vmem:[#allocation2 + $0x7a] sm:$0xff]
      %v867 = vld [vmem:[#allocation2 + $0x82] sm:$0xff]
      %v868 = vld [vmem:[#allocation2 + $0x92] sm:$0xff]
      %v869 = vld [vmem:[#allocation2 + $0x9a] sm:$0xff]
      %v870 = vld [vmem:[#allocation2 + $0xaa] sm:$0xff]
      %v871 = vld [vmem:[#allocation2 + $0xb2] sm:$0xff]
      %v872 = vld [vmem:[#allocation2 + $0xc2] sm:$0xff]
      %v873 = vld [vmem:[#allocation2 + $0xca] sm:$0xff]
      %v874 = vld [vmem:[#allocation2 + $0xda] sm:$0xff]
      %v875 = vld [vmem:[#allocation2 + $0xe2] sm:$0xff]
      %v876 = vld [vmem:[#allocation2 + $0xf2] sm:$0xff]
      %v877 = vld [vmem:[#allocation2 + $0xfa] sm:$0xff]
      %v878 = vld [vmem:[#allocation2 + $0x10a] sm:$0xff]
      %v879 = vld [vmem:[#allocation2 + $0x112] sm:$0xff]
      %v880 = vld [vmem:[#allocation2 + $0x122] sm:$0xff]
      %v881 = vld [vmem:[#allocation2 + $0x12a] sm:$0xff]
      %v882 = vld [vmem:[#allocation2 + $0x13a] sm:$0xff]
      %v883 = vld [vmem:[#allocation2 + $0x142] sm:$0xff]
      %v884 = vld [vmem:[#allocation2 + $0x152] sm:$0xff]
      %v885 = vld [vmem:[#allocation2 + $0x15a] sm:$0xff]
      %v886 = vld [vmem:[#allocation2 + $0x16a] sm:$0xff]
      %v887 = vld [vmem:[#allocation2 + $0x172] sm:$0xff]
      %v888 = vld [vmem:[%s3 + $0x100] sm:$0xff]
      %v889 = vld [vmem:[%s3 + $0x108] sm:$0xff]
      %v890 = vld [vmem:[%s3 + $0x110] sm:$0xff]
      %v891 = vld [vmem:[%s3 + $0x118] sm:$0xff]
      %v892 = vld [vmem:[%s3 + $0x120] sm:$0xff]
      %v893 = vld [vmem:[%s3 + $0x128] sm:$0xff]
      %v894 = vld [vmem:[%s3 + $0x130] sm:$0xff]
      %v895 = vld [vmem:[%s3 + $0x138] sm:$0xff]
      %v896 = vld [vmem:[%s3 + $0x140] sm:$0xff]
      %v897 = vld [vmem:[%s3 + $0x148] sm:$0xff]
      %v898 = vld [vmem:[%s3 + $0x150] sm:$0xff]
      %v899 = vld [vmem:[%s3 + $0x158] sm:$0xff]
      %v900 = vld [vmem:[%s3 + $0x160] sm:$0xff]
      %v901 = vld [vmem:[%s3 + $0x168] sm:$0xff]
      %v902 = vld [vmem:[%s3 + $0x170] sm:$0xff]
      %v903 = vld [vmem:[%s3 + $0x178] sm:$0xff]
      %904 = vmatpush.msra.mxu0 %v903
      %905 = vmatpush.msra.mxu0 %v902
      %906 = vmatpush.msra.mxu0 %v901
      %907 = vmatpush.msra.mxu0 %v900
      %908 = vmatpush.msra.mxu0 %v899
      %909 = vmatpush.msra.mxu0 %v898
      %910 = vmatpush.msra.mxu0 %v897
      %911 = vmatpush.msra.mxu0 %v896
      %912 = vmatpush.msra.mxu0 %v895
      %913 = vmatpush.msra.mxu0 %v894
      %914 = vmatpush.msra.mxu0 %v893
      %915 = vmatpush.msra.mxu0 %v892
      %916 = vmatpush.msra.mxu0 %v891
      %917 = vmatpush.msra.mxu0 %v890
      %918 = vmatpush.msra.mxu0 %v889
      %919 = vmatpush.msra.mxu0 %v888
      %920 = vmatmul.f32.gmra.mxu0 %v856
      %v921 = vpop.f32.mrf.mxu0
      %v922 = vadd.f32 0.0, %v921
      %923 = vmatmul.f32.gmra.mxu0 %v857
      %v924 = vpop.f32.mrf.mxu0
      %v925 = vadd.f32 0.0, %v924
      %926 = vmatmul.f32.gmra.mxu0 %v858
      %v927 = vpop.f32.mrf.mxu0
      %v928 = vadd.f32 0.0, %v927
      %929 = vmatmul.f32.gmra.mxu0 %v859
      %v930 = vpop.f32.mrf.mxu0
      %v931 = vadd.f32 0.0, %v930
      %932 = vmatmul.f32.gmra.mxu0 %v860
      %v933 = vpop.f32.mrf.mxu0
      %v934 = vadd.f32 0.0, %v933
      %935 = vmatmul.f32.gmra.mxu0 %v861
      %v936 = vpop.f32.mrf.mxu0
      %v937 = vadd.f32 0.0, %v936
      %938 = vmatmul.f32.gmra.mxu0 %v862
      %v939 = vpop.f32.mrf.mxu0
      %v940 = vadd.f32 0.0, %v939
      %941 = vmatmul.f32.gmra.mxu0 %v863
      %v942 = vpop.f32.mrf.mxu0
      %v943 = vadd.f32 0.0, %v942
      %944 = vmatmul.f32.gmra.mxu0 %v864
      %v945 = vpop.f32.mrf.mxu0
      %v946 = vadd.f32 0.0, %v945
      %947 = vmatmul.f32.gmra.mxu0 %v865
      %v948 = vpop.f32.mrf.mxu0
      %v949 = vadd.f32 0.0, %v948
      %950 = vmatmul.f32.gmra.mxu0 %v866
      %v951 = vpop.f32.mrf.mxu0
      %v952 = vadd.f32 0.0, %v951
      %953 = vmatmul.f32.gmra.mxu0 %v867
      %v954 = vpop.f32.mrf.mxu0
      %v955 = vadd.f32 0.0, %v954
      %956 = vmatmul.f32.gmra.mxu0 %v868
      %v957 = vpop.f32.mrf.mxu0
      %v958 = vadd.f32 0.0, %v957
      %959 = vmatmul.f32.gmra.mxu0 %v869
      %v960 = vpop.f32.mrf.mxu0
      %v961 = vadd.f32 0.0, %v960
      %962 = vmatmul.f32.gmra.mxu0 %v870
      %v963 = vpop.f32.mrf.mxu0
      %v964 = vadd.f32 0.0, %v963
      %965 = vmatmul.f32.gmra.mxu0 %v871
      %v966 = vpop.f32.mrf.mxu0
      %v967 = vadd.f32 0.0, %v966
      %968 = vmatmul.f32.gmra.mxu0 %v872
      %v969 = vpop.f32.mrf.mxu0
      %v970 = vadd.f32 0.0, %v969
      %971 = vmatmul.f32.gmra.mxu0 %v873
      %v972 = vpop.f32.mrf.mxu0
      %v973 = vadd.f32 0.0, %v972
      %974 = vmatmul.f32.gmra.mxu0 %v874
      %v975 = vpop.f32.mrf.mxu0
      %v976 = vadd.f32 0.0, %v975
      %977 = vmatmul.f32.gmra.mxu0 %v875
      %v978 = vpop.f32.mrf.mxu0
      %v979 = vadd.f32 0.0, %v978
      %980 = vmatmul.f32.gmra.mxu0 %v876
      %v981 = vpop.f32.mrf.mxu0
      %v982 = vadd.f32 0.0, %v981
      %983 = vmatmul.f32.gmra.mxu0 %v877
      %v984 = vpop.f32.mrf.mxu0
      %v985 = vadd.f32 0.0, %v984
      %986 = vmatmul.f32.gmra.mxu0 %v878
      %v987 = vpop.f32.mrf.mxu0
      %v988 = vadd.f32 0.0, %v987
      %989 = vmatmul.f32.gmra.mxu0 %v879
      %v990 = vpop.f32.mrf.mxu0
      %v991 = vadd.f32 0.0, %v990
      %992 = vmatmul.f32.gmra.mxu0 %v880
      %v993 = vpop.f32.mrf.mxu0
      %v994 = vadd.f32 0.0, %v993
      %995 = vmatmul.f32.gmra.mxu0 %v881
      %v996 = vpop.f32.mrf.mxu0
      %v997 = vadd.f32 0.0, %v996
      %998 = vmatmul.f32.gmra.mxu0 %v882
      %v999 = vpop.f32.mrf.mxu0
      %v1000 = vadd.f32 0.0, %v999
      %1001 = vmatmul.f32.gmra.mxu0 %v883
      %v1002 = vpop.f32.mrf.mxu0
      %v1003 = vadd.f32 0.0, %v1002
      %1004 = vmatmul.f32.gmra.mxu0 %v884
      %v1005 = vpop.f32.mrf.mxu0
      %v1006 = vadd.f32 0.0, %v1005
      %1007 = vmatmul.f32.gmra.mxu0 %v885
      %v1008 = vpop.f32.mrf.mxu0
      %v1009 = vadd.f32 0.0, %v1008
      %1010 = vmatmul.f32.gmra.mxu0 %v886
      %v1011 = vpop.f32.mrf.mxu0
      %v1012 = vadd.f32 0.0, %v1011
      %1013 = vmatmul.f32.gmra.mxu0 %v887
      %v1014 = vpop.f32.mrf.mxu0
      %v1015 = vadd.f32 0.0, %v1014
      %1016 = vdwg.mxu0
      %v1017 = vadd.f32 %v761, %v922
      %v1018 = vadd.f32 %v764, %v925
      %v1019 = vadd.f32 %v767, %v928
      %v1020 = vadd.f32 %v770, %v931
      %v1021 = vadd.f32 %v773, %v934
      %v1022 = vadd.f32 %v776, %v937
      %v1023 = vadd.f32 %v779, %v940
      %v1024 = vadd.f32 %v782, %v943
      %v1025 = vadd.f32 %v785, %v946
      %v1026 = vadd.f32 %v788, %v949
      %v1027 = vadd.f32 %v791, %v952
      %v1028 = vadd.f32 %v794, %v955
      %v1029 = vadd.f32 %v797, %v958
      %v1030 = vadd.f32 %v800, %v961
      %v1031 = vadd.f32 %v803, %v964
      %v1032 = vadd.f32 %v806, %v967
      %v1033 = vadd.f32 %v809, %v970
      %v1034 = vadd.f32 %v812, %v973
      %v1035 = vadd.f32 %v815, %v976
      %v1036 = vadd.f32 %v818, %v979
      %v1037 = vadd.f32 %v821, %v982
      %v1038 = vadd.f32 %v824, %v985
      %v1039 = vadd.f32 %v827, %v988
      %v1040 = vadd.f32 %v830, %v991
      %v1041 = vadd.f32 %v833, %v994
      %v1042 = vadd.f32 %v836, %v997
      %v1043 = vadd.f32 %v839, %v1000
      %v1044 = vadd.f32 %v842, %v1003
      %v1045 = vadd.f32 %v845, %v1006
      %v1046 = vadd.f32 %v848, %v1009
      %v1047 = vadd.f32 %v851, %v1012
      %v1048 = vadd.f32 %v854, %v1015
      %v1049 = vld [vmem:[%s442] sm:$0xff]
      %v1050 = vld [vmem:[%s442 + $0x8] sm:$0xff]
      %v1051 = vld [vmem:[%s442 + $0x18] sm:$0xff]
      %v1052 = vld [vmem:[%s442 + $0x20] sm:$0xff]
      %v1053 = vld [vmem:[%s442 + $0x30] sm:$0xff]
      %v1054 = vld [vmem:[%s442 + $0x38] sm:$0xff]
      %v1055 = vld [vmem:[%s442 + $0x48] sm:$0xff]
      %v1056 = vld [vmem:[%s442 + $0x50] sm:$0xff]
      %v1057 = vld [vmem:[%s442 + $0x60] sm:$0xff]
      %v1058 = vld [vmem:[%s442 + $0x68] sm:$0xff]
      %v1059 = vld [vmem:[%s442 + $0x78] sm:$0xff]
      %v1060 = vld [vmem:[%s442 + $0x80] sm:$0xff]
      %v1061 = vld [vmem:[%s442 + $0x90] sm:$0xff]
      %v1062 = vld [vmem:[%s442 + $0x98] sm:$0xff]
      %v1063 = vld [vmem:[%s442 + $0xa8] sm:$0xff]
      %v1064 = vld [vmem:[%s442 + $0xb0] sm:$0xff]
      %v1065 = vld [vmem:[%s442 + $0xc0] sm:$0xff]
      %v1066 = vld [vmem:[%s442 + $0xc8] sm:$0xff]
      %v1067 = vld [vmem:[%s442 + $0xd8] sm:$0xff]
      %v1068 = vld [vmem:[%s442 + $0xe0] sm:$0xff]
      %v1069 = vld [vmem:[%s442 + $0xf0] sm:$0xff]
      %v1070 = vld [vmem:[%s442 + $0xf8] sm:$0xff]
      %v1071 = vld [vmem:[%s442 + $0x108] sm:$0xff]
      %v1072 = vld [vmem:[%s442 + $0x110] sm:$0xff]
      %v1073 = vld [vmem:[%s442 + $0x120] sm:$0xff]
      %v1074 = vld [vmem:[%s442 + $0x128] sm:$0xff]
      %v1075 = vld [vmem:[%s442 + $0x138] sm:$0xff]
      %v1076 = vld [vmem:[%s442 + $0x140] sm:$0xff]
      %v1077 = vld [vmem:[%s442 + $0x150] sm:$0xff]
      %v1078 = vld [vmem:[%s442 + $0x158] sm:$0xff]
      %v1079 = vld [vmem:[%s442 + $0x168] sm:$0xff]
      %v1080 = vld [vmem:[%s442 + $0x170] sm:$0xff]
      %v1081 = vld [vmem:[%s3 + $0x180] sm:$0xff]
      %v1082 = vld [vmem:[%s3 + $0x188] sm:$0xff]
      %v1083 = vld [vmem:[%s3 + $0x190] sm:$0xff]
      %v1084 = vld [vmem:[%s3 + $0x198] sm:$0xff]
      %v1085 = vld [vmem:[%s3 + $0x1a0] sm:$0xff]
      %v1086 = vld [vmem:[%s3 + $0x1a8] sm:$0xff]
      %v1087 = vld [vmem:[%s3 + $0x1b0] sm:$0xff]
      %v1088 = vld [vmem:[%s3 + $0x1b8] sm:$0xff]
      %v1089 = vld [vmem:[%s3 + $0x1c0] sm:$0xff]
      %v1090 = vld [vmem:[%s3 + $0x1c8] sm:$0xff]
      %v1091 = vld [vmem:[%s3 + $0x1d0] sm:$0xff]
      %v1092 = vld [vmem:[%s3 + $0x1d8] sm:$0xff]
      %v1093 = vld [vmem:[%s3 + $0x1e0] sm:$0xff]
      %v1094 = vld [vmem:[%s3 + $0x1e8] sm:$0xff]
      %v1095 = vld [vmem:[%s3 + $0x1f0] sm:$0xff]
      %v1096 = vld [vmem:[%s3 + $0x1f8] sm:$0xff]
      %1097 = vmatpush.msra.mxu0 %v1096
      %1098 = vmatpush.msra.mxu0 %v1095
      %1099 = vmatpush.msra.mxu0 %v1094
      %1100 = vmatpush.msra.mxu0 %v1093
      %1101 = vmatpush.msra.mxu0 %v1092
      %1102 = vmatpush.msra.mxu0 %v1091
      %1103 = vmatpush.msra.mxu0 %v1090
      %1104 = vmatpush.msra.mxu0 %v1089
      %1105 = vmatpush.msra.mxu0 %v1088
      %1106 = vmatpush.msra.mxu0 %v1087
      %1107 = vmatpush.msra.mxu0 %v1086
      %1108 = vmatpush.msra.mxu0 %v1085
      %1109 = vmatpush.msra.mxu0 %v1084
      %1110 = vmatpush.msra.mxu0 %v1083
      %1111 = vmatpush.msra.mxu0 %v1082
      %1112 = vmatpush.msra.mxu0 %v1081
      %1113 = vmatmul.f32.gmra.mxu0 %v1049
      %v1114 = vpop.f32.mrf.mxu0
      %v1115 = vadd.f32 0.0, %v1114
      %1116 = vmatmul.f32.gmra.mxu0 %v1050
      %v1117 = vpop.f32.mrf.mxu0
      %v1118 = vadd.f32 0.0, %v1117
      %1119 = vmatmul.f32.gmra.mxu0 %v1051
      %v1120 = vpop.f32.mrf.mxu0
      %v1121 = vadd.f32 0.0, %v1120
      %1122 = vmatmul.f32.gmra.mxu0 %v1052
      %v1123 = vpop.f32.mrf.mxu0
      %v1124 = vadd.f32 0.0, %v1123
      %1125 = vmatmul.f32.gmra.mxu0 %v1053
      %v1126 = vpop.f32.mrf.mxu0
      %v1127 = vadd.f32 0.0, %v1126
      %1128 = vmatmul.f32.gmra.mxu0 %v1054
      %v1129 = vpop.f32.mrf.mxu0
      %v1130 = vadd.f32 0.0, %v1129
      %1131 = vmatmul.f32.gmra.mxu0 %v1055
      %v1132 = vpop.f32.mrf.mxu0
      %v1133 = vadd.f32 0.0, %v1132
      %1134 = vmatmul.f32.gmra.mxu0 %v1056
      %v1135 = vpop.f32.mrf.mxu0
      %v1136 = vadd.f32 0.0, %v1135
      %1137 = vmatmul.f32.gmra.mxu0 %v1057
      %v1138 = vpop.f32.mrf.mxu0
      %v1139 = vadd.f32 0.0, %v1138
      %1140 = vmatmul.f32.gmra.mxu0 %v1058
      %v1141 = vpop.f32.mrf.mxu0
      %v1142 = vadd.f32 0.0, %v1141
      %1143 = vmatmul.f32.gmra.mxu0 %v1059
      %v1144 = vpop.f32.mrf.mxu0
      %v1145 = vadd.f32 0.0, %v1144
      %1146 = vmatmul.f32.gmra.mxu0 %v1060
      %v1147 = vpop.f32.mrf.mxu0
      %v1148 = vadd.f32 0.0, %v1147
      %1149 = vmatmul.f32.gmra.mxu0 %v1061
      %v1150 = vpop.f32.mrf.mxu0
      %v1151 = vadd.f32 0.0, %v1150
      %1152 = vmatmul.f32.gmra.mxu0 %v1062
      %v1153 = vpop.f32.mrf.mxu0
      %v1154 = vadd.f32 0.0, %v1153
      %1155 = vmatmul.f32.gmra.mxu0 %v1063
      %v1156 = vpop.f32.mrf.mxu0
      %v1157 = vadd.f32 0.0, %v1156
      %1158 = vmatmul.f32.gmra.mxu0 %v1064
      %v1159 = vpop.f32.mrf.mxu0
      %v1160 = vadd.f32 0.0, %v1159
      %1161 = vmatmul.f32.gmra.mxu0 %v1065
      %v1162 = vpop.f32.mrf.mxu0
      %v1163 = vadd.f32 0.0, %v1162
      %1164 = vmatmul.f32.gmra.mxu0 %v1066
      %v1165 = vpop.f32.mrf.mxu0
      %v1166 = vadd.f32 0.0, %v1165
      %1167 = vmatmul.f32.gmra.mxu0 %v1067
      %v1168 = vpop.f32.mrf.mxu0
      %v1169 = vadd.f32 0.0, %v1168
      %1170 = vmatmul.f32.gmra.mxu0 %v1068
      %v1171 = vpop.f32.mrf.mxu0
      %v1172 = vadd.f32 0.0, %v1171
      %1173 = vmatmul.f32.gmra.mxu0 %v1069
      %v1174 = vpop.f32.mrf.mxu0
      %v1175 = vadd.f32 0.0, %v1174
      %1176 = vmatmul.f32.gmra.mxu0 %v1070
      %v1177 = vpop.f32.mrf.mxu0
      %v1178 = vadd.f32 0.0, %v1177
      %1179 = vmatmul.f32.gmra.mxu0 %v1071
      %v1180 = vpop.f32.mrf.mxu0
      %v1181 = vadd.f32 0.0, %v1180
      %1182 = vmatmul.f32.gmra.mxu0 %v1072
      %v1183 = vpop.f32.mrf.mxu0
      %v1184 = vadd.f32 0.0, %v1183
      %1185 = vmatmul.f32.gmra.mxu0 %v1073
      %v1186 = vpop.f32.mrf.mxu0
      %v1187 = vadd.f32 0.0, %v1186
      %1188 = vmatmul.f32.gmra.mxu0 %v1074
      %v1189 = vpop.f32.mrf.mxu0
      %v1190 = vadd.f32 0.0, %v1189
      %1191 = vmatmul.f32.gmra.mxu0 %v1075
      %v1192 = vpop.f32.mrf.mxu0
      %v1193 = vadd.f32 0.0, %v1192
      %1194 = vmatmul.f32.gmra.mxu0 %v1076
      %v1195 = vpop.f32.mrf.mxu0
      %v1196 = vadd.f32 0.0, %v1195
      %1197 = vmatmul.f32.gmra.mxu0 %v1077
      %v1198 = vpop.f32.mrf.mxu0
      %v1199 = vadd.f32 0.0, %v1198
      %1200 = vmatmul.f32.gmra.mxu0 %v1078
      %v1201 = vpop.f32.mrf.mxu0
      %v1202 = vadd.f32 0.0, %v1201
      %1203 = vmatmul.f32.gmra.mxu0 %v1079
      %v1204 = vpop.f32.mrf.mxu0
      %v1205 = vadd.f32 0.0, %v1204
      %1206 = vmatmul.f32.gmra.mxu0 %v1080
      %v1207 = vpop.f32.mrf.mxu0
      %v1208 = vadd.f32 0.0, %v1207
      %1209 = vdwg.mxu0
      %v1210 = vadd.f32 %v1017, %v1115
      %v1211 = vadd.f32 %v1018, %v1118
      %v1212 = vadd.f32 %v1019, %v1121
      %v1213 = vadd.f32 %v1020, %v1124
      %v1214 = vadd.f32 %v1021, %v1127
      %v1215 = vadd.f32 %v1022, %v1130
      %v1216 = vadd.f32 %v1023, %v1133
      %v1217 = vadd.f32 %v1024, %v1136
      %v1218 = vadd.f32 %v1025, %v1139
      %v1219 = vadd.f32 %v1026, %v1142
      %v1220 = vadd.f32 %v1027, %v1145
      %v1221 = vadd.f32 %v1028, %v1148
      %v1222 = vadd.f32 %v1029, %v1151
      %v1223 = vadd.f32 %v1030, %v1154
      %v1224 = vadd.f32 %v1031, %v1157
      %v1225 = vadd.f32 %v1032, %v1160
      %v1226 = vadd.f32 %v1033, %v1163
      %v1227 = vadd.f32 %v1034, %v1166
      %v1228 = vadd.f32 %v1035, %v1169
      %v1229 = vadd.f32 %v1036, %v1172
      %v1230 = vadd.f32 %v1037, %v1175
      %v1231 = vadd.f32 %v1038, %v1178
      %v1232 = vadd.f32 %v1039, %v1181
      %v1233 = vadd.f32 %v1040, %v1184
      %v1234 = vadd.f32 %v1041, %v1187
      %v1235 = vadd.f32 %v1042, %v1190
      %v1236 = vadd.f32 %v1043, %v1193
      %v1237 = vadd.f32 %v1044, %v1196
      %v1238 = vadd.f32 %v1045, %v1199
      %v1239 = vadd.f32 %v1046, %v1202
      %v1240 = vadd.f32 %v1047, %v1205
      %v1241 = vadd.f32 %v1048, %v1208
      %v1242 = vld [vmem:[%s442 + $0x1] sm:$0xff]
      %v1243 = vld [vmem:[%s442 + $0x9] sm:$0xff]
      %v1244 = vld [vmem:[%s442 + $0x19] sm:$0xff]
      %v1245 = vld [vmem:[%s442 + $0x21] sm:$0xff]
      %v1246 = vld [vmem:[%s442 + $0x31] sm:$0xff]
      %v1247 = vld [vmem:[%s442 + $0x39] sm:$0xff]
      %v1248 = vld [vmem:[%s442 + $0x49] sm:$0xff]
      %v1249 = vld [vmem:[%s442 + $0x51] sm:$0xff]
      %v1250 = vld [vmem:[%s442 + $0x61] sm:$0xff]
      %v1251 = vld [vmem:[%s442 + $0x69] sm:$0xff]
      %v1252 = vld [vmem:[%s442 + $0x79] sm:$0xff]
      %v1253 = vld [vmem:[%s442 + $0x81] sm:$0xff]
      %v1254 = vld [vmem:[%s442 + $0x91] sm:$0xff]
      %v1255 = vld [vmem:[%s442 + $0x99] sm:$0xff]
      %v1256 = vld [vmem:[%s442 + $0xa9] sm:$0xff]
      %v1257 = vld [vmem:[%s442 + $0xb1] sm:$0xff]
      %v1258 = vld [vmem:[%s442 + $0xc1] sm:$0xff]
      %v1259 = vld [vmem:[%s442 + $0xc9] sm:$0xff]
      %v1260 = vld [vmem:[%s442 + $0xd9] sm:$0xff]
      %v1261 = vld [vmem:[%s442 + $0xe1] sm:$0xff]
      %v1262 = vld [vmem:[%s442 + $0xf1] sm:$0xff]
      %v1263 = vld [vmem:[%s442 + $0xf9] sm:$0xff]
      %v1264 = vld [vmem:[%s442 + $0x109] sm:$0xff]
      %v1265 = vld [vmem:[%s442 + $0x111] sm:$0xff]
      %v1266 = vld [vmem:[%s442 + $0x121] sm:$0xff]
      %v1267 = vld [vmem:[%s442 + $0x129] sm:$0xff]
      %v1268 = vld [vmem:[%s442 + $0x139] sm:$0xff]
      %v1269 = vld [vmem:[%s442 + $0x141] sm:$0xff]
      %v1270 = vld [vmem:[%s442 + $0x151] sm:$0xff]
      %v1271 = vld [vmem:[%s442 + $0x159] sm:$0xff]
      %v1272 = vld [vmem:[%s442 + $0x169] sm:$0xff]
      %v1273 = vld [vmem:[%s442 + $0x171] sm:$0xff]
      %v1274 = vld [vmem:[%s3 + $0x200] sm:$0xff]
      %v1275 = vld [vmem:[%s3 + $0x208] sm:$0xff]
      %v1276 = vld [vmem:[%s3 + $0x210] sm:$0xff]
      %v1277 = vld [vmem:[%s3 + $0x218] sm:$0xff]
      %v1278 = vld [vmem:[%s3 + $0x220] sm:$0xff]
      %v1279 = vld [vmem:[%s3 + $0x228] sm:$0xff]
      %v1280 = vld [vmem:[%s3 + $0x230] sm:$0xff]
      %v1281 = vld [vmem:[%s3 + $0x238] sm:$0xff]
      %v1282 = vld [vmem:[%s3 + $0x240] sm:$0xff]
      %v1283 = vld [vmem:[%s3 + $0x248] sm:$0xff]
      %v1284 = vld [vmem:[%s3 + $0x250] sm:$0xff]
      %v1285 = vld [vmem:[%s3 + $0x258] sm:$0xff]
      %v1286 = vld [vmem:[%s3 + $0x260] sm:$0xff]
      %v1287 = vld [vmem:[%s3 + $0x268] sm:$0xff]
      %v1288 = vld [vmem:[%s3 + $0x270] sm:$0xff]
      %v1289 = vld [vmem:[%s3 + $0x278] sm:$0xff]
      %1290 = vmatpush.msra.mxu0 %v1289
      %1291 = vmatpush.msra.mxu0 %v1288
      %1292 = vmatpush.msra.mxu0 %v1287
      %1293 = vmatpush.msra.mxu0 %v1286
      %1294 = vmatpush.msra.mxu0 %v1285
      %1295 = vmatpush.msra.mxu0 %v1284
      %1296 = vmatpush.msra.mxu0 %v1283
      %1297 = vmatpush.msra.mxu0 %v1282
      %1298 = vmatpush.msra.mxu0 %v1281
      %1299 = vmatpush.msra.mxu0 %v1280
      %1300 = vmatpush.msra.mxu0 %v1279
      %1301 = vmatpush.msra.mxu0 %v1278
      %1302 = vmatpush.msra.mxu0 %v1277
      %1303 = vmatpush.msra.mxu0 %v1276
      %1304 = vmatpush.msra.mxu0 %v1275
      %1305 = vmatpush.msra.mxu0 %v1274
      %1306 = vmatmul.f32.gmra.mxu0 %v1242
      %v1307 = vpop.f32.mrf.mxu0
      %v1308 = vadd.f32 0.0, %v1307
      %1309 = vmatmul.f32.gmra.mxu0 %v1243
      %v1310 = vpop.f32.mrf.mxu0
      %v1311 = vadd.f32 0.0, %v1310
      %1312 = vmatmul.f32.gmra.mxu0 %v1244
      %v1313 = vpop.f32.mrf.mxu0
      %v1314 = vadd.f32 0.0, %v1313
      %1315 = vmatmul.f32.gmra.mxu0 %v1245
      %v1316 = vpop.f32.mrf.mxu0
      %v1317 = vadd.f32 0.0, %v1316
      %1318 = vmatmul.f32.gmra.mxu0 %v1246
      %v1319 = vpop.f32.mrf.mxu0
      %v1320 = vadd.f32 0.0, %v1319
      %1321 = vmatmul.f32.gmra.mxu0 %v1247
      %v1322 = vpop.f32.mrf.mxu0
      %v1323 = vadd.f32 0.0, %v1322
      %1324 = vmatmul.f32.gmra.mxu0 %v1248
      %v1325 = vpop.f32.mrf.mxu0
      %v1326 = vadd.f32 0.0, %v1325
      %1327 = vmatmul.f32.gmra.mxu0 %v1249
      %v1328 = vpop.f32.mrf.mxu0
      %v1329 = vadd.f32 0.0, %v1328
      %1330 = vmatmul.f32.gmra.mxu0 %v1250
      %v1331 = vpop.f32.mrf.mxu0
      %v1332 = vadd.f32 0.0, %v1331
      %1333 = vmatmul.f32.gmra.mxu0 %v1251
      %v1334 = vpop.f32.mrf.mxu0
      %v1335 = vadd.f32 0.0, %v1334
      %1336 = vmatmul.f32.gmra.mxu0 %v1252
      %v1337 = vpop.f32.mrf.mxu0
      %v1338 = vadd.f32 0.0, %v1337
      %1339 = vmatmul.f32.gmra.mxu0 %v1253
      %v1340 = vpop.f32.mrf.mxu0
      %v1341 = vadd.f32 0.0, %v1340
      %1342 = vmatmul.f32.gmra.mxu0 %v1254
      %v1343 = vpop.f32.mrf.mxu0
      %v1344 = vadd.f32 0.0, %v1343
      %1345 = vmatmul.f32.gmra.mxu0 %v1255
      %v1346 = vpop.f32.mrf.mxu0
      %v1347 = vadd.f32 0.0, %v1346
      %1348 = vmatmul.f32.gmra.mxu0 %v1256
      %v1349 = vpop.f32.mrf.mxu0
      %v1350 = vadd.f32 0.0, %v1349
      %1351 = vmatmul.f32.gmra.mxu0 %v1257
      %v1352 = vpop.f32.mrf.mxu0
      %v1353 = vadd.f32 0.0, %v1352
      %1354 = vmatmul.f32.gmra.mxu0 %v1258
      %v1355 = vpop.f32.mrf.mxu0
      %v1356 = vadd.f32 0.0, %v1355
      %1357 = vmatmul.f32.gmra.mxu0 %v1259
      %v1358 = vpop.f32.mrf.mxu0
      %v1359 = vadd.f32 0.0, %v1358
      %1360 = vmatmul.f32.gmra.mxu0 %v1260
      %v1361 = vpop.f32.mrf.mxu0
      %v1362 = vadd.f32 0.0, %v1361
      %1363 = vmatmul.f32.gmra.mxu0 %v1261
      %v1364 = vpop.f32.mrf.mxu0
      %v1365 = vadd.f32 0.0, %v1364
      %1366 = vmatmul.f32.gmra.mxu0 %v1262
      %v1367 = vpop.f32.mrf.mxu0
      %v1368 = vadd.f32 0.0, %v1367
      %1369 = vmatmul.f32.gmra.mxu0 %v1263
      %v1370 = vpop.f32.mrf.mxu0
      %v1371 = vadd.f32 0.0, %v1370
      %1372 = vmatmul.f32.gmra.mxu0 %v1264
      %v1373 = vpop.f32.mrf.mxu0
      %v1374 = vadd.f32 0.0, %v1373
      %1375 = vmatmul.f32.gmra.mxu0 %v1265
      %v1376 = vpop.f32.mrf.mxu0
      %v1377 = vadd.f32 0.0, %v1376
      %1378 = vmatmul.f32.gmra.mxu0 %v1266
      %v1379 = vpop.f32.mrf.mxu0
      %v1380 = vadd.f32 0.0, %v1379
      %1381 = vmatmul.f32.gmra.mxu0 %v1267
      %v1382 = vpop.f32.mrf.mxu0
      %v1383 = vadd.f32 0.0, %v1382
      %1384 = vmatmul.f32.gmra.mxu0 %v1268
      %v1385 = vpop.f32.mrf.mxu0
      %v1386 = vadd.f32 0.0, %v1385
      %1387 = vmatmul.f32.gmra.mxu0 %v1269
      %v1388 = vpop.f32.mrf.mxu0
      %v1389 = vadd.f32 0.0, %v1388
      %1390 = vmatmul.f32.gmra.mxu0 %v1270
      %v1391 = vpop.f32.mrf.mxu0
      %v1392 = vadd.f32 0.0, %v1391
      %1393 = vmatmul.f32.gmra.mxu0 %v1271
      %v1394 = vpop.f32.mrf.mxu0
      %v1395 = vadd.f32 0.0, %v1394
      %1396 = vmatmul.f32.gmra.mxu0 %v1272
      %v1397 = vpop.f32.mrf.mxu0
      %v1398 = vadd.f32 0.0, %v1397
      %1399 = vmatmul.f32.gmra.mxu0 %v1273
      %v1400 = vpop.f32.mrf.mxu0
      %v1401 = vadd.f32 0.0, %v1400
      %1402 = vdwg.mxu0
      %v1403 = vadd.f32 %v1210, %v1308
      %v1404 = vadd.f32 %v1211, %v1311
      %v1405 = vadd.f32 %v1212, %v1314
      %v1406 = vadd.f32 %v1213, %v1317
      %v1407 = vadd.f32 %v1214, %v1320
      %v1408 = vadd.f32 %v1215, %v1323
      %v1409 = vadd.f32 %v1216, %v1326
      %v1410 = vadd.f32 %v1217, %v1329
      %v1411 = vadd.f32 %v1218, %v1332
      %v1412 = vadd.f32 %v1219, %v1335
      %v1413 = vadd.f32 %v1220, %v1338
      %v1414 = vadd.f32 %v1221, %v1341
      %v1415 = vadd.f32 %v1222, %v1344
      %v1416 = vadd.f32 %v1223, %v1347
      %v1417 = vadd.f32 %v1224, %v1350
      %v1418 = vadd.f32 %v1225, %v1353
      %v1419 = vadd.f32 %v1226, %v1356
      %v1420 = vadd.f32 %v1227, %v1359
      %v1421 = vadd.f32 %v1228, %v1362
      %v1422 = vadd.f32 %v1229, %v1365
      %v1423 = vadd.f32 %v1230, %v1368
      %v1424 = vadd.f32 %v1231, %v1371
      %v1425 = vadd.f32 %v1232, %v1374
      %v1426 = vadd.f32 %v1233, %v1377
      %v1427 = vadd.f32 %v1234, %v1380
      %v1428 = vadd.f32 %v1235, %v1383
      %v1429 = vadd.f32 %v1236, %v1386
      %v1430 = vadd.f32 %v1237, %v1389
      %v1431 = vadd.f32 %v1238, %v1392
      %v1432 = vadd.f32 %v1239, %v1395
      %v1433 = vadd.f32 %v1240, %v1398
      %v1434 = vadd.f32 %v1241, %v1401
      %v1435 = vld [vmem:[%s442 + $0x2] sm:$0xff]
      %v1436 = vld [vmem:[%s442 + $0xa] sm:$0xff]
      %v1437 = vld [vmem:[%s442 + $0x1a] sm:$0xff]
      %v1438 = vld [vmem:[%s442 + $0x22] sm:$0xff]
      %v1439 = vld [vmem:[%s442 + $0x32] sm:$0xff]
      %v1440 = vld [vmem:[%s442 + $0x3a] sm:$0xff]
      %v1441 = vld [vmem:[%s442 + $0x4a] sm:$0xff]
      %v1442 = vld [vmem:[%s442 + $0x52] sm:$0xff]
      %v1443 = vld [vmem:[%s442 + $0x62] sm:$0xff]
      %v1444 = vld [vmem:[%s442 + $0x6a] sm:$0xff]
      %v1445 = vld [vmem:[%s442 + $0x7a] sm:$0xff]
      %v1446 = vld [vmem:[%s442 + $0x82] sm:$0xff]
      %v1447 = vld [vmem:[%s442 + $0x92] sm:$0xff]
      %v1448 = vld [vmem:[%s442 + $0x9a] sm:$0xff]
      %v1449 = vld [vmem:[%s442 + $0xaa] sm:$0xff]
      %v1450 = vld [vmem:[%s442 + $0xb2] sm:$0xff]
      %v1451 = vld [vmem:[%s442 + $0xc2] sm:$0xff]
      %v1452 = vld [vmem:[%s442 + $0xca] sm:$0xff]
      %v1453 = vld [vmem:[%s442 + $0xda] sm:$0xff]
      %v1454 = vld [vmem:[%s442 + $0xe2] sm:$0xff]
      %v1455 = vld [vmem:[%s442 + $0xf2] sm:$0xff]
      %v1456 = vld [vmem:[%s442 + $0xfa] sm:$0xff]
      %v1457 = vld [vmem:[%s442 + $0x10a] sm:$0xff]
      %v1458 = vld [vmem:[%s442 + $0x112] sm:$0xff]
      %v1459 = vld [vmem:[%s442 + $0x122] sm:$0xff]
      %v1460 = vld [vmem:[%s442 + $0x12a] sm:$0xff]
      %v1461 = vld [vmem:[%s442 + $0x13a] sm:$0xff]
      %v1462 = vld [vmem:[%s442 + $0x142] sm:$0xff]
      %v1463 = vld [vmem:[%s442 + $0x152] sm:$0xff]
      %v1464 = vld [vmem:[%s442 + $0x15a] sm:$0xff]
      %v1465 = vld [vmem:[%s442 + $0x16a] sm:$0xff]
      %v1466 = vld [vmem:[%s442 + $0x172] sm:$0xff]
      %v1467 = vld [vmem:[%s3 + $0x280] sm:$0xff]
      %v1468 = vld [vmem:[%s3 + $0x288] sm:$0xff]
      %v1469 = vld [vmem:[%s3 + $0x290] sm:$0xff]
      %v1470 = vld [vmem:[%s3 + $0x298] sm:$0xff]
      %v1471 = vld [vmem:[%s3 + $0x2a0] sm:$0xff]
      %v1472 = vld [vmem:[%s3 + $0x2a8] sm:$0xff]
      %v1473 = vld [vmem:[%s3 + $0x2b0] sm:$0xff]
      %v1474 = vld [vmem:[%s3 + $0x2b8] sm:$0xff]
      %v1475 = vld [vmem:[%s3 + $0x2c0] sm:$0xff]
      %v1476 = vld [vmem:[%s3 + $0x2c8] sm:$0xff]
      %v1477 = vld [vmem:[%s3 + $0x2d0] sm:$0xff]
      %v1478 = vld [vmem:[%s3 + $0x2d8] sm:$0xff]
      %v1479 = vld [vmem:[%s3 + $0x2e0] sm:$0xff]
      %v1480 = vld [vmem:[%s3 + $0x2e8] sm:$0xff]
      %v1481 = vld [vmem:[%s3 + $0x2f0] sm:$0xff]
      %v1482 = vld [vmem:[%s3 + $0x2f8] sm:$0xff]
      %1483 = vmatpush.msra.mxu0 %v1482
      %1484 = vmatpush.msra.mxu0 %v1481
      %1485 = vmatpush.msra.mxu0 %v1480
      %1486 = vmatpush.msra.mxu0 %v1479
      %1487 = vmatpush.msra.mxu0 %v1478
      %1488 = vmatpush.msra.mxu0 %v1477
      %1489 = vmatpush.msra.mxu0 %v1476
      %1490 = vmatpush.msra.mxu0 %v1475
      %1491 = vmatpush.msra.mxu0 %v1474
      %1492 = vmatpush.msra.mxu0 %v1473
      %1493 = vmatpush.msra.mxu0 %v1472
      %1494 = vmatpush.msra.mxu0 %v1471
      %1495 = vmatpush.msra.mxu0 %v1470
      %1496 = vmatpush.msra.mxu0 %v1469
      %1497 = vmatpush.msra.mxu0 %v1468
      %1498 = vmatpush.msra.mxu0 %v1467
      %1499 = vmatmul.f32.gmra.mxu0 %v1435
      %v1500 = vpop.f32.mrf.mxu0
      %v1501 = vadd.f32 0.0, %v1500
      %1502 = vmatmul.f32.gmra.mxu0 %v1436
      %v1503 = vpop.f32.mrf.mxu0
      %v1504 = vadd.f32 0.0, %v1503
      %1505 = vmatmul.f32.gmra.mxu0 %v1437
      %v1506 = vpop.f32.mrf.mxu0
      %v1507 = vadd.f32 0.0, %v1506
      %1508 = vmatmul.f32.gmra.mxu0 %v1438
      %v1509 = vpop.f32.mrf.mxu0
      %v1510 = vadd.f32 0.0, %v1509
      %1511 = vmatmul.f32.gmra.mxu0 %v1439
      %v1512 = vpop.f32.mrf.mxu0
      %v1513 = vadd.f32 0.0, %v1512
      %1514 = vmatmul.f32.gmra.mxu0 %v1440
      %v1515 = vpop.f32.mrf.mxu0
      %v1516 = vadd.f32 0.0, %v1515
      %1517 = vmatmul.f32.gmra.mxu0 %v1441
      %v1518 = vpop.f32.mrf.mxu0
      %v1519 = vadd.f32 0.0, %v1518
      %1520 = vmatmul.f32.gmra.mxu0 %v1442
      %v1521 = vpop.f32.mrf.mxu0
      %v1522 = vadd.f32 0.0, %v1521
      %1523 = vmatmul.f32.gmra.mxu0 %v1443
      %v1524 = vpop.f32.mrf.mxu0
      %v1525 = vadd.f32 0.0, %v1524
      %1526 = vmatmul.f32.gmra.mxu0 %v1444
      %v1527 = vpop.f32.mrf.mxu0
      %v1528 = vadd.f32 0.0, %v1527
      %1529 = vmatmul.f32.gmra.mxu0 %v1445
      %v1530 = vpop.f32.mrf.mxu0
      %v1531 = vadd.f32 0.0, %v1530
      %1532 = vmatmul.f32.gmra.mxu0 %v1446
      %v1533 = vpop.f32.mrf.mxu0
      %v1534 = vadd.f32 0.0, %v1533
      %1535 = vmatmul.f32.gmra.mxu0 %v1447
      %v1536 = vpop.f32.mrf.mxu0
      %v1537 = vadd.f32 0.0, %v1536
      %1538 = vmatmul.f32.gmra.mxu0 %v1448
      %v1539 = vpop.f32.mrf.mxu0
      %v1540 = vadd.f32 0.0, %v1539
      %1541 = vmatmul.f32.gmra.mxu0 %v1449
      %v1542 = vpop.f32.mrf.mxu0
      %v1543 = vadd.f32 0.0, %v1542
      %1544 = vmatmul.f32.gmra.mxu0 %v1450
      %v1545 = vpop.f32.mrf.mxu0
      %v1546 = vadd.f32 0.0, %v1545
      %1547 = vmatmul.f32.gmra.mxu0 %v1451
      %v1548 = vpop.f32.mrf.mxu0
      %v1549 = vadd.f32 0.0, %v1548
      %1550 = vmatmul.f32.gmra.mxu0 %v1452
      %v1551 = vpop.f32.mrf.mxu0
      %v1552 = vadd.f32 0.0, %v1551
      %1553 = vmatmul.f32.gmra.mxu0 %v1453
      %v1554 = vpop.f32.mrf.mxu0
      %v1555 = vadd.f32 0.0, %v1554
      %1556 = vmatmul.f32.gmra.mxu0 %v1454
      %v1557 = vpop.f32.mrf.mxu0
      %v1558 = vadd.f32 0.0, %v1557
      %1559 = vmatmul.f32.gmra.mxu0 %v1455
      %v1560 = vpop.f32.mrf.mxu0
      %v1561 = vadd.f32 0.0, %v1560
      %1562 = vmatmul.f32.gmra.mxu0 %v1456
      %v1563 = vpop.f32.mrf.mxu0
      %v1564 = vadd.f32 0.0, %v1563
      %1565 = vmatmul.f32.gmra.mxu0 %v1457
      %v1566 = vpop.f32.mrf.mxu0
      %v1567 = vadd.f32 0.0, %v1566
      %1568 = vmatmul.f32.gmra.mxu0 %v1458
      %v1569 = vpop.f32.mrf.mxu0
      %v1570 = vadd.f32 0.0, %v1569
      %1571 = vmatmul.f32.gmra.mxu0 %v1459
      %v1572 = vpop.f32.mrf.mxu0
      %v1573 = vadd.f32 0.0, %v1572
      %1574 = vmatmul.f32.gmra.mxu0 %v1460
      %v1575 = vpop.f32.mrf.mxu0
      %v1576 = vadd.f32 0.0, %v1575
      %1577 = vmatmul.f32.gmra.mxu0 %v1461
      %v1578 = vpop.f32.mrf.mxu0
      %v1579 = vadd.f32 0.0, %v1578
      %1580 = vmatmul.f32.gmra.mxu0 %v1462
      %v1581 = vpop.f32.mrf.mxu0
      %v1582 = vadd.f32 0.0, %v1581
      %1583 = vmatmul.f32.gmra.mxu0 %v1463
      %v1584 = vpop.f32.mrf.mxu0
      %v1585 = vadd.f32 0.0, %v1584
      %1586 = vmatmul.f32.gmra.mxu0 %v1464
      %v1587 = vpop.f32.mrf.mxu0
      %v1588 = vadd.f32 0.0, %v1587
      %1589 = vmatmul.f32.gmra.mxu0 %v1465
      %v1590 = vpop.f32.mrf.mxu0
      %v1591 = vadd.f32 0.0, %v1590
      %1592 = vmatmul.f32.gmra.mxu0 %v1466
      %v1593 = vpop.f32.mrf.mxu0
      %v1594 = vadd.f32 0.0, %v1593
      %1595 = vdwg.mxu0
      %v1596 = vadd.f32 %v1403, %v1501
      %v1597 = vadd.f32 %v1404, %v1504
      %v1598 = vadd.f32 %v1405, %v1507
      %v1599 = vadd.f32 %v1406, %v1510
      %v1600 = vadd.f32 %v1407, %v1513
      %v1601 = vadd.f32 %v1408, %v1516
      %v1602 = vadd.f32 %v1409, %v1519
      %v1603 = vadd.f32 %v1410, %v1522
      %v1604 = vadd.f32 %v1411, %v1525
      %v1605 = vadd.f32 %v1412, %v1528
      %v1606 = vadd.f32 %v1413, %v1531
      %v1607 = vadd.f32 %v1414, %v1534
      %v1608 = vadd.f32 %v1415, %v1537
      %v1609 = vadd.f32 %v1416, %v1540
      %v1610 = vadd.f32 %v1417, %v1543
      %v1611 = vadd.f32 %v1418, %v1546
      %v1612 = vadd.f32 %v1419, %v1549
      %v1613 = vadd.f32 %v1420, %v1552
      %v1614 = vadd.f32 %v1421, %v1555
      %v1615 = vadd.f32 %v1422, %v1558
      %v1616 = vadd.f32 %v1423, %v1561
      %v1617 = vadd.f32 %v1424, %v1564
      %v1618 = vadd.f32 %v1425, %v1567
      %v1619 = vadd.f32 %v1426, %v1570
      %v1620 = vadd.f32 %v1427, %v1573
      %v1621 = vadd.f32 %v1428, %v1576
      %v1622 = vadd.f32 %v1429, %v1579
      %v1623 = vadd.f32 %v1430, %v1582
      %v1624 = vadd.f32 %v1431, %v1585
      %v1625 = vadd.f32 %v1432, %v1588
      %v1626 = vadd.f32 %v1433, %v1591
      %v1627 = vadd.f32 %v1434, %v1594
      %s1628 = scalar_lea.vmem [#allocation2], 48
      %v1629 = vld [vmem:[%s1628] sm:$0xff]
      %v1630 = vld [vmem:[%s1628 + $0x8] sm:$0xff]
      %v1631 = vld [vmem:[%s1628 + $0x18] sm:$0xff]
      %v1632 = vld [vmem:[%s1628 + $0x20] sm:$0xff]
      %v1633 = vld [vmem:[%s1628 + $0x30] sm:$0xff]
      %v1634 = vld [vmem:[%s1628 + $0x38] sm:$0xff]
      %v1635 = vld [vmem:[%s1628 + $0x48] sm:$0xff]
      %v1636 = vld [vmem:[%s1628 + $0x50] sm:$0xff]
      %v1637 = vld [vmem:[%s1628 + $0x60] sm:$0xff]
      %v1638 = vld [vmem:[%s1628 + $0x68] sm:$0xff]
      %v1639 = vld [vmem:[%s1628 + $0x78] sm:$0xff]
      %v1640 = vld [vmem:[%s1628 + $0x80] sm:$0xff]
      %v1641 = vld [vmem:[%s1628 + $0x90] sm:$0xff]
      %v1642 = vld [vmem:[%s1628 + $0x98] sm:$0xff]
      %v1643 = vld [vmem:[%s1628 + $0xa8] sm:$0xff]
      %v1644 = vld [vmem:[%s1628 + $0xb0] sm:$0xff]
      %v1645 = vld [vmem:[%s1628 + $0xc0] sm:$0xff]
      %v1646 = vld [vmem:[%s1628 + $0xc8] sm:$0xff]
      %v1647 = vld [vmem:[%s1628 + $0xd8] sm:$0xff]
      %v1648 = vld [vmem:[%s1628 + $0xe0] sm:$0xff]
      %v1649 = vld [vmem:[%s1628 + $0xf0] sm:$0xff]
      %v1650 = vld [vmem:[%s1628 + $0xf8] sm:$0xff]
      %v1651 = vld [vmem:[%s1628 + $0x108] sm:$0xff]
      %v1652 = vld [vmem:[%s1628 + $0x110] sm:$0xff]
      %v1653 = vld [vmem:[%s1628 + $0x120] sm:$0xff]
      %v1654 = vld [vmem:[%s1628 + $0x128] sm:$0xff]
      %v1655 = vld [vmem:[%s1628 + $0x138] sm:$0xff]
      %v1656 = vld [vmem:[%s1628 + $0x140] sm:$0xff]
      %v1657 = vld [vmem:[%s1628 + $0x150] sm:$0xff]
      %v1658 = vld [vmem:[%s1628 + $0x158] sm:$0xff]
      %v1659 = vld [vmem:[%s1628 + $0x168] sm:$0xff]
      %v1660 = vld [vmem:[%s1628 + $0x170] sm:$0xff]
      %v1661 = vld [vmem:[%s3 + $0x300] sm:$0xff]
      %v1662 = vld [vmem:[%s3 + $0x308] sm:$0xff]
      %v1663 = vld [vmem:[%s3 + $0x310] sm:$0xff]
      %v1664 = vld [vmem:[%s3 + $0x318] sm:$0xff]
      %v1665 = vld [vmem:[%s3 + $0x320] sm:$0xff]
      %v1666 = vld [vmem:[%s3 + $0x328] sm:$0xff]
      %v1667 = vld [vmem:[%s3 + $0x330] sm:$0xff]
      %v1668 = vld [vmem:[%s3 + $0x338] sm:$0xff]
      %v1669 = vld [vmem:[%s3 + $0x340] sm:$0xff]
      %v1670 = vld [vmem:[%s3 + $0x348] sm:$0xff]
      %v1671 = vld [vmem:[%s3 + $0x350] sm:$0xff]
      %v1672 = vld [vmem:[%s3 + $0x358] sm:$0xff]
      %v1673 = vld [vmem:[%s3 + $0x360] sm:$0xff]
      %v1674 = vld [vmem:[%s3 + $0x368] sm:$0xff]
      %v1675 = vld [vmem:[%s3 + $0x370] sm:$0xff]
      %v1676 = vld [vmem:[%s3 + $0x378] sm:$0xff]
      %1677 = vmatpush.msra.mxu0 %v1676
      %1678 = vmatpush.msra.mxu0 %v1675
      %1679 = vmatpush.msra.mxu0 %v1674
      %1680 = vmatpush.msra.mxu0 %v1673
      %1681 = vmatpush.msra.mxu0 %v1672
      %1682 = vmatpush.msra.mxu0 %v1671
      %1683 = vmatpush.msra.mxu0 %v1670
      %1684 = vmatpush.msra.mxu0 %v1669
      %1685 = vmatpush.msra.mxu0 %v1668
      %1686 = vmatpush.msra.mxu0 %v1667
      %1687 = vmatpush.msra.mxu0 %v1666
      %1688 = vmatpush.msra.mxu0 %v1665
      %1689 = vmatpush.msra.mxu0 %v1664
      %1690 = vmatpush.msra.mxu0 %v1663
      %1691 = vmatpush.msra.mxu0 %v1662
      %1692 = vmatpush.msra.mxu0 %v1661
      %1693 = vmatmul.f32.gmra.mxu0 %v1629
      %v1694 = vpop.f32.mrf.mxu0
      %v1695 = vadd.f32 0.0, %v1694
      %1696 = vmatmul.f32.gmra.mxu0 %v1630
      %v1697 = vpop.f32.mrf.mxu0
      %v1698 = vadd.f32 0.0, %v1697
      %1699 = vmatmul.f32.gmra.mxu0 %v1631
      %v1700 = vpop.f32.mrf.mxu0
      %v1701 = vadd.f32 0.0, %v1700
      %1702 = vmatmul.f32.gmra.mxu0 %v1632
      %v1703 = vpop.f32.mrf.mxu0
      %v1704 = vadd.f32 0.0, %v1703
      %1705 = vmatmul.f32.gmra.mxu0 %v1633
      %v1706 = vpop.f32.mrf.mxu0
      %v1707 = vadd.f32 0.0, %v1706
      %1708 = vmatmul.f32.gmra.mxu0 %v1634
      %v1709 = vpop.f32.mrf.mxu0
      %v1710 = vadd.f32 0.0, %v1709
      %1711 = vmatmul.f32.gmra.mxu0 %v1635
      %v1712 = vpop.f32.mrf.mxu0
      %v1713 = vadd.f32 0.0, %v1712
      %1714 = vmatmul.f32.gmra.mxu0 %v1636
      %v1715 = vpop.f32.mrf.mxu0
      %v1716 = vadd.f32 0.0, %v1715
      %1717 = vmatmul.f32.gmra.mxu0 %v1637
      %v1718 = vpop.f32.mrf.mxu0
      %v1719 = vadd.f32 0.0, %v1718
      %1720 = vmatmul.f32.gmra.mxu0 %v1638
      %v1721 = vpop.f32.mrf.mxu0
      %v1722 = vadd.f32 0.0, %v1721
      %1723 = vmatmul.f32.gmra.mxu0 %v1639
      %v1724 = vpop.f32.mrf.mxu0
      %v1725 = vadd.f32 0.0, %v1724
      %1726 = vmatmul.f32.gmra.mxu0 %v1640
      %v1727 = vpop.f32.mrf.mxu0
      %v1728 = vadd.f32 0.0, %v1727
      %1729 = vmatmul.f32.gmra.mxu0 %v1641
      %v1730 = vpop.f32.mrf.mxu0
      %v1731 = vadd.f32 0.0, %v1730
      %1732 = vmatmul.f32.gmra.mxu0 %v1642
      %v1733 = vpop.f32.mrf.mxu0
      %v1734 = vadd.f32 0.0, %v1733
      %1735 = vmatmul.f32.gmra.mxu0 %v1643
      %v1736 = vpop.f32.mrf.mxu0
      %v1737 = vadd.f32 0.0, %v1736
      %1738 = vmatmul.f32.gmra.mxu0 %v1644
      %v1739 = vpop.f32.mrf.mxu0
      %v1740 = vadd.f32 0.0, %v1739
      %1741 = vmatmul.f32.gmra.mxu0 %v1645
      %v1742 = vpop.f32.mrf.mxu0
      %v1743 = vadd.f32 0.0, %v1742
      %1744 = vmatmul.f32.gmra.mxu0 %v1646
      %v1745 = vpop.f32.mrf.mxu0
      %v1746 = vadd.f32 0.0, %v1745
      %1747 = vmatmul.f32.gmra.mxu0 %v1647
      %v1748 = vpop.f32.mrf.mxu0
      %v1749 = vadd.f32 0.0, %v1748
      %1750 = vmatmul.f32.gmra.mxu0 %v1648
      %v1751 = vpop.f32.mrf.mxu0
      %v1752 = vadd.f32 0.0, %v1751
      %1753 = vmatmul.f32.gmra.mxu0 %v1649
      %v1754 = vpop.f32.mrf.mxu0
      %v1755 = vadd.f32 0.0, %v1754
      %1756 = vmatmul.f32.gmra.mxu0 %v1650
      %v1757 = vpop.f32.mrf.mxu0
      %v1758 = vadd.f32 0.0, %v1757
      %1759 = vmatmul.f32.gmra.mxu0 %v1651
      %v1760 = vpop.f32.mrf.mxu0
      %v1761 = vadd.f32 0.0, %v1760
      %1762 = vmatmul.f32.gmra.mxu0 %v1652
      %v1763 = vpop.f32.mrf.mxu0
      %v1764 = vadd.f32 0.0, %v1763
      %1765 = vmatmul.f32.gmra.mxu0 %v1653
      %v1766 = vpop.f32.mrf.mxu0
      %v1767 = vadd.f32 0.0, %v1766
      %1768 = vmatmul.f32.gmra.mxu0 %v1654
      %v1769 = vpop.f32.mrf.mxu0
      %v1770 = vadd.f32 0.0, %v1769
      %1771 = vmatmul.f32.gmra.mxu0 %v1655
      %v1772 = vpop.f32.mrf.mxu0
      %v1773 = vadd.f32 0.0, %v1772
      %1774 = vmatmul.f32.gmra.mxu0 %v1656
      %v1775 = vpop.f32.mrf.mxu0
      %v1776 = vadd.f32 0.0, %v1775
      %1777 = vmatmul.f32.gmra.mxu0 %v1657
      %v1778 = vpop.f32.mrf.mxu0
      %v1779 = vadd.f32 0.0, %v1778
      %1780 = vmatmul.f32.gmra.mxu0 %v1658
      %v1781 = vpop.f32.mrf.mxu0
      %v1782 = vadd.f32 0.0, %v1781
      %1783 = vmatmul.f32.gmra.mxu0 %v1659
      %v1784 = vpop.f32.mrf.mxu0
      %v1785 = vadd.f32 0.0, %v1784
      %1786 = vmatmul.f32.gmra.mxu0 %v1660
      %v1787 = vpop.f32.mrf.mxu0
      %v1788 = vadd.f32 0.0, %v1787
      %1789 = vdwg.mxu0
      %v1790 = vadd.f32 %v1596, %v1695
      %v1791 = vadd.f32 %v1597, %v1698
      %v1792 = vadd.f32 %v1598, %v1701
      %v1793 = vadd.f32 %v1599, %v1704
      %v1794 = vadd.f32 %v1600, %v1707
      %v1795 = vadd.f32 %v1601, %v1710
      %v1796 = vadd.f32 %v1602, %v1713
      %v1797 = vadd.f32 %v1603, %v1716
      %v1798 = vadd.f32 %v1604, %v1719
      %v1799 = vadd.f32 %v1605, %v1722
      %v1800 = vadd.f32 %v1606, %v1725
      %v1801 = vadd.f32 %v1607, %v1728
      %v1802 = vadd.f32 %v1608, %v1731
      %v1803 = vadd.f32 %v1609, %v1734
      %v1804 = vadd.f32 %v1610, %v1737
      %v1805 = vadd.f32 %v1611, %v1740
      %v1806 = vadd.f32 %v1612, %v1743
      %v1807 = vadd.f32 %v1613, %v1746
      %v1808 = vadd.f32 %v1614, %v1749
      %v1809 = vadd.f32 %v1615, %v1752
      %v1810 = vadd.f32 %v1616, %v1755
      %v1811 = vadd.f32 %v1617, %v1758
      %v1812 = vadd.f32 %v1618, %v1761
      %v1813 = vadd.f32 %v1619, %v1764
      %v1814 = vadd.f32 %v1620, %v1767
      %v1815 = vadd.f32 %v1621, %v1770
      %v1816 = vadd.f32 %v1622, %v1773
      %v1817 = vadd.f32 %v1623, %v1776
      %v1818 = vadd.f32 %v1624, %v1779
      %v1819 = vadd.f32 %v1625, %v1782
      %v1820 = vadd.f32 %v1626, %v1785
      %v1821 = vadd.f32 %v1627, %v1788
      %v1822 = vld [vmem:[%s1628 + $0x1] sm:$0xff]
      %v1823 = vld [vmem:[%s1628 + $0x9] sm:$0xff]
      %v1824 = vld [vmem:[%s1628 + $0x19] sm:$0xff]
      %v1825 = vld [vmem:[%s1628 + $0x21] sm:$0xff]
      %v1826 = vld [vmem:[%s1628 + $0x31] sm:$0xff]
      %v1827 = vld [vmem:[%s1628 + $0x39] sm:$0xff]
      %v1828 = vld [vmem:[%s1628 + $0x49] sm:$0xff]
      %v1829 = vld [vmem:[%s1628 + $0x51] sm:$0xff]
      %v1830 = vld [vmem:[%s1628 + $0x61] sm:$0xff]
      %v1831 = vld [vmem:[%s1628 + $0x69] sm:$0xff]
      %v1832 = vld [vmem:[%s1628 + $0x79] sm:$0xff]
      %v1833 = vld [vmem:[%s1628 + $0x81] sm:$0xff]
      %v1834 = vld [vmem:[%s1628 + $0x91] sm:$0xff]
      %v1835 = vld [vmem:[%s1628 + $0x99] sm:$0xff]
      %v1836 = vld [vmem:[%s1628 + $0xa9] sm:$0xff]
      %v1837 = vld [vmem:[%s1628 + $0xb1] sm:$0xff]
      %v1838 = vld [vmem:[%s1628 + $0xc1] sm:$0xff]
      %v1839 = vld [vmem:[%s1628 + $0xc9] sm:$0xff]
      %v1840 = vld [vmem:[%s1628 + $0xd9] sm:$0xff]
      %v1841 = vld [vmem:[%s1628 + $0xe1] sm:$0xff]
      %v1842 = vld [vmem:[%s1628 + $0xf1] sm:$0xff]
      %v1843 = vld [vmem:[%s1628 + $0xf9] sm:$0xff]
      %v1844 = vld [vmem:[%s1628 + $0x109] sm:$0xff]
      %v1845 = vld [vmem:[%s1628 + $0x111] sm:$0xff]
      %v1846 = vld [vmem:[%s1628 + $0x121] sm:$0xff]
      %v1847 = vld [vmem:[%s1628 + $0x129] sm:$0xff]
      %v1848 = vld [vmem:[%s1628 + $0x139] sm:$0xff]
      %v1849 = vld [vmem:[%s1628 + $0x141] sm:$0xff]
      %v1850 = vld [vmem:[%s1628 + $0x151] sm:$0xff]
      %v1851 = vld [vmem:[%s1628 + $0x159] sm:$0xff]
      %v1852 = vld [vmem:[%s1628 + $0x169] sm:$0xff]
      %v1853 = vld [vmem:[%s1628 + $0x171] sm:$0xff]
      %v1854 = vld [vmem:[%s3 + $0x380] sm:$0xff]
      %v1855 = vld [vmem:[%s3 + $0x388] sm:$0xff]
      %v1856 = vld [vmem:[%s3 + $0x390] sm:$0xff]
      %v1857 = vld [vmem:[%s3 + $0x398] sm:$0xff]
      %v1858 = vld [vmem:[%s3 + $0x3a0] sm:$0xff]
      %v1859 = vld [vmem:[%s3 + $0x3a8] sm:$0xff]
      %v1860 = vld [vmem:[%s3 + $0x3b0] sm:$0xff]
      %v1861 = vld [vmem:[%s3 + $0x3b8] sm:$0xff]
      %v1862 = vld [vmem:[%s3 + $0x3c0] sm:$0xff]
      %v1863 = vld [vmem:[%s3 + $0x3c8] sm:$0xff]
      %v1864 = vld [vmem:[%s3 + $0x3d0] sm:$0xff]
      %v1865 = vld [vmem:[%s3 + $0x3d8] sm:$0xff]
      %v1866 = vld [vmem:[%s3 + $0x3e0] sm:$0xff]
      %v1867 = vld [vmem:[%s3 + $0x3e8] sm:$0xff]
      %v1868 = vld [vmem:[%s3 + $0x3f0] sm:$0xff]
      %v1869 = vld [vmem:[%s3 + $0x3f8] sm:$0xff]
      %1870 = vmatpush.msra.mxu0 %v1869
      %1871 = vmatpush.msra.mxu0 %v1868
      %1872 = vmatpush.msra.mxu0 %v1867
      %1873 = vmatpush.msra.mxu0 %v1866
      %1874 = vmatpush.msra.mxu0 %v1865
      %1875 = vmatpush.msra.mxu0 %v1864
      %1876 = vmatpush.msra.mxu0 %v1863
      %1877 = vmatpush.msra.mxu0 %v1862
      %1878 = vmatpush.msra.mxu0 %v1861
      %1879 = vmatpush.msra.mxu0 %v1860
      %1880 = vmatpush.msra.mxu0 %v1859
      %1881 = vmatpush.msra.mxu0 %v1858
      %1882 = vmatpush.msra.mxu0 %v1857
      %1883 = vmatpush.msra.mxu0 %v1856
      %1884 = vmatpush.msra.mxu0 %v1855
      %1885 = vmatpush.msra.mxu0 %v1854
      %1886 = vmatmul.f32.gmra.mxu0 %v1822
      %v1887 = vpop.f32.mrf.mxu0
      %v1888 = vadd.f32 0.0, %v1887
      %1889 = vmatmul.f32.gmra.mxu0 %v1823
      %v1890 = vpop.f32.mrf.mxu0
      %v1891 = vadd.f32 0.0, %v1890
      %1892 = vmatmul.f32.gmra.mxu0 %v1824
      %v1893 = vpop.f32.mrf.mxu0
      %v1894 = vadd.f32 0.0, %v1893
      %1895 = vmatmul.f32.gmra.mxu0 %v1825
      %v1896 = vpop.f32.mrf.mxu0
      %v1897 = vadd.f32 0.0, %v1896
      %1898 = vmatmul.f32.gmra.mxu0 %v1826
      %v1899 = vpop.f32.mrf.mxu0
      %v1900 = vadd.f32 0.0, %v1899
      %1901 = vmatmul.f32.gmra.mxu0 %v1827
      %v1902 = vpop.f32.mrf.mxu0
      %v1903 = vadd.f32 0.0, %v1902
      %1904 = vmatmul.f32.gmra.mxu0 %v1828
      %v1905 = vpop.f32.mrf.mxu0
      %v1906 = vadd.f32 0.0, %v1905
      %1907 = vmatmul.f32.gmra.mxu0 %v1829
      %v1908 = vpop.f32.mrf.mxu0
      %v1909 = vadd.f32 0.0, %v1908
      %1910 = vmatmul.f32.gmra.mxu0 %v1830
      %v1911 = vpop.f32.mrf.mxu0
      %v1912 = vadd.f32 0.0, %v1911
      %1913 = vmatmul.f32.gmra.mxu0 %v1831
      %v1914 = vpop.f32.mrf.mxu0
      %v1915 = vadd.f32 0.0, %v1914
      %1916 = vmatmul.f32.gmra.mxu0 %v1832
      %v1917 = vpop.f32.mrf.mxu0
      %v1918 = vadd.f32 0.0, %v1917
      %1919 = vmatmul.f32.gmra.mxu0 %v1833
      %v1920 = vpop.f32.mrf.mxu0
      %v1921 = vadd.f32 0.0, %v1920
      %1922 = vmatmul.f32.gmra.mxu0 %v1834
      %v1923 = vpop.f32.mrf.mxu0
      %v1924 = vadd.f32 0.0, %v1923
      %1925 = vmatmul.f32.gmra.mxu0 %v1835
      %v1926 = vpop.f32.mrf.mxu0
      %v1927 = vadd.f32 0.0, %v1926
      %1928 = vmatmul.f32.gmra.mxu0 %v1836
      %v1929 = vpop.f32.mrf.mxu0
      %v1930 = vadd.f32 0.0, %v1929
      %1931 = vmatmul.f32.gmra.mxu0 %v1837
      %v1932 = vpop.f32.mrf.mxu0
      %v1933 = vadd.f32 0.0, %v1932
      %1934 = vmatmul.f32.gmra.mxu0 %v1838
      %v1935 = vpop.f32.mrf.mxu0
      %v1936 = vadd.f32 0.0, %v1935
      %1937 = vmatmul.f32.gmra.mxu0 %v1839
      %v1938 = vpop.f32.mrf.mxu0
      %v1939 = vadd.f32 0.0, %v1938
      %1940 = vmatmul.f32.gmra.mxu0 %v1840
      %v1941 = vpop.f32.mrf.mxu0
      %v1942 = vadd.f32 0.0, %v1941
      %1943 = vmatmul.f32.gmra.mxu0 %v1841
      %v1944 = vpop.f32.mrf.mxu0
      %v1945 = vadd.f32 0.0, %v1944
      %1946 = vmatmul.f32.gmra.mxu0 %v1842
      %v1947 = vpop.f32.mrf.mxu0
      %v1948 = vadd.f32 0.0, %v1947
      %1949 = vmatmul.f32.gmra.mxu0 %v1843
      %v1950 = vpop.f32.mrf.mxu0
      %v1951 = vadd.f32 0.0, %v1950
      %1952 = vmatmul.f32.gmra.mxu0 %v1844
      %v1953 = vpop.f32.mrf.mxu0
      %v1954 = vadd.f32 0.0, %v1953
      %1955 = vmatmul.f32.gmra.mxu0 %v1845
      %v1956 = vpop.f32.mrf.mxu0
      %v1957 = vadd.f32 0.0, %v1956
      %1958 = vmatmul.f32.gmra.mxu0 %v1846
      %v1959 = vpop.f32.mrf.mxu0
      %v1960 = vadd.f32 0.0, %v1959
      %1961 = vmatmul.f32.gmra.mxu0 %v1847
      %v1962 = vpop.f32.mrf.mxu0
      %v1963 = vadd.f32 0.0, %v1962
      %1964 = vmatmul.f32.gmra.mxu0 %v1848
      %v1965 = vpop.f32.mrf.mxu0
      %v1966 = vadd.f32 0.0, %v1965
      %1967 = vmatmul.f32.gmra.mxu0 %v1849
      %v1968 = vpop.f32.mrf.mxu0
      %v1969 = vadd.f32 0.0, %v1968
      %1970 = vmatmul.f32.gmra.mxu0 %v1850
      %v1971 = vpop.f32.mrf.mxu0
      %v1972 = vadd.f32 0.0, %v1971
      %1973 = vmatmul.f32.gmra.mxu0 %v1851
      %v1974 = vpop.f32.mrf.mxu0
      %v1975 = vadd.f32 0.0, %v1974
      %1976 = vmatmul.f32.gmra.mxu0 %v1852
      %v1977 = vpop.f32.mrf.mxu0
      %v1978 = vadd.f32 0.0, %v1977
      %1979 = vmatmul.f32.gmra.mxu0 %v1853
      %v1980 = vpop.f32.mrf.mxu0
      %v1981 = vadd.f32 0.0, %v1980
      %1982 = vdwg.mxu0
      %v1983 = vadd.f32 %v1790, %v1888
      %v1984 = vadd.f32 %v1791, %v1891
      %v1985 = vadd.f32 %v1792, %v1894
      %v1986 = vadd.f32 %v1793, %v1897
      %v1987 = vadd.f32 %v1794, %v1900
      %v1988 = vadd.f32 %v1795, %v1903
      %v1989 = vadd.f32 %v1796, %v1906
      %v1990 = vadd.f32 %v1797, %v1909
      %v1991 = vadd.f32 %v1798, %v1912
      %v1992 = vadd.f32 %v1799, %v1915
      %v1993 = vadd.f32 %v1800, %v1918
      %v1994 = vadd.f32 %v1801, %v1921
      %v1995 = vadd.f32 %v1802, %v1924
      %v1996 = vadd.f32 %v1803, %v1927
      %v1997 = vadd.f32 %v1804, %v1930
      %v1998 = vadd.f32 %v1805, %v1933
      %v1999 = vadd.f32 %v1806, %v1936
      %v2000 = vadd.f32 %v1807, %v1939
      %v2001 = vadd.f32 %v1808, %v1942
      %v2002 = vadd.f32 %v1809, %v1945
      %v2003 = vadd.f32 %v1810, %v1948
      %v2004 = vadd.f32 %v1811, %v1951
      %v2005 = vadd.f32 %v1812, %v1954
      %v2006 = vadd.f32 %v1813, %v1957
      %v2007 = vadd.f32 %v1814, %v1960
      %v2008 = vadd.f32 %v1815, %v1963
      %v2009 = vadd.f32 %v1816, %v1966
      %v2010 = vadd.f32 %v1817, %v1969
      %v2011 = vadd.f32 %v1818, %v1972
      %v2012 = vadd.f32 %v1819, %v1975
      %v2013 = vadd.f32 %v1820, %v1978
      %v2014 = vadd.f32 %v1821, %v1981
      %v2015 = vld [vmem:[%s1628 + $0x2] sm:$0xff]
      %v2016 = vld [vmem:[%s1628 + $0xa] sm:$0xff]
      %v2017 = vld [vmem:[%s1628 + $0x1a] sm:$0xff]
      %v2018 = vld [vmem:[%s1628 + $0x22] sm:$0xff]
      %v2019 = vld [vmem:[%s1628 + $0x32] sm:$0xff]
      %v2020 = vld [vmem:[%s1628 + $0x3a] sm:$0xff]
      %v2021 = vld [vmem:[%s1628 + $0x4a] sm:$0xff]
      %v2022 = vld [vmem:[%s1628 + $0x52] sm:$0xff]
      %v2023 = vld [vmem:[%s1628 + $0x62] sm:$0xff]
      %v2024 = vld [vmem:[%s1628 + $0x6a] sm:$0xff]
      %v2025 = vld [vmem:[%s1628 + $0x7a] sm:$0xff]
      %v2026 = vld [vmem:[%s1628 + $0x82] sm:$0xff]
      %v2027 = vld [vmem:[%s1628 + $0x92] sm:$0xff]
      %v2028 = vld [vmem:[%s1628 + $0x9a] sm:$0xff]
      %v2029 = vld [vmem:[%s1628 + $0xaa] sm:$0xff]
      %v2030 = vld [vmem:[%s1628 + $0xb2] sm:$0xff]
      %v2031 = vld [vmem:[%s1628 + $0xc2] sm:$0xff]
      %v2032 = vld [vmem:[%s1628 + $0xca] sm:$0xff]
      %v2033 = vld [vmem:[%s1628 + $0xda] sm:$0xff]
      %v2034 = vld [vmem:[%s1628 + $0xe2] sm:$0xff]
      %v2035 = vld [vmem:[%s1628 + $0xf2] sm:$0xff]
      %v2036 = vld [vmem:[%s1628 + $0xfa] sm:$0xff]
      %v2037 = vld [vmem:[%s1628 + $0x10a] sm:$0xff]
      %v2038 = vld [vmem:[%s1628 + $0x112] sm:$0xff]
      %v2039 = vld [vmem:[%s1628 + $0x122] sm:$0xff]
      %v2040 = vld [vmem:[%s1628 + $0x12a] sm:$0xff]
      %v2041 = vld [vmem:[%s1628 + $0x13a] sm:$0xff]
      %v2042 = vld [vmem:[%s1628 + $0x142] sm:$0xff]
      %v2043 = vld [vmem:[%s1628 + $0x152] sm:$0xff]
      %v2044 = vld [vmem:[%s1628 + $0x15a] sm:$0xff]
      %v2045 = vld [vmem:[%s1628 + $0x16a] sm:$0xff]
      %v2046 = vld [vmem:[%s1628 + $0x172] sm:$0xff]
      %v2047 = vld [vmem:[%s3 + $0x400] sm:$0xff]
      %v2048 = vld [vmem:[%s3 + $0x408] sm:$0xff]
      %v2049 = vld [vmem:[%s3 + $0x410] sm:$0xff]
      %v2050 = vld [vmem:[%s3 + $0x418] sm:$0xff]
      %v2051 = vld [vmem:[%s3 + $0x420] sm:$0xff]
      %v2052 = vld [vmem:[%s3 + $0x428] sm:$0xff]
      %v2053 = vld [vmem:[%s3 + $0x430] sm:$0xff]
      %v2054 = vld [vmem:[%s3 + $0x438] sm:$0xff]
      %v2055 = vld [vmem:[%s3 + $0x440] sm:$0xff]
      %v2056 = vld [vmem:[%s3 + $0x448] sm:$0xff]
      %v2057 = vld [vmem:[%s3 + $0x450] sm:$0xff]
      %v2058 = vld [vmem:[%s3 + $0x458] sm:$0xff]
      %v2059 = vld [vmem:[%s3 + $0x460] sm:$0xff]
      %v2060 = vld [vmem:[%s3 + $0x468] sm:$0xff]
      %v2061 = vld [vmem:[%s3 + $0x470] sm:$0xff]
      %v2062 = vld [vmem:[%s3 + $0x478] sm:$0xff]
      %2063 = vmatpush.msra.mxu0 %v2062
      %2064 = vmatpush.msra.mxu0 %v2061
      %2065 = vmatpush.msra.mxu0 %v2060
      %2066 = vmatpush.msra.mxu0 %v2059
      %2067 = vmatpush.msra.mxu0 %v2058
      %2068 = vmatpush.msra.mxu0 %v2057
      %2069 = vmatpush.msra.mxu0 %v2056
      %2070 = vmatpush.msra.mxu0 %v2055
      %2071 = vmatpush.msra.mxu0 %v2054
      %2072 = vmatpush.msra.mxu0 %v2053
      %2073 = vmatpush.msra.mxu0 %v2052
      %2074 = vmatpush.msra.mxu0 %v2051
      %2075 = vmatpush.msra.mxu0 %v2050
      %2076 = vmatpush.msra.mxu0 %v2049
      %2077 = vmatpush.msra.mxu0 %v2048
      %2078 = vmatpush.msra.mxu0 %v2047
      %2079 = vmatmul.f32.gmra.mxu0 %v2015
      %v2080 = vpop.f32.mrf.mxu0
      %v2081 = vadd.f32 0.0, %v2080
      %2082 = vmatmul.f32.gmra.mxu0 %v2016
      %v2083 = vpop.f32.mrf.mxu0
      %v2084 = vadd.f32 0.0, %v2083
      %2085 = vmatmul.f32.gmra.mxu0 %v2017
      %v2086 = vpop.f32.mrf.mxu0
      %v2087 = vadd.f32 0.0, %v2086
      %2088 = vmatmul.f32.gmra.mxu0 %v2018
      %v2089 = vpop.f32.mrf.mxu0
      %v2090 = vadd.f32 0.0, %v2089
      %2091 = vmatmul.f32.gmra.mxu0 %v2019
      %v2092 = vpop.f32.mrf.mxu0
      %v2093 = vadd.f32 0.0, %v2092
      %2094 = vmatmul.f32.gmra.mxu0 %v2020
      %v2095 = vpop.f32.mrf.mxu0
      %v2096 = vadd.f32 0.0, %v2095
      %2097 = vmatmul.f32.gmra.mxu0 %v2021
      %v2098 = vpop.f32.mrf.mxu0
      %v2099 = vadd.f32 0.0, %v2098
      %2100 = vmatmul.f32.gmra.mxu0 %v2022
      %v2101 = vpop.f32.mrf.mxu0
      %v2102 = vadd.f32 0.0, %v2101
      %2103 = vmatmul.f32.gmra.mxu0 %v2023
      %v2104 = vpop.f32.mrf.mxu0
      %v2105 = vadd.f32 0.0, %v2104
      %2106 = vmatmul.f32.gmra.mxu0 %v2024
      %v2107 = vpop.f32.mrf.mxu0
      %v2108 = vadd.f32 0.0, %v2107
      %2109 = vmatmul.f32.gmra.mxu0 %v2025
      %v2110 = vpop.f32.mrf.mxu0
      %v2111 = vadd.f32 0.0, %v2110
      %2112 = vmatmul.f32.gmra.mxu0 %v2026
      %v2113 = vpop.f32.mrf.mxu0
      %v2114 = vadd.f32 0.0, %v2113
      %2115 = vmatmul.f32.gmra.mxu0 %v2027
      %v2116 = vpop.f32.mrf.mxu0
      %v2117 = vadd.f32 0.0, %v2116
      %2118 = vmatmul.f32.gmra.mxu0 %v2028
      %v2119 = vpop.f32.mrf.mxu0
      %v2120 = vadd.f32 0.0, %v2119
      %2121 = vmatmul.f32.gmra.mxu0 %v2029
      %v2122 = vpop.f32.mrf.mxu0
      %v2123 = vadd.f32 0.0, %v2122
      %2124 = vmatmul.f32.gmra.mxu0 %v2030
      %v2125 = vpop.f32.mrf.mxu0
      %v2126 = vadd.f32 0.0, %v2125
      %2127 = vmatmul.f32.gmra.mxu0 %v2031
      %v2128 = vpop.f32.mrf.mxu0
      %v2129 = vadd.f32 0.0, %v2128
      %2130 = vmatmul.f32.gmra.mxu0 %v2032
      %v2131 = vpop.f32.mrf.mxu0
      %v2132 = vadd.f32 0.0, %v2131
      %2133 = vmatmul.f32.gmra.mxu0 %v2033
      %v2134 = vpop.f32.mrf.mxu0
      %v2135 = vadd.f32 0.0, %v2134
      %2136 = vmatmul.f32.gmra.mxu0 %v2034
      %v2137 = vpop.f32.mrf.mxu0
      %v2138 = vadd.f32 0.0, %v2137
      %2139 = vmatmul.f32.gmra.mxu0 %v2035
      %v2140 = vpop.f32.mrf.mxu0
      %v2141 = vadd.f32 0.0, %v2140
      %2142 = vmatmul.f32.gmra.mxu0 %v2036
      %v2143 = vpop.f32.mrf.mxu0
      %v2144 = vadd.f32 0.0, %v2143
      %2145 = vmatmul.f32.gmra.mxu0 %v2037
      %v2146 = vpop.f32.mrf.mxu0
      %v2147 = vadd.f32 0.0, %v2146
      %2148 = vmatmul.f32.gmra.mxu0 %v2038
      %v2149 = vpop.f32.mrf.mxu0
      %v2150 = vadd.f32 0.0, %v2149
      %2151 = vmatmul.f32.gmra.mxu0 %v2039
      %v2152 = vpop.f32.mrf.mxu0
      %v2153 = vadd.f32 0.0, %v2152
      %2154 = vmatmul.f32.gmra.mxu0 %v2040
      %v2155 = vpop.f32.mrf.mxu0
      %v2156 = vadd.f32 0.0, %v2155
      %2157 = vmatmul.f32.gmra.mxu0 %v2041
      %v2158 = vpop.f32.mrf.mxu0
      %v2159 = vadd.f32 0.0, %v2158
      %2160 = vmatmul.f32.gmra.mxu0 %v2042
      %v2161 = vpop.f32.mrf.mxu0
      %v2162 = vadd.f32 0.0, %v2161
      %2163 = vmatmul.f32.gmra.mxu0 %v2043
      %v2164 = vpop.f32.mrf.mxu0
      %v2165 = vadd.f32 0.0, %v2164
      %2166 = vmatmul.f32.gmra.mxu0 %v2044
      %v2167 = vpop.f32.mrf.mxu0
      %v2168 = vadd.f32 0.0, %v2167
      %2169 = vmatmul.f32.gmra.mxu0 %v2045
      %v2170 = vpop.f32.mrf.mxu0
      %v2171 = vadd.f32 0.0, %v2170
      %2172 = vmatmul.f32.gmra.mxu0 %v2046
      %v2173 = vpop.f32.mrf.mxu0
      %v2174 = vadd.f32 0.0, %v2173
      %2175 = vdwg.mxu0
      %v2176 = vadd.f32 %v1983, %v2081
      %v2177 = vadd.f32 %v1984, %v2084
      %v2178 = vadd.f32 %v1985, %v2087
      %v2179 = vadd.f32 %v1986, %v2090
      %v2180 = vadd.f32 %v1987, %v2093
      %v2181 = vadd.f32 %v1988, %v2096
      %v2182 = vadd.f32 %v1989, %v2099
      %v2183 = vadd.f32 %v1990, %v2102
      %v2184 = vadd.f32 %v1991, %v2105
      %v2185 = vadd.f32 %v1992, %v2108
      %v2186 = vadd.f32 %v1993, %v2111
      %v2187 = vadd.f32 %v1994, %v2114
      %v2188 = vadd.f32 %v1995, %v2117
      %v2189 = vadd.f32 %v1996, %v2120
      %v2190 = vadd.f32 %v1997, %v2123
      %v2191 = vadd.f32 %v1998, %v2126
      %v2192 = vadd.f32 %v1999, %v2129
      %v2193 = vadd.f32 %v2000, %v2132
      %v2194 = vadd.f32 %v2001, %v2135
      %v2195 = vadd.f32 %v2002, %v2138
      %v2196 = vadd.f32 %v2003, %v2141
      %v2197 = vadd.f32 %v2004, %v2144
      %v2198 = vadd.f32 %v2005, %v2147
      %v2199 = vadd.f32 %v2006, %v2150
      %v2200 = vadd.f32 %v2007, %v2153
      %v2201 = vadd.f32 %v2008, %v2156
      %v2202 = vadd.f32 %v2009, %v2159
      %v2203 = vadd.f32 %v2010, %v2162
      %v2204 = vadd.f32 %v2011, %v2165
      %v2205 = vadd.f32 %v2012, %v2168
      %v2206 = vadd.f32 %v2013, %v2171
      %v2207 = vadd.f32 %v2014, %v2174
      %v2208 = vadd.f32 %v2176, %v2177
      %v2209 = vadd.f32 %v2208, %v2178
      %v2210 = vadd.f32 %v2209, %v2179
      %v2211 = vadd.f32 %v2210, %v2180
      %v2212 = vadd.f32 %v2211, %v2181
      %v2213 = vadd.f32 %v2212, %v2182
      %v2214 = vadd.f32 %v2213, %v2183
      %v2215 = vadd.f32 %v2214, %v2184
      %v2216 = vadd.f32 %v2215, %v2185
      %v2217 = vadd.f32 %v2216, %v2186
      %v2218 = vadd.f32 %v2217, %v2187
      %v2219 = vadd.f32 %v2218, %v2188
      %v2220 = vadd.f32 %v2219, %v2189
      %v2221 = vadd.f32 %v2220, %v2190
      %v2222 = vadd.f32 %v2221, %v2191
      %v2223 = vadd.f32 %v2222, %v2192
      %v2224 = vadd.f32 %v2223, %v2193
      %v2225 = vadd.f32 %v2224, %v2194
      %v2226 = vadd.f32 %v2225, %v2195
      %v2227 = vadd.f32 %v2226, %v2196
      %v2228 = vadd.f32 %v2227, %v2197
      %v2229 = vadd.f32 %v2228, %v2198
      %v2230 = vadd.f32 %v2229, %v2199
      %v2231 = vadd.f32 %v2230, %v2200
      %v2232 = vadd.f32 %v2231, %v2201
      %v2233 = vadd.f32 %v2232, %v2202
      %v2234 = vadd.f32 %v2233, %v2203
      %v2235 = vadd.f32 %v2234, %v2204
      %v2236 = vadd.f32 %v2235, %v2205
      %v2237 = vadd.f32 %v2236, %v2206
      %v2238 = vadd.f32 %v2237, %v2207
      %v2239 = vrot.slane %v2238, 4
      %v2240 = vadd.f32 %v2238, %v2239
      %v2241 = vrot.slane %v2240, 2
      %v2242 = vadd.f32 %v2240, %v2241
      %v2243 = vrot.slane %v2242, 1
      %v2244 = vadd.f32 %v2242, %v2243
      %v2245 = vmul.f32 %v2176, %v2176
      %v2246 = vmul.f32 %v2177, %v2177
      %v2247 = vmul.f32 %v2178, %v2178
      %v2248 = vmul.f32 %v2179, %v2179
      %v2249 = vmul.f32 %v2180, %v2180
      %v2250 = vmul.f32 %v2181, %v2181
      %v2251 = vmul.f32 %v2182, %v2182
      %v2252 = vmul.f32 %v2183, %v2183
      %v2253 = vmul.f32 %v2184, %v2184
      %v2254 = vmul.f32 %v2185, %v2185
      %v2255 = vmul.f32 %v2186, %v2186
      %v2256 = vmul.f32 %v2187, %v2187
      %v2257 = vmul.f32 %v2188, %v2188
      %v2258 = vmul.f32 %v2189, %v2189
      %v2259 = vmul.f32 %v2190, %v2190
      %v2260 = vmul.f32 %v2191, %v2191
      %v2261 = vmul.f32 %v2192, %v2192
      %v2262 = vmul.f32 %v2193, %v2193
      %v2263 = vmul.f32 %v2194, %v2194
      %v2264 = vmul.f32 %v2195, %v2195
      %v2265 = vmul.f32 %v2196, %v2196
      %v2266 = vmul.f32 %v2197, %v2197
      %v2267 = vmul.f32 %v2198, %v2198
      %v2268 = vmul.f32 %v2199, %v2199
      %v2269 = vmul.f32 %v2200, %v2200
      %v2270 = vmul.f32 %v2201, %v2201
      %v2271 = vmul.f32 %v2202, %v2202
      %v2272 = vmul.f32 %v2203, %v2203
      %v2273 = vmul.f32 %v2204, %v2204
      %v2274 = vmul.f32 %v2205, %v2205
      %v2275 = vmul.f32 %v2206, %v2206
      %v2276 = vmul.f32 %v2207, %v2207
      %v2277 = vadd.f32 %v2245, %v2246
      %v2278 = vadd.f32 %v2277, %v2247
      %v2279 = vadd.f32 %v2278, %v2248
      %v2280 = vadd.f32 %v2279, %v2249
      %v2281 = vadd.f32 %v2280, %v2250
      %v2282 = vadd.f32 %v2281, %v2251
      %v2283 = vadd.f32 %v2282, %v2252
      %v2284 = vadd.f32 %v2283, %v2253
      %v2285 = vadd.f32 %v2284, %v2254
      %v2286 = vadd.f32 %v2285, %v2255
      %v2287 = vadd.f32 %v2286, %v2256
      %v2288 = vadd.f32 %v2287, %v2257
      %v2289 = vadd.f32 %v2288, %v2258
      %v2290 = vadd.f32 %v2289, %v2259
      %v2291 = vadd.f32 %v2290, %v2260
      %v2292 = vadd.f32 %v2291, %v2261
      %v2293 = vadd.f32 %v2292, %v2262
      %v2294 = vadd.f32 %v2293, %v2263
      %v2295 = vadd.f32 %v2294, %v2264
      %v2296 = vadd.f32 %v2295, %v2265
      %v2297 = vadd.f32 %v2296, %v2266
      %v2298 = vadd.f32 %v2297, %v2267
      %v2299 = vadd.f32 %v2298, %v2268
      %v2300 = vadd.f32 %v2299, %v2269
      %v2301 = vadd.f32 %v2300, %v2270
      %v2302 = vadd.f32 %v2301, %v2271
      %v2303 = vadd.f32 %v2302, %v2272
      %v2304 = vadd.f32 %v2303, %v2273
      %v2305 = vadd.f32 %v2304, %v2274
      %v2306 = vadd.f32 %v2305, %v2275
      %v2307 = vadd.f32 %v2306, %v2276
      %v2308 = vrot.slane %v2307, 4
      %v2309 = vadd.f32 %v2307, %v2308
      %v2310 = vrot.slane %v2309, 2
      %v2311 = vadd.f32 %v2309, %v2310
      %v2312 = vrot.slane %v2311, 1
      %v2313 = vadd.f32 %v2311, %v2312
      %vm2314 = vcmask 1040384
      %v2315 = vsel %vm2314, %v2244, %v2313
      %2316 = vst [vmem:[%s266] sm:$0x3] %v2315
      %2317 = vst [vmem:[%s258] sm:$0xff] %v2176
      %2318 = vst [vmem:[%s258 + $0x8] sm:$0xff] %v2177
      %2319 = vst [vmem:[%s258 + $0x10] sm:$0xff] %v2178
      %2320 = vst [vmem:[%s258 + $0x18] sm:$0xff] %v2179
      %2321 = vst [vmem:[%s258 + $0x20] sm:$0xff] %v2180
      %2322 = vst [vmem:[%s258 + $0x28] sm:$0xff] %v2181
      %2323 = vst [vmem:[%s258 + $0x30] sm:$0xff] %v2182
      %2324 = vst [vmem:[%s258 + $0x38] sm:$0xff] %v2183
      %2325 = vst [vmem:[%s258 + $0x40] sm:$0xff] %v2184
      %2326 = vst [vmem:[%s258 + $0x48] sm:$0xff] %v2185
      %2327 = vst [vmem:[%s258 + $0x50] sm:$0xff] %v2186
      %2328 = vst [vmem:[%s258 + $0x58] sm:$0xff] %v2187
      %2329 = vst [vmem:[%s258 + $0x60] sm:$0xff] %v2188
      %2330 = vst [vmem:[%s258 + $0x68] sm:$0xff] %v2189
      %2331 = vst [vmem:[%s258 + $0x70] sm:$0xff] %v2190
      %2332 = vst [vmem:[%s258 + $0x78] sm:$0xff] %v2191
      %2333 = vst [vmem:[%s258 + $0x80] sm:$0xff] %v2192
      %2334 = vst [vmem:[%s258 + $0x88] sm:$0xff] %v2193
      %2335 = vst [vmem:[%s258 + $0x90] sm:$0xff] %v2194
      %2336 = vst [vmem:[%s258 + $0x98] sm:$0xff] %v2195
      %2337 = vst [vmem:[%s258 + $0xa0] sm:$0xff] %v2196
      %2338 = vst [vmem:[%s258 + $0xa8] sm:$0xff] %v2197
      %2339 = vst [vmem:[%s258 + $0xb0] sm:$0xff] %v2198
      %2340 = vst [vmem:[%s258 + $0xb8] sm:$0xff] %v2199
      %2341 = vst [vmem:[%s258 + $0xc0] sm:$0xff] %v2200
      %2342 = vst [vmem:[%s258 + $0xc8] sm:$0xff] %v2201
      %2343 = vst [vmem:[%s258 + $0xd0] sm:$0xff] %v2202
      %2344 = vst [vmem:[%s258 + $0xd8] sm:$0xff] %v2203
      %2345 = vst [vmem:[%s258 + $0xe0] sm:$0xff] %v2204
      %2346 = vst [vmem:[%s258 + $0xe8] sm:$0xff] %v2205
      %2347 = vst [vmem:[%s258 + $0xf0] sm:$0xff] %v2206
      %2348 = vst [vmem:[%s258 + $0xf8] sm:$0xff] %v2207
      %s2349 = smul.u32 32, %s22
      %p2350 = scmp.lt.s32.totalorder %s21, 1
      %s2351 = scalar_select %p2350, %s21, 1
      %p2352 = scmp.lt.s32.totalorder %s2349, 31
      %s2353 = scalar_select %p2352, %s2349, 31
      %s2354 = smul.addr %s2351, 32
      %s2355 = sadd.s32 %s2353, %s2354
      %s2356 = smul.addr %s2355, 8
      %s2357 = scalar_lea.vmem %s4, %s2356
      %p2358 = scmp.lt.s32.totalorder %s21, 1
      %s2359 = scalar_select %p2358, %s21, 1
      %p2360 = scmp.lt.s32.totalorder %s22, 0
      %s2361 = scalar_select %p2360, %s22, 0
      %s2362 = sadd.s32 %s2361, %s2359
      %s2363 = smul.addr %s2362, 2
      %s2364 = scalar_lea.vmem %s5, %s2363
      // Predicated region
      $region37: #{vggish_conv_block.3} parent=35 // pred_check
        %p2365 = pneg %p138
      $region38: #{vggish_conv_block.3} parent=35 // pred_check_branch
        %2367 = sbr.rel (%p2365) target = $region40
      $region39: #{vggish_conv_block.3} parent=35 // pred_region
        %s2368 = smul.u32 32, %s22
      $region40: #{vggish_conv_block.3} parent=35 // pred_fallthru
        _
      // Predicated region
      $region41: #{vggish_conv_block.3} parent=35 // pred_check
        %p2369 = pneg %p166
      $region42: #{vggish_conv_block.3} parent=35 // pred_check_branch
        %2371 = sbr.rel (%p2369) target = $region44
      $region43: #{vggish_conv_block.3} parent=35 // pred_region
        _
      $region44: #{vggish_conv_block.3} parent=35 // pred_fallthru
        _
    $region36: #{vggish_conv_block.3} parent=5 // pred_fallthru
      _
    %p2372 = scmp.le.s32.totalorder 2, %s12
    // Predicated region
    $region45: #{vggish_conv_block.3} parent=5 // pred_check
      %p2373 = pneg %p2372
    $region46: #{vggish_conv_block.3} parent=5 // pred_check_branch
      %2375 = sbr.rel (%p2373) target = $region48
    $region47: #{vggish_conv_block.3} parent=5 // pred_region
      %s2376 = ssub.s32 %s12, 2
      // Predicated region
      $region49: #{vggish_conv_block.3} parent=47 // pred_check
        %p2377 = pneg %p144
      $region50: #{vggish_conv_block.3} parent=47 // pred_check_branch
        %2379 = sbr.rel (%p2377) target = $region52
      $region51: #{vggish_conv_block.3} parent=47 // pred_region
        %s2380 = smul.u32 32, %s24
        %p2381 = scmp.lt.s32.totalorder %s23, 1
        %s2382 = scalar_select %p2381, %s23, 1
        %p2383 = scmp.lt.s32.totalorder %s2380, 31
        %s2384 = scalar_select %p2383, %s2380, 31
        %s2385 = smul.addr %s2382, 32
        %s2386 = sadd.s32 %s2384, %s2385
        %s2387 = smul.addr %s2386, 8
        %s2388 = scalar_lea.vmem %s4, %s2387
      $region52: #{vggish_conv_block.3} parent=47 // pred_fallthru
        _
      // Predicated region
      $region53: #{vggish_conv_block.3} parent=47 // pred_check
        %p2389 = pneg %p172
      $region54: #{vggish_conv_block.3} parent=47 // pred_check_branch
        %2391 = sbr.rel (%p2389) target = $region56
      $region55: #{vggish_conv_block.3} parent=47 // pred_region
        %p2392 = scmp.lt.s32.totalorder %s23, 1
        %s2393 = scalar_select %p2392, %s23, 1
        %p2394 = scmp.lt.s32.totalorder %s24, 0
        %s2395 = scalar_select %p2394, %s24, 0
        %s2396 = sadd.s32 %s2395, %s2393
        %s2397 = smul.addr %s2396, 2
        %s2398 = scalar_lea.vmem %s5, %s2397
      $region56: #{vggish_conv_block.3} parent=47 // pred_fallthru
        _
    $region48: #{vggish_conv_block.3} parent=5 // pred_fallthru
      _
  $region6: #{vggish_conv_block.3} parent=0 // loop_footer
    %s16 = sadd.s32 1, %s12
  $region7: #{vggish_conv_block.3} parent=0 // loop_footer_branch
    %11 = sbr.rel target = $region3
  $region8: #{vggish_conv_block.3} parent=0 // loop_exit
    _

</llo_original>
